<compile_context>
chip_gen: v7x
topology: tpu7x:2x2x1
jax: 0.10.0
libtpu: 0.0.40
codegen_flags: <defaults>
</compile_context>

<pallas_src>
import functools
import math

import jax
import jax.numpy as jnp
from jax.experimental import pallas as pl
from jax.experimental.pallas import tpu as pltpu


# --------------------------- in-kernel helpers ------------------------------

def _layer_norm(x, g, b, eps):
    x = x.astype(jnp.float32)
    mu = jnp.mean(x, axis=-1, keepdims=True)
    xc = x - mu
    var = jnp.mean(xc * xc, axis=-1, keepdims=True)
    return xc * jax.lax.rsqrt(var + eps) * g + b


def _erf(x):
    # Abramowitz & Stegun 7.1.26 polynomial (|err| < 1.5e-7) built only from
    # VPU/EUP-supported ops; used for exact (erf) GELU as in BERT.
    p = 0.3275911
    a1, a2, a3, a4, a5 = (0.254829592, -0.284496736, 1.421413741,
                          -1.453152027, 1.061405429)
    ax = jnp.abs(x)
    t = 1.0 / (1.0 + p * ax)
    poly = ((((a5 * t + a4) * t + a3) * t + a2) * t + a1) * t
    y = 1.0 - poly * jnp.exp(-ax * ax)
    return jnp.where(x >= 0.0, y, -y)


def _gelu_exact(x):
    return 0.5 * x * (1.0 + _erf(x * (1.0 / math.sqrt(2.0))))


# ----------------------------- Pallas kernel --------------------------------

def _encoder_kernel(emb_ref, mask_ref, eg_ref, eb_ref,
                    qkvw_ref, qkvb_ref, aow_ref, aob_ref,
                    ln1g_ref, ln1b_ref, fiw_ref, fib_ref,
                    fow_ref, fob_ref, ln2g_ref, ln2b_ref,
                    pw_ref, pb_ref, cw_ref, cb_ref,
                    o_ref, h_scr, *, S, nH, Dh, eps):
    """Grid = (batch, layer).  One step = one transformer layer of one batch.

    emb_ref : (S, H)   summed embeddings of batch b (pre-LayerNorm)
    mask_ref: (1, S)   additive attention mask of batch b
    qkvw_ref: (3*nH, H, Dh)   per-head Q/K/V weights (bf16, Q pre-scaled)
    qkvb_ref: (3*nH, 1, Dh)   per-head Q/K/V biases  (f32, Q pre-scaled)
    aow_ref : (nH, Dh, H)     per-head output-projection rows (bf16)
    o_ref   : (1, C)   logits of batch b (written only at the last layer)
    h_scr   : (S, H)   VMEM scratch; hidden state carried across layers
    """
    H = nH * Dh
    l = pl.program_id(1)

    # Layer 0: embedding LayerNorm seeds the resident hidden state.
    @pl.when(l == 0)
    def _():
        h_scr[...] = _layer_norm(emb_ref[...], eg_ref[...], eb_ref[...], eps)

    h = h_scr[...]                               # (S, H) f32 residual stream
    h16 = h.astype(jnp.bfloat16)                 # bf16 operand for the MXU

    # Hoisted mask broadcast (JAX does not CSE broadcast_in_dim).
    mask_full = jnp.broadcast_to(mask_ref[...], (S, S))

    attn = jnp.zeros((S, H), jnp.float32)
    for hh in range(nH):                         # static unroll (nH small)
        # Per-head projections: leading-axis ref indexing only (no lane slices).
        q = (jnp.dot(h16, qkvw_ref[hh], preferred_element_type=jnp.float32)
             + qkvb_ref[hh])                     # (S, Dh), scale pre-folded
        k = (jnp.dot(h16, qkvw_ref[nH + hh], preferred_element_type=jnp.float32)
             + qkvb_ref[nH + hh])
        v = (jnp.dot(h16, qkvw_ref[2 * nH + hh], preferred_element_type=jnp.float32)
             + qkvb_ref[2 * nH + hh])
        # NT-form scores: contract last dims, no explicit transpose of k.
        s = jax.lax.dot_general(q, k, (((1,), (1,)), ((), ())),
                                preferred_element_type=jnp.float32) + mask_full
        s = s - jnp.max(s, axis=-1, keepdims=True)
        p = jnp.exp(s)
        p = p * pl.reciprocal(jnp.sum(p, axis=-1, keepdims=True), approx=True)
        ctx = jnp.dot(p.astype(jnp.bfloat16), v.astype(jnp.bfloat16),
                      preferred_element_type=jnp.float32)          # (S, Dh)
        # Folded output projection: ctx @ Wo == sum_h ctx_h @ Wo[h rows].
        attn = attn + jnp.dot(ctx.astype(jnp.bfloat16), aow_ref[hh],
                              preferred_element_type=jnp.float32)  # (S, H)
    attn = attn + aob_ref[...]

    h1 = _layer_norm(h + attn, ln1g_ref[...], ln1b_ref[...], eps)

    ffn = _gelu_exact(jnp.dot(h1.astype(jnp.bfloat16), fiw_ref[...],
                              preferred_element_type=jnp.float32) + fib_ref[...])
    ffn_out = (jnp.dot(ffn.astype(jnp.bfloat16), fow_ref[...],
                       preferred_element_type=jnp.float32) + fob_ref[...])
    h2 = _layer_norm(h1 + ffn_out, ln2g_ref[...], ln2b_ref[...], eps)
    h_scr[...] = h2

    # Last layer: fused BERT pooler + classifier on the CLS row only.
    @pl.when(l == pl.num_programs(1) - 1)
    def _():
        cls = h2[0:1, :].astype(jnp.bfloat16)                       # (1, H)
        pooled = jnp.tanh(
            jnp.dot(cls, pw_ref[...], preferred_element_type=jnp.float32)
            + pb_ref[...])
        # TODO(synk): output width C=2 < 128 lanes -> masked store; one tiny
        # store per batch, not worth padding to 128.
        o_ref[...] = (jnp.dot(pooled.astype(jnp.bfloat16), cw_ref[...],
                              preferred_element_type=jnp.float32)
                      + cb_ref[...]).astype(o_ref.dtype)


# ----------------------------- kernel wrapper --------------------------------

def encoder_forward(emb, add_mask, params, stk, cfg, B, S):
    H, I, L = cfg.hidden_size, cfg.intermediate_size, cfg.num_layers
    nH = cfg.num_heads
    Dh = H // nH
    C = cfg.num_classes

    kern = functools.partial(_encoder_kernel, S=S, nH=nH, Dh=Dh, eps=1e-12)

    def rep(shape):                     # same (full) block every grid step
        nd = len(shape)
        return pl.BlockSpec(shape, lambda b, l, nd=nd: (0,) * nd)

    def per_layer(shape):               # layer l's slice, squeeze the L dim
        nd = len(shape)
        return pl.BlockSpec((None,) + shape, lambda b, l, nd=nd: (l,) + (0,) * nd)

    def per_batch(shape):               # batch b's slice, squeeze the B dim
        nd = len(shape)
        return pl.BlockSpec((None,) + shape, lambda b, l, nd=nd: (b,) + (0,) * nd)

    in_specs = [
        per_batch((S, H)),                                  # summed embeddings
        per_batch((1, S)),                                  # additive mask
        rep((1, H)), rep((1, H)),                           # emb LN gamma/beta
        per_layer((3 * nH, H, Dh)), per_layer((3 * nH, 1, Dh)),  # QKV w/b (per head)
        per_layer((nH, Dh, H)), per_layer((1, H)),          # attn out w/b
        per_layer((1, H)), per_layer((1, H)),               # LN1 gamma/beta
        per_layer((H, I)), per_layer((1, I)),               # FFN in w/b
        per_layer((I, H)), per_layer((1, H)),               # FFN out w/b
        per_layer((1, H)), per_layer((1, H)),               # LN2 gamma/beta
        rep((H, H)), rep((1, H)),                           # pooler w/b
        rep((H, C)), rep((1, C)),                           # classifier w/b
    ]

    # TODO(synk): at real BERT sizes, add pipeline_mode=pl.Buffered(3) on the
    # large per-layer weight specs and set vmem_limit_bytes accordingly.
    out = pl.pallas_call(
        kern,
        out_shape=jax.ShapeDtypeStruct((B, 1, C), jnp.float32),
        grid=(B, L),
        in_specs=in_specs,
        out_specs=pl.BlockSpec((None, 1, C), lambda b, l: (b, 0, 0)),
        scratch_shapes=[pltpu.VMEM((S, H), jnp.float32)],   # carried hidden state
        compiler_params=pltpu.CompilerParams(
            dimension_semantics=("parallel", "arbitrary")),
    )(emb, add_mask,
      params["emb_ln_g"].reshape(1, H), params["emb_ln_b"].reshape(1, H),
      stk["qkv_w"], stk["qkv_b"], stk["ao_w"], stk["ao_b"],
      stk["ln1_g"], stk["ln1_b"], stk["fi_w"], stk["fi_b"],
      stk["fo_w"], stk["fo_b"], stk["ln2_g"], stk["ln2_b"],
      params["pool_w"].astype(jnp.bfloat16),
      params["pool_b"].reshape(1, H),
      params["cls_w"].astype(jnp.bfloat16),
      params["cls_b"].reshape(1, C))
    return out.reshape(B, C)


# ------------------------------- BERT model ----------------------------------

class Config:
    vocab_size = 128
    hidden_size = 32
    num_heads = 4
    num_layers = 2
    intermediate_size = 64
    max_position = 16
    type_vocab_size = 2
    num_classes = 2


def init_params(key, cfg):
    H, I = cfg.hidden_size, cfg.intermediate_size
    std = 0.02
    keys = iter(jax.random.split(key, 64))

    def w(shape):
        return (std * jax.random.normal(next(keys), shape)).astype(jnp.float32)

    def zeros(shape):
        return jnp.zeros(shape, jnp.float32)

    def ones(shape):
        return jnp.ones(shape, jnp.float32)

    params = {
        "word_emb": w((cfg.vocab_size, H)),
        "pos_emb": w((cfg.max_position, H)),
        "type_emb": w((cfg.type_vocab_size, H)),
        "emb_ln_g": ones((H,)), "emb_ln_b": zeros((H,)),
        "pool_w": w((H, H)), "pool_b": zeros((H,)),
        "cls_w": w((H, cfg.num_classes)), "cls_b": zeros((cfg.num_classes,)),
        "layers": [],
    }
    for _ in range(cfg.num_layers):
        params["layers"].append({
            "q_w": w((H, H)), "q_b": zeros((H,)),
            "k_w": w((H, H)), "k_b": zeros((H,)),
            "v_w": w((H, H)), "v_b": zeros((H,)),
            "ao_w": w((H, H)), "ao_b": zeros((H,)),
            "ln1_g": ones((H,)), "ln1_b": zeros((H,)),
            "fi_w": w((H, I)), "fi_b": zeros((I,)),
            "fo_w": w((I, H)), "fo_b": zeros((H,)),
            "ln2_g": ones((H,)), "ln2_b": zeros((H,)),
        })
    return params


def stack_layer_params(layers, nH, Dh):
    """Stack per-layer weights along L, re-layout per head, cast matmul
    operands to bf16, and pre-fold the 1/sqrt(Dh) score scale into Q."""
    H = nH * Dh
    scale = 1.0 / math.sqrt(Dh)

    def per_head_cols(w):                     # (H, H) -> (nH, H, Dh)
        return w.reshape(H, nH, Dh).transpose(1, 0, 2)

    qkv_w, qkv_b, ao_w = [], [], []
    for p in layers:
        wq = per_head_cols(p["q_w"]) * scale
        wk = per_head_cols(p["k_w"])
        wv = per_head_cols(p["v_w"])
        qkv_w.append(jnp.concatenate([wq, wk, wv], axis=0))         # (3nH,H,Dh)
        bq = p["q_b"].reshape(nH, 1, Dh) * scale
        bk = p["k_b"].reshape(nH, 1, Dh)
        bv = p["v_b"].reshape(nH, 1, Dh)
        qkv_b.append(jnp.concatenate([bq, bk, bv], axis=0))         # (3nH,1,Dh)
        ao_w.append(p["ao_w"].reshape(nH, Dh, H))                   # (nH,Dh,H)

    def stack(fn):
        return jnp.stack([fn(p) for p in layers])

    return {
        "qkv_w": jnp.stack(qkv_w).astype(jnp.bfloat16),
        "qkv_b": jnp.stack(qkv_b),
        "ao_w": jnp.stack(ao_w).astype(jnp.bfloat16),
        "ao_b": stack(lambda p: p["ao_b"])[:, None, :],
        "ln1_g": stack(lambda p: p["ln1_g"])[:, None, :],
        "ln1_b": stack(lambda p: p["ln1_b"])[:, None, :],
        "fi_w": stack(lambda p: p["fi_w"]).astype(jnp.bfloat16),
        "fi_b": stack(lambda p: p["fi_b"])[:, None, :],
        "fo_w": stack(lambda p: p["fo_w"]).astype(jnp.bfloat16),
        "fo_b": stack(lambda p: p["fo_b"])[:, None, :],
        "ln2_g": stack(lambda p: p["ln2_g"])[:, None, :],
        "ln2_b": stack(lambda p: p["ln2_b"])[:, None, :],
    }


def model_forward(params, token_ids, mask, cfg):
    """Equivalent of Model.forward(x) with x = (token_ids, seq_len, mask)."""
    B, S = token_ids.shape
    H = cfg.hidden_size

    # --- embeddings (gather + adds are glue; LayerNorm happens in-kernel) ---
    # TODO(synk): the token-embedding gather stays in plain JAX (no clean
    # rectangular BlockSpec for a vocab gather at this scale).
    emb = (jnp.take(params["word_emb"], token_ids, axis=0)
           + params["pos_emb"][None, :S, :]
           + params["type_emb"][0][None, None, :])                  # (B,S,H)

    # additive attention mask, (B, 1, S): 0 for real tokens, -1e4 for padding
    add_mask = ((1.0 - mask.astype(jnp.float32)) * -10000.0)[:, None, :]

    stk = stack_layer_params(params["layers"], cfg.num_heads,
                             H // cfg.num_heads)

    # --- whole network body (emb LN + layers + pooler + classifier) in ONE
    #     pallas_call; only the (B, num_classes) logits come back ---
    return encoder_forward(emb, add_mask, params, stk, cfg, B, S)


# ---------------------------------- main --------------------------------------

if __name__ == "__main__":
    cfg = Config()
    B, S = 2, 8

    key = jax.random.PRNGKey(0)
    k_param, k_tok = jax.random.split(key, 2)

    params = init_params(k_param, cfg)

    token_ids = jax.random.randint(k_tok, (B, S), 0, cfg.vocab_size, dtype=jnp.int32)
    seq_len = jnp.full((B,), S, dtype=jnp.int32)   # present in x but unused (as in torch)
    # pad out the last 2 positions of the second example
    mask = jnp.ones((B, S), dtype=jnp.int32).at[1, S - 2:].set(0)

    fwd = jax.jit(functools.partial(model_forward, cfg=cfg))
    x = (token_ids, seq_len, mask)
    out = fwd(params, x[0], x[2])
    out = jax.block_until_ready(out)

    assert out.shape == (B, cfg.num_classes) and out.dtype == jnp.float32
    print("KERNEL_OK")
</pallas_src>

<mosaic_0001>
module attributes {stable_mosaic.version = 11 : i64} {
  func.func @_encoder_kernel(%arg0: i32, %arg1: i32, %arg2: memref<1x8x32xf32, #tpu.memory_space<vmem>>, %arg3: memref<1x1x8xf32, #tpu.memory_space<vmem>>, %arg4: memref<1x32xf32, #tpu.memory_space<vmem>>, %arg5: memref<1x32xf32, #tpu.memory_space<vmem>>, %arg6: memref<1x12x32x8xbf16, #tpu.memory_space<vmem>>, %arg7: memref<1x12x1x8xf32, #tpu.memory_space<vmem>>, %arg8: memref<1x4x8x32xbf16, #tpu.memory_space<vmem>>, %arg9: memref<1x1x32xf32, #tpu.memory_space<vmem>>, %arg10: memref<1x1x32xf32, #tpu.memory_space<vmem>>, %arg11: memref<1x1x32xf32, #tpu.memory_space<vmem>>, %arg12: memref<1x32x64xbf16, #tpu.memory_space<vmem>>, %arg13: memref<1x1x64xf32, #tpu.memory_space<vmem>>, %arg14: memref<1x64x32xbf16, #tpu.memory_space<vmem>>, %arg15: memref<1x1x32xf32, #tpu.memory_space<vmem>>, %arg16: memref<1x1x32xf32, #tpu.memory_space<vmem>>, %arg17: memref<1x1x32xf32, #tpu.memory_space<vmem>>, %arg18: memref<32x32xbf16, #tpu.memory_space<vmem>>, %arg19: memref<1x32xf32, #tpu.memory_space<vmem>>, %arg20: memref<32x2xbf16, #tpu.memory_space<vmem>>, %arg21: memref<1x2xf32, #tpu.memory_space<vmem>>, %arg22: memref<1x1x2xf32, #tpu.memory_space<vmem>>, %arg23: memref<8x32xf32, #tpu.memory_space<vmem>>) attributes {dimension_semantics = [#tpu.dimension_semantics<parallel>, #tpu.dimension_semantics<arbitrary>], iteration_bounds = array<i64: 2, 2>, scalar_prefetch = 0 : i64, scratch_operands = 1 : i64, tpu.core_type = #tpu.core_type<tc>, window_params = [{transform_indices = @transform_0, window_bounds = array<i64: 1, 8, 32>}, {transform_indices = @transform_1, window_bounds = array<i64: 1, 1, 8>}, {pipeline_mode = #tpu.pipeline_mode<synchronous>, transform_indices = @transform_2, window_bounds = array<i64: 1, 32>}, {pipeline_mode = #tpu.pipeline_mode<synchronous>, transform_indices = @transform_3, window_bounds = array<i64: 1, 32>}, {transform_indices = @transform_4, window_bounds = array<i64: 1, 12, 32, 8>}, {transform_indices = @transform_5, window_bounds = array<i64: 1, 12, 1, 8>}, {transform_indices = @transform_6, window_bounds = array<i64: 1, 4, 8, 32>}, {transform_indices = @transform_7, window_bounds = array<i64: 1, 1, 32>}, {transform_indices = @transform_8, window_bounds = array<i64: 1, 1, 32>}, {transform_indices = @transform_9, window_bounds = array<i64: 1, 1, 32>}, {transform_indices = @transform_10, window_bounds = array<i64: 1, 32, 64>}, {transform_indices = @transform_11, window_bounds = array<i64: 1, 1, 64>}, {transform_indices = @transform_12, window_bounds = array<i64: 1, 64, 32>}, {transform_indices = @transform_13, window_bounds = array<i64: 1, 1, 32>}, {transform_indices = @transform_14, window_bounds = array<i64: 1, 1, 32>}, {transform_indices = @transform_15, window_bounds = array<i64: 1, 1, 32>}, {pipeline_mode = #tpu.pipeline_mode<synchronous>, transform_indices = @transform_16, window_bounds = array<i64: 32, 32>}, {pipeline_mode = #tpu.pipeline_mode<synchronous>, transform_indices = @transform_17, window_bounds = array<i64: 1, 32>}, {pipeline_mode = #tpu.pipeline_mode<synchronous>, transform_indices = @transform_18, window_bounds = array<i64: 32, 2>}, {pipeline_mode = #tpu.pipeline_mode<synchronous>, transform_indices = @transform_19, window_bounds = array<i64: 1, 2>}, {transform_indices = @transform_20, window_bounds = array<i64: 1, 1, 2>}]} {
    %c0_i32 = arith.constant 0 : i32
    %0 = arith.cmpi eq, %arg1, %c0_i32 : i32
    %1 = arith.extui %0 : i1 to i32
    %c0_i32_0 = arith.constant 0 : i32
    %2 = arith.cmpi ne, %1, %c0_i32_0 : i32
    scf.if %2 {
      %c0_195 = arith.constant 0 : index
      %c0_196 = arith.constant 0 : index
      %c0_197 = arith.constant 0 : index
      %288 = vector.load %arg2[%c0_195, %c0_196, %c0_197] : memref<1x8x32xf32, #tpu.memory_space<vmem>>, vector<1x8x32xf32>
      %289 = vector.shape_cast %288 : vector<1x8x32xf32> to vector<8x32xf32>
      %c0_198 = arith.constant 0 : index
      %c0_199 = arith.constant 0 : index
      %290 = vector.load %arg4[%c0_198, %c0_199] : memref<1x32xf32, #tpu.memory_space<vmem>>, vector<1x32xf32>
      %c0_200 = arith.constant 0 : index
      %c0_201 = arith.constant 0 : index
      %291 = vector.load %arg5[%c0_200, %c0_201] : memref<1x32xf32, #tpu.memory_space<vmem>>, vector<1x32xf32>
      %cst_202 = arith.constant dense<0.000000e+00> : vector<8xf32>
      %292 = vector.multi_reduction <add>, %289, %cst_202 [1] : vector<8x32xf32> to vector<8xf32>
      %293 = vector.shape_cast %292 : vector<8xf32> to vector<8x1xf32>
      %cst_203 = arith.constant 3.200000e+01 : f32
      %294 = vector.broadcast %cst_203 : f32 to vector<8x1xf32>
      %295 = arith.divf %293, %294 : vector<8x1xf32>
      %296 = vector.broadcast %295 : vector<8x1xf32> to vector<8x32xf32>
      %297 = arith.subf %289, %296 : vector<8x32xf32>
      %298 = arith.mulf %297, %297 : vector<8x32xf32>
      %cst_204 = arith.constant dense<0.000000e+00> : vector<8xf32>
      %299 = vector.multi_reduction <add>, %298, %cst_204 [1] : vector<8x32xf32> to vector<8xf32>
      %300 = vector.shape_cast %299 : vector<8xf32> to vector<8x1xf32>
      %cst_205 = arith.constant 3.200000e+01 : f32
      %301 = vector.broadcast %cst_205 : f32 to vector<8x1xf32>
      %302 = arith.divf %300, %301 : vector<8x1xf32>
      %cst_206 = arith.constant 9.99999996E-13 : f32
      %303 = vector.broadcast %cst_206 : f32 to vector<8x1xf32>
      %304 = arith.addf %302, %303 : vector<8x1xf32>
      %305 = math.rsqrt %304 : vector<8x1xf32>
      %306 = vector.broadcast %305 : vector<8x1xf32> to vector<8x32xf32>
      %307 = arith.mulf %297, %306 : vector<8x32xf32>
      %308 = vector.broadcast %290 : vector<1x32xf32> to vector<8x32xf32>
      %309 = arith.mulf %307, %308 : vector<8x32xf32>
      %310 = vector.broadcast %291 : vector<1x32xf32> to vector<8x32xf32>
      %311 = arith.addf %309, %310 : vector<8x32xf32>
      %c0_207 = arith.constant 0 : index
      %c0_208 = arith.constant 0 : index
      %312 = vector.load %arg23[%c0_207, %c0_208] : memref<8x32xf32, #tpu.memory_space<vmem>>, vector<8x32xf32>
      tpu.vector_store %arg23[%c0_207, %c0_208], %311 {strides = array<i32>} : memref<8x32xf32, #tpu.memory_space<vmem>>, vector<8x32xf32>,
    } else {
    }
    %c0 = arith.constant 0 : index
    %c0_1 = arith.constant 0 : index
    %3 = vector.load %arg23[%c0, %c0_1] : memref<8x32xf32, #tpu.memory_space<vmem>>, vector<8x32xf32>
    %4 = arith.truncf %3 : vector<8x32xf32> to vector<8x32xbf16>
    %c0_2 = arith.constant 0 : index
    %c0_3 = arith.constant 0 : index
    %c0_4 = arith.constant 0 : index
    %5 = vector.load %arg3[%c0_2, %c0_3, %c0_4] : memref<1x1x8xf32, #tpu.memory_space<vmem>>, vector<1x1x8xf32>
    %6 = vector.shape_cast %5 : vector<1x1x8xf32> to vector<1x8xf32>
    %7 = vector.shape_cast %6 : vector<1x8xf32> to vector<1x8xf32>
    %8 = vector.broadcast %7 : vector<1x8xf32> to vector<8x8xf32>
    %cst = arith.constant 0.000000e+00 : f32
    %9 = vector.broadcast %cst : f32 to vector<8x32xf32>
    %c0_5 = arith.constant 0 : index
    %c0_6 = arith.constant 0 : index
    %c0_7 = arith.constant 0 : index
    %c0_8 = arith.constant 0 : index
    %10 = vector.load %arg6[%c0_5, %c0_6, %c0_7, %c0_8] : memref<1x12x32x8xbf16, #tpu.memory_space<vmem>>, vector<1x1x32x8xbf16>
    %11 = vector.shape_cast %10 : vector<1x1x32x8xbf16> to vector<32x8xbf16>
    %cst_9 = arith.constant dense<0.000000e+00> : vector<8x8xf32>
    %12 = tpu.matmul %4, %11, %cst_9 {dimension_numbers = #tpu.dot_dimension_numbers<[1], [0], [0], [1], [0, 0, 1, 1], [], []>} : vector<8x32xbf16>, vector<32x8xbf16>, vector<8x8xf32> -> vector<8x8xf32>
    %c0_10 = arith.constant 0 : index
    %c0_11 = arith.constant 0 : index
    %c0_12 = arith.constant 0 : index
    %c0_13 = arith.constant 0 : index
    %13 = vector.load %arg7[%c0_10, %c0_11, %c0_12, %c0_13] : memref<1x12x1x8xf32, #tpu.memory_space<vmem>>, vector<1x1x1x8xf32>
    %14 = vector.shape_cast %13 : vector<1x1x1x8xf32> to vector<1x8xf32>
    %15 = vector.broadcast %14 : vector<1x8xf32> to vector<8x8xf32>
    %16 = arith.addf %12, %15 : vector<8x8xf32>
    %c0_14 = arith.constant 0 : index
    %c4 = arith.constant 4 : index
    %c0_15 = arith.constant 0 : index
    %c0_16 = arith.constant 0 : index
    %17 = vector.load %arg6[%c0_14, %c4, %c0_15, %c0_16] : memref<1x12x32x8xbf16, #tpu.memory_space<vmem>>, vector<1x1x32x8xbf16>
    %18 = vector.shape_cast %17 : vector<1x1x32x8xbf16> to vector<32x8xbf16>
    %cst_17 = arith.constant dense<0.000000e+00> : vector<8x8xf32>
    %19 = tpu.matmul %4, %18, %cst_17 {dimension_numbers = #tpu.dot_dimension_numbers<[1], [0], [0], [1], [0, 0, 1, 1], [], []>} : vector<8x32xbf16>, vector<32x8xbf16>, vector<8x8xf32> -> vector<8x8xf32>
    %c0_18 = arith.constant 0 : index
    %c4_19 = arith.constant 4 : index
    %c0_20 = arith.constant 0 : index
    %c0_21 = arith.constant 0 : index
    %20 = vector.load %arg7[%c0_18, %c4_19, %c0_20, %c0_21] : memref<1x12x1x8xf32, #tpu.memory_space<vmem>>, vector<1x1x1x8xf32>
    %21 = vector.shape_cast %20 : vector<1x1x1x8xf32> to vector<1x8xf32>
    %22 = vector.broadcast %21 : vector<1x8xf32> to vector<8x8xf32>
    %23 = arith.addf %19, %22 : vector<8x8xf32>
    %c0_22 = arith.constant 0 : index
    %c8 = arith.constant 8 : index
    %c0_23 = arith.constant 0 : index
    %c0_24 = arith.constant 0 : index
    %24 = vector.load %arg6[%c0_22, %c8, %c0_23, %c0_24] : memref<1x12x32x8xbf16, #tpu.memory_space<vmem>>, vector<1x1x32x8xbf16>
    %25 = vector.shape_cast %24 : vector<1x1x32x8xbf16> to vector<32x8xbf16>
    %cst_25 = arith.constant dense<0.000000e+00> : vector<8x8xf32>
    %26 = tpu.matmul %4, %25, %cst_25 {dimension_numbers = #tpu.dot_dimension_numbers<[1], [0], [0], [1], [0, 0, 1, 1], [], []>} : vector<8x32xbf16>, vector<32x8xbf16>, vector<8x8xf32> -> vector<8x8xf32>
    %c0_26 = arith.constant 0 : index
    %c8_27 = arith.constant 8 : index
    %c0_28 = arith.constant 0 : index
    %c0_29 = arith.constant 0 : index
    %27 = vector.load %arg7[%c0_26, %c8_27, %c0_28, %c0_29] : memref<1x12x1x8xf32, #tpu.memory_space<vmem>>, vector<1x1x1x8xf32>
    %28 = vector.shape_cast %27 : vector<1x1x1x8xf32> to vector<1x8xf32>
    %29 = vector.broadcast %28 : vector<1x8xf32> to vector<8x8xf32>
    %30 = arith.addf %26, %29 : vector<8x8xf32>
    %cst_30 = arith.constant dense<0.000000e+00> : vector<8x8xf32>
    %31 = tpu.matmul %16, %23, %cst_30 {dimension_numbers = #tpu.dot_dimension_numbers<[1], [1], [0], [0], [0, 0, 1, 0], [], []>} : vector<8x8xf32>, vector<8x8xf32>, vector<8x8xf32> -> vector<8x8xf32>
    %32 = arith.addf %31, %8 : vector<8x8xf32>
    %cst_31 = arith.constant dense<0xFF800000> : vector<8xf32>
    %33 = vector.multi_reduction <maximumf>, %32, %cst_31 [1] : vector<8x8xf32> to vector<8xf32>
    %34 = vector.shape_cast %33 : vector<8xf32> to vector<8x1xf32>
    %35 = vector.broadcast %34 : vector<8x1xf32> to vector<8x8xf32>
    %36 = arith.subf %32, %35 : vector<8x8xf32>
    %37 = math.exp %36 : vector<8x8xf32>
    %cst_32 = arith.constant dense<0.000000e+00> : vector<8xf32>
    %38 = vector.multi_reduction <add>, %37, %cst_32 [1] : vector<8x8xf32> to vector<8xf32>
    %39 = vector.shape_cast %38 : vector<8xf32> to vector<8x1xf32>
    %40 = tpu.reciprocal %39 {approx = true} : vector<8x1xf32> -> vector<8x1xf32>
    %41 = vector.broadcast %40 : vector<8x1xf32> to vector<8x8xf32>
    %42 = arith.mulf %37, %41 : vector<8x8xf32>
    %43 = arith.truncf %42 : vector<8x8xf32> to vector<8x8xbf16>
    %44 = arith.truncf %30 : vector<8x8xf32> to vector<8x8xbf16>
    %cst_33 = arith.constant dense<0.000000e+00> : vector<8x8xf32>
    %45 = tpu.matmul %43, %44, %cst_33 {dimension_numbers = #tpu.dot_dimension_numbers<[1], [0], [0], [1], [0, 0, 1, 1], [], []>} : vector<8x8xbf16>, vector<8x8xbf16>, vector<8x8xf32> -> vector<8x8xf32>
    %46 = arith.truncf %45 : vector<8x8xf32> to vector<8x8xbf16>
    %c0_34 = arith.constant 0 : index
    %c0_35 = arith.constant 0 : index
    %c0_36 = arith.constant 0 : index
    %c0_37 = arith.constant 0 : index
    %47 = vector.load %arg8[%c0_34, %c0_35, %c0_36, %c0_37] : memref<1x4x8x32xbf16, #tpu.memory_space<vmem>>, vector<1x1x8x32xbf16>
    %48 = vector.shape_cast %47 : vector<1x1x8x32xbf16> to vector<8x32xbf16>
    %cst_38 = arith.constant dense<0.000000e+00> : vector<8x32xf32>
    %49 = tpu.matmul %46, %48, %cst_38 {dimension_numbers = #tpu.dot_dimension_numbers<[1], [0], [0], [1], [0, 0, 1, 1], [], []>} : vector<8x8xbf16>, vector<8x32xbf16>, vector<8x32xf32> -> vector<8x32xf32>
    %50 = arith.addf %9, %49 : vector<8x32xf32>
    %c0_39 = arith.constant 0 : index
    %c1 = arith.constant 1 : index
    %c0_40 = arith.constant 0 : index
    %c0_41 = arith.constant 0 : index
    %51 = vector.load %arg6[%c0_39, %c1, %c0_40, %c0_41] : memref<1x12x32x8xbf16, #tpu.memory_space<vmem>>, vector<1x1x32x8xbf16>
    %52 = vector.shape_cast %51 : vector<1x1x32x8xbf16> to vector<32x8xbf16>
    %cst_42 = arith.constant dense<0.000000e+00> : vector<8x8xf32>
    %53 = tpu.matmul %4, %52, %cst_42 {dimension_numbers = #tpu.dot_dimension_numbers<[1], [0], [0], [1], [0, 0, 1, 1], [], []>} : vector<8x32xbf16>, vector<32x8xbf16>, vector<8x8xf32> -> vector<8x8xf32>
    %c0_43 = arith.constant 0 : index
    %c1_44 = arith.constant 1 : index
    %c0_45 = arith.constant 0 : index
    %c0_46 = arith.constant 0 : index
    %54 = vector.load %arg7[%c0_43, %c1_44, %c0_45, %c0_46] : memref<1x12x1x8xf32, #tpu.memory_space<vmem>>, vector<1x1x1x8xf32>
    %55 = vector.shape_cast %54 : vector<1x1x1x8xf32> to vector<1x8xf32>
    %56 = vector.broadcast %55 : vector<1x8xf32> to vector<8x8xf32>
    %57 = arith.addf %53, %56 : vector<8x8xf32>
    %c0_47 = arith.constant 0 : index
    %c5 = arith.constant 5 : index
    %c0_48 = arith.constant 0 : index
    %c0_49 = arith.constant 0 : index
    %58 = vector.load %arg6[%c0_47, %c5, %c0_48, %c0_49] : memref<1x12x32x8xbf16, #tpu.memory_space<vmem>>, vector<1x1x32x8xbf16>
    %59 = vector.shape_cast %58 : vector<1x1x32x8xbf16> to vector<32x8xbf16>
    %cst_50 = arith.constant dense<0.000000e+00> : vector<8x8xf32>
    %60 = tpu.matmul %4, %59, %cst_50 {dimension_numbers = #tpu.dot_dimension_numbers<[1], [0], [0], [1], [0, 0, 1, 1], [], []>} : vector<8x32xbf16>, vector<32x8xbf16>, vector<8x8xf32> -> vector<8x8xf32>
    %c0_51 = arith.constant 0 : index
    %c5_52 = arith.constant 5 : index
    %c0_53 = arith.constant 0 : index
    %c0_54 = arith.constant 0 : index
    %61 = vector.load %arg7[%c0_51, %c5_52, %c0_53, %c0_54] : memref<1x12x1x8xf32, #tpu.memory_space<vmem>>, vector<1x1x1x8xf32>
    %62 = vector.shape_cast %61 : vector<1x1x1x8xf32> to vector<1x8xf32>
    %63 = vector.broadcast %62 : vector<1x8xf32> to vector<8x8xf32>
    %64 = arith.addf %60, %63 : vector<8x8xf32>
    %c0_55 = arith.constant 0 : index
    %c9 = arith.constant 9 : index
    %c0_56 = arith.constant 0 : index
    %c0_57 = arith.constant 0 : index
    %65 = vector.load %arg6[%c0_55, %c9, %c0_56, %c0_57] : memref<1x12x32x8xbf16, #tpu.memory_space<vmem>>, vector<1x1x32x8xbf16>
    %66 = vector.shape_cast %65 : vector<1x1x32x8xbf16> to vector<32x8xbf16>
    %cst_58 = arith.constant dense<0.000000e+00> : vector<8x8xf32>
    %67 = tpu.matmul %4, %66, %cst_58 {dimension_numbers = #tpu.dot_dimension_numbers<[1], [0], [0], [1], [0, 0, 1, 1], [], []>} : vector<8x32xbf16>, vector<32x8xbf16>, vector<8x8xf32> -> vector<8x8xf32>
    %c0_59 = arith.constant 0 : index
    %c9_60 = arith.constant 9 : index
    %c0_61 = arith.constant 0 : index
    %c0_62 = arith.constant 0 : index
    %68 = vector.load %arg7[%c0_59, %c9_60, %c0_61, %c0_62] : memref<1x12x1x8xf32, #tpu.memory_space<vmem>>, vector<1x1x1x8xf32>
    %69 = vector.shape_cast %68 : vector<1x1x1x8xf32> to vector<1x8xf32>
    %70 = vector.broadcast %69 : vector<1x8xf32> to vector<8x8xf32>
    %71 = arith.addf %67, %70 : vector<8x8xf32>
    %cst_63 = arith.constant dense<0.000000e+00> : vector<8x8xf32>
    %72 = tpu.matmul %57, %64, %cst_63 {dimension_numbers = #tpu.dot_dimension_numbers<[1], [1], [0], [0], [0, 0, 1, 0], [], []>} : vector<8x8xf32>, vector<8x8xf32>, vector<8x8xf32> -> vector<8x8xf32>
    %73 = arith.addf %72, %8 : vector<8x8xf32>
    %cst_64 = arith.constant dense<0xFF800000> : vector<8xf32>
    %74 = vector.multi_reduction <maximumf>, %73, %cst_64 [1] : vector<8x8xf32> to vector<8xf32>
    %75 = vector.shape_cast %74 : vector<8xf32> to vector<8x1xf32>
    %76 = vector.broadcast %75 : vector<8x1xf32> to vector<8x8xf32>
    %77 = arith.subf %73, %76 : vector<8x8xf32>
    %78 = math.exp %77 : vector<8x8xf32>
    %cst_65 = arith.constant dense<0.000000e+00> : vector<8xf32>
    %79 = vector.multi_reduction <add>, %78, %cst_65 [1] : vector<8x8xf32> to vector<8xf32>
    %80 = vector.shape_cast %79 : vector<8xf32> to vector<8x1xf32>
    %81 = tpu.reciprocal %80 {approx = true} : vector<8x1xf32> -> vector<8x1xf32>
    %82 = vector.broadcast %81 : vector<8x1xf32> to vector<8x8xf32>
    %83 = arith.mulf %78, %82 : vector<8x8xf32>
    %84 = arith.truncf %83 : vector<8x8xf32> to vector<8x8xbf16>
    %85 = arith.truncf %71 : vector<8x8xf32> to vector<8x8xbf16>
    %cst_66 = arith.constant dense<0.000000e+00> : vector<8x8xf32>
    %86 = tpu.matmul %84, %85, %cst_66 {dimension_numbers = #tpu.dot_dimension_numbers<[1], [0], [0], [1], [0, 0, 1, 1], [], []>} : vector<8x8xbf16>, vector<8x8xbf16>, vector<8x8xf32> -> vector<8x8xf32>
    %87 = arith.truncf %86 : vector<8x8xf32> to vector<8x8xbf16>
    %c0_67 = arith.constant 0 : index
    %c1_68 = arith.constant 1 : index
    %c0_69 = arith.constant 0 : index
    %c0_70 = arith.constant 0 : index
    %88 = vector.load %arg8[%c0_67, %c1_68, %c0_69, %c0_70] : memref<1x4x8x32xbf16, #tpu.memory_space<vmem>>, vector<1x1x8x32xbf16>
    %89 = vector.shape_cast %88 : vector<1x1x8x32xbf16> to vector<8x32xbf16>
    %cst_71 = arith.constant dense<0.000000e+00> : vector<8x32xf32>
    %90 = tpu.matmul %87, %89, %cst_71 {dimension_numbers = #tpu.dot_dimension_numbers<[1], [0], [0], [1], [0, 0, 1, 1], [], []>} : vector<8x8xbf16>, vector<8x32xbf16>, vector<8x32xf32> -> vector<8x32xf32>
    %91 = arith.addf %50, %90 : vector<8x32xf32>
    %c0_72 = arith.constant 0 : index
    %c2 = arith.constant 2 : index
    %c0_73 = arith.constant 0 : index
    %c0_74 = arith.constant 0 : index
    %92 = vector.load %arg6[%c0_72, %c2, %c0_73, %c0_74] : memref<1x12x32x8xbf16, #tpu.memory_space<vmem>>, vector<1x1x32x8xbf16>
    %93 = vector.shape_cast %92 : vector<1x1x32x8xbf16> to vector<32x8xbf16>
    %cst_75 = arith.constant dense<0.000000e+00> : vector<8x8xf32>
    %94 = tpu.matmul %4, %93, %cst_75 {dimension_numbers = #tpu.dot_dimension_numbers<[1], [0], [0], [1], [0, 0, 1, 1], [], []>} : vector<8x32xbf16>, vector<32x8xbf16>, vector<8x8xf32> -> vector<8x8xf32>
    %c0_76 = arith.constant 0 : index
    %c2_77 = arith.constant 2 : index
    %c0_78 = arith.constant 0 : index
    %c0_79 = arith.constant 0 : index
    %95 = vector.load %arg7[%c0_76, %c2_77, %c0_78, %c0_79] : memref<1x12x1x8xf32, #tpu.memory_space<vmem>>, vector<1x1x1x8xf32>
    %96 = vector.shape_cast %95 : vector<1x1x1x8xf32> to vector<1x8xf32>
    %97 = vector.broadcast %96 : vector<1x8xf32> to vector<8x8xf32>
    %98 = arith.addf %94, %97 : vector<8x8xf32>
    %c0_80 = arith.constant 0 : index
    %c6 = arith.constant 6 : index
    %c0_81 = arith.constant 0 : index
    %c0_82 = arith.constant 0 : index
    %99 = vector.load %arg6[%c0_80, %c6, %c0_81, %c0_82] : memref<1x12x32x8xbf16, #tpu.memory_space<vmem>>, vector<1x1x32x8xbf16>
    %100 = vector.shape_cast %99 : vector<1x1x32x8xbf16> to vector<32x8xbf16>
    %cst_83 = arith.constant dense<0.000000e+00> : vector<8x8xf32>
    %101 = tpu.matmul %4, %100, %cst_83 {dimension_numbers = #tpu.dot_dimension_numbers<[1], [0], [0], [1], [0, 0, 1, 1], [], []>} : vector<8x32xbf16>, vector<32x8xbf16>, vector<8x8xf32> -> vector<8x8xf32>
    %c0_84 = arith.constant 0 : index
    %c6_85 = arith.constant 6 : index
    %c0_86 = arith.constant 0 : index
    %c0_87 = arith.constant 0 : index
    %102 = vector.load %arg7[%c0_84, %c6_85, %c0_86, %c0_87] : memref<1x12x1x8xf32, #tpu.memory_space<vmem>>, vector<1x1x1x8xf32>
    %103 = vector.shape_cast %102 : vector<1x1x1x8xf32> to vector<1x8xf32>
    %104 = vector.broadcast %103 : vector<1x8xf32> to vector<8x8xf32>
    %105 = arith.addf %101, %104 : vector<8x8xf32>
    %c0_88 = arith.constant 0 : index
    %c10 = arith.constant 10 : index
    %c0_89 = arith.constant 0 : index
    %c0_90 = arith.constant 0 : index
    %106 = vector.load %arg6[%c0_88, %c10, %c0_89, %c0_90] : memref<1x12x32x8xbf16, #tpu.memory_space<vmem>>, vector<1x1x32x8xbf16>
    %107 = vector.shape_cast %106 : vector<1x1x32x8xbf16> to vector<32x8xbf16>
    %cst_91 = arith.constant dense<0.000000e+00> : vector<8x8xf32>
    %108 = tpu.matmul %4, %107, %cst_91 {dimension_numbers = #tpu.dot_dimension_numbers<[1], [0], [0], [1], [0, 0, 1, 1], [], []>} : vector<8x32xbf16>, vector<32x8xbf16>, vector<8x8xf32> -> vector<8x8xf32>
    %c0_92 = arith.constant 0 : index
    %c10_93 = arith.constant 10 : index
    %c0_94 = arith.constant 0 : index
    %c0_95 = arith.constant 0 : index
    %109 = vector.load %arg7[%c0_92, %c10_93, %c0_94, %c0_95] : memref<1x12x1x8xf32, #tpu.memory_space<vmem>>, vector<1x1x1x8xf32>
    %110 = vector.shape_cast %109 : vector<1x1x1x8xf32> to vector<1x8xf32>
    %111 = vector.broadcast %110 : vector<1x8xf32> to vector<8x8xf32>
    %112 = arith.addf %108, %111 : vector<8x8xf32>
    %cst_96 = arith.constant dense<0.000000e+00> : vector<8x8xf32>
    %113 = tpu.matmul %98, %105, %cst_96 {dimension_numbers = #tpu.dot_dimension_numbers<[1], [1], [0], [0], [0, 0, 1, 0], [], []>} : vector<8x8xf32>, vector<8x8xf32>, vector<8x8xf32> -> vector<8x8xf32>
    %114 = arith.addf %113, %8 : vector<8x8xf32>
    %cst_97 = arith.constant dense<0xFF800000> : vector<8xf32>
    %115 = vector.multi_reduction <maximumf>, %114, %cst_97 [1] : vector<8x8xf32> to vector<8xf32>
    %116 = vector.shape_cast %115 : vector<8xf32> to vector<8x1xf32>
    %117 = vector.broadcast %116 : vector<8x1xf32> to vector<8x8xf32>
    %118 = arith.subf %114, %117 : vector<8x8xf32>
    %119 = math.exp %118 : vector<8x8xf32>
    %cst_98 = arith.constant dense<0.000000e+00> : vector<8xf32>
    %120 = vector.multi_reduction <add>, %119, %cst_98 [1] : vector<8x8xf32> to vector<8xf32>
    %121 = vector.shape_cast %120 : vector<8xf32> to vector<8x1xf32>
    %122 = tpu.reciprocal %121 {approx = true} : vector<8x1xf32> -> vector<8x1xf32>
    %123 = vector.broadcast %122 : vector<8x1xf32> to vector<8x8xf32>
    %124 = arith.mulf %119, %123 : vector<8x8xf32>
    %125 = arith.truncf %124 : vector<8x8xf32> to vector<8x8xbf16>
    %126 = arith.truncf %112 : vector<8x8xf32> to vector<8x8xbf16>
    %cst_99 = arith.constant dense<0.000000e+00> : vector<8x8xf32>
    %127 = tpu.matmul %125, %126, %cst_99 {dimension_numbers = #tpu.dot_dimension_numbers<[1], [0], [0], [1], [0, 0, 1, 1], [], []>} : vector<8x8xbf16>, vector<8x8xbf16>, vector<8x8xf32> -> vector<8x8xf32>
    %128 = arith.truncf %127 : vector<8x8xf32> to vector<8x8xbf16>
    %c0_100 = arith.constant 0 : index
    %c2_101 = arith.constant 2 : index
    %c0_102 = arith.constant 0 : index
    %c0_103 = arith.constant 0 : index
    %129 = vector.load %arg8[%c0_100, %c2_101, %c0_102, %c0_103] : memref<1x4x8x32xbf16, #tpu.memory_space<vmem>>, vector<1x1x8x32xbf16>
    %130 = vector.shape_cast %129 : vector<1x1x8x32xbf16> to vector<8x32xbf16>
    %cst_104 = arith.constant dense<0.000000e+00> : vector<8x32xf32>
    %131 = tpu.matmul %128, %130, %cst_104 {dimension_numbers = #tpu.dot_dimension_numbers<[1], [0], [0], [1], [0, 0, 1, 1], [], []>} : vector<8x8xbf16>, vector<8x32xbf16>, vector<8x32xf32> -> vector<8x32xf32>
    %132 = arith.addf %91, %131 : vector<8x32xf32>
    %c0_105 = arith.constant 0 : index
    %c3 = arith.constant 3 : index
    %c0_106 = arith.constant 0 : index
    %c0_107 = arith.constant 0 : index
    %133 = vector.load %arg6[%c0_105, %c3, %c0_106, %c0_107] : memref<1x12x32x8xbf16, #tpu.memory_space<vmem>>, vector<1x1x32x8xbf16>
    %134 = vector.shape_cast %133 : vector<1x1x32x8xbf16> to vector<32x8xbf16>
    %cst_108 = arith.constant dense<0.000000e+00> : vector<8x8xf32>
    %135 = tpu.matmul %4, %134, %cst_108 {dimension_numbers = #tpu.dot_dimension_numbers<[1], [0], [0], [1], [0, 0, 1, 1], [], []>} : vector<8x32xbf16>, vector<32x8xbf16>, vector<8x8xf32> -> vector<8x8xf32>
    %c0_109 = arith.constant 0 : index
    %c3_110 = arith.constant 3 : index
    %c0_111 = arith.constant 0 : index
    %c0_112 = arith.constant 0 : index
    %136 = vector.load %arg7[%c0_109, %c3_110, %c0_111, %c0_112] : memref<1x12x1x8xf32, #tpu.memory_space<vmem>>, vector<1x1x1x8xf32>
    %137 = vector.shape_cast %136 : vector<1x1x1x8xf32> to vector<1x8xf32>
    %138 = vector.broadcast %137 : vector<1x8xf32> to vector<8x8xf32>
    %139 = arith.addf %135, %138 : vector<8x8xf32>
    %c0_113 = arith.constant 0 : index
    %c7 = arith.constant 7 : index
    %c0_114 = arith.constant 0 : index
    %c0_115 = arith.constant 0 : index
    %140 = vector.load %arg6[%c0_113, %c7, %c0_114, %c0_115] : memref<1x12x32x8xbf16, #tpu.memory_space<vmem>>, vector<1x1x32x8xbf16>
    %141 = vector.shape_cast %140 : vector<1x1x32x8xbf16> to vector<32x8xbf16>
    %cst_116 = arith.constant dense<0.000000e+00> : vector<8x8xf32>
    %142 = tpu.matmul %4, %141, %cst_116 {dimension_numbers = #tpu.dot_dimension_numbers<[1], [0], [0], [1], [0, 0, 1, 1], [], []>} : vector<8x32xbf16>, vector<32x8xbf16>, vector<8x8xf32> -> vector<8x8xf32>
    %c0_117 = arith.constant 0 : index
    %c7_118 = arith.constant 7 : index
    %c0_119 = arith.constant 0 : index
    %c0_120 = arith.constant 0 : index
    %143 = vector.load %arg7[%c0_117, %c7_118, %c0_119, %c0_120] : memref<1x12x1x8xf32, #tpu.memory_space<vmem>>, vector<1x1x1x8xf32>
    %144 = vector.shape_cast %143 : vector<1x1x1x8xf32> to vector<1x8xf32>
    %145 = vector.broadcast %144 : vector<1x8xf32> to vector<8x8xf32>
    %146 = arith.addf %142, %145 : vector<8x8xf32>
    %c0_121 = arith.constant 0 : index
    %c11 = arith.constant 11 : index
    %c0_122 = arith.constant 0 : index
    %c0_123 = arith.constant 0 : index
    %147 = vector.load %arg6[%c0_121, %c11, %c0_122, %c0_123] : memref<1x12x32x8xbf16, #tpu.memory_space<vmem>>, vector<1x1x32x8xbf16>
    %148 = vector.shape_cast %147 : vector<1x1x32x8xbf16> to vector<32x8xbf16>
    %cst_124 = arith.constant dense<0.000000e+00> : vector<8x8xf32>
    %149 = tpu.matmul %4, %148, %cst_124 {dimension_numbers = #tpu.dot_dimension_numbers<[1], [0], [0], [1], [0, 0, 1, 1], [], []>} : vector<8x32xbf16>, vector<32x8xbf16>, vector<8x8xf32> -> vector<8x8xf32>
    %c0_125 = arith.constant 0 : index
    %c11_126 = arith.constant 11 : index
    %c0_127 = arith.constant 0 : index
    %c0_128 = arith.constant 0 : index
    %150 = vector.load %arg7[%c0_125, %c11_126, %c0_127, %c0_128] : memref<1x12x1x8xf32, #tpu.memory_space<vmem>>, vector<1x1x1x8xf32>
    %151 = vector.shape_cast %150 : vector<1x1x1x8xf32> to vector<1x8xf32>
    %152 = vector.broadcast %151 : vector<1x8xf32> to vector<8x8xf32>
    %153 = arith.addf %149, %152 : vector<8x8xf32>
    %cst_129 = arith.constant dense<0.000000e+00> : vector<8x8xf32>
    %154 = tpu.matmul %139, %146, %cst_129 {dimension_numbers = #tpu.dot_dimension_numbers<[1], [1], [0], [0], [0, 0, 1, 0], [], []>} : vector<8x8xf32>, vector<8x8xf32>, vector<8x8xf32> -> vector<8x8xf32>
    %155 = arith.addf %154, %8 : vector<8x8xf32>
    %cst_130 = arith.constant dense<0xFF800000> : vector<8xf32>
    %156 = vector.multi_reduction <maximumf>, %155, %cst_130 [1] : vector<8x8xf32> to vector<8xf32>
    %157 = vector.shape_cast %156 : vector<8xf32> to vector<8x1xf32>
    %158 = vector.broadcast %157 : vector<8x1xf32> to vector<8x8xf32>
    %159 = arith.subf %155, %158 : vector<8x8xf32>
    %160 = math.exp %159 : vector<8x8xf32>
    %cst_131 = arith.constant dense<0.000000e+00> : vector<8xf32>
    %161 = vector.multi_reduction <add>, %160, %cst_131 [1] : vector<8x8xf32> to vector<8xf32>
    %162 = vector.shape_cast %161 : vector<8xf32> to vector<8x1xf32>
    %163 = tpu.reciprocal %162 {approx = true} : vector<8x1xf32> -> vector<8x1xf32>
    %164 = vector.broadcast %163 : vector<8x1xf32> to vector<8x8xf32>
    %165 = arith.mulf %160, %164 : vector<8x8xf32>
    %166 = arith.truncf %165 : vector<8x8xf32> to vector<8x8xbf16>
    %167 = arith.truncf %153 : vector<8x8xf32> to vector<8x8xbf16>
    %cst_132 = arith.constant dense<0.000000e+00> : vector<8x8xf32>
    %168 = tpu.matmul %166, %167, %cst_132 {dimension_numbers = #tpu.dot_dimension_numbers<[1], [0], [0], [1], [0, 0, 1, 1], [], []>} : vector<8x8xbf16>, vector<8x8xbf16>, vector<8x8xf32> -> vector<8x8xf32>
    %169 = arith.truncf %168 : vector<8x8xf32> to vector<8x8xbf16>
    %c0_133 = arith.constant 0 : index
    %c3_134 = arith.constant 3 : index
    %c0_135 = arith.constant 0 : index
    %c0_136 = arith.constant 0 : index
    %170 = vector.load %arg8[%c0_133, %c3_134, %c0_135, %c0_136] : memref<1x4x8x32xbf16, #tpu.memory_space<vmem>>, vector<1x1x8x32xbf16>
    %171 = vector.shape_cast %170 : vector<1x1x8x32xbf16> to vector<8x32xbf16>
    %cst_137 = arith.constant dense<0.000000e+00> : vector<8x32xf32>
    %172 = tpu.matmul %169, %171, %cst_137 {dimension_numbers = #tpu.dot_dimension_numbers<[1], [0], [0], [1], [0, 0, 1, 1], [], []>} : vector<8x8xbf16>, vector<8x32xbf16>, vector<8x32xf32> -> vector<8x32xf32>
    %173 = arith.addf %132, %172 : vector<8x32xf32>
    %c0_138 = arith.constant 0 : index
    %c0_139 = arith.constant 0 : index
    %c0_140 = arith.constant 0 : index
    %174 = vector.load %arg9[%c0_138, %c0_139, %c0_140] : memref<1x1x32xf32, #tpu.memory_space<vmem>>, vector<1x1x32xf32>
    %175 = vector.shape_cast %174 : vector<1x1x32xf32> to vector<1x32xf32>
    %176 = vector.broadcast %175 : vector<1x32xf32> to vector<8x32xf32>
    %177 = arith.addf %173, %176 : vector<8x32xf32>
    %178 = arith.addf %3, %177 : vector<8x32xf32>
    %c0_141 = arith.constant 0 : index
    %c0_142 = arith.constant 0 : index
    %c0_143 = arith.constant 0 : index
    %179 = vector.load %arg10[%c0_141, %c0_142, %c0_143] : memref<1x1x32xf32, #tpu.memory_space<vmem>>, vector<1x1x32xf32>
    %180 = vector.shape_cast %179 : vector<1x1x32xf32> to vector<1x32xf32>
    %c0_144 = arith.constant 0 : index
    %c0_145 = arith.constant 0 : index
    %c0_146 = arith.constant 0 : index
    %181 = vector.load %arg11[%c0_144, %c0_145, %c0_146] : memref<1x1x32xf32, #tpu.memory_space<vmem>>, vector<1x1x32xf32>
    %182 = vector.shape_cast %181 : vector<1x1x32xf32> to vector<1x32xf32>
    %cst_147 = arith.constant dense<0.000000e+00> : vector<8xf32>
    %183 = vector.multi_reduction <add>, %178, %cst_147 [1] : vector<8x32xf32> to vector<8xf32>
    %184 = vector.shape_cast %183 : vector<8xf32> to vector<8x1xf32>
    %cst_148 = arith.constant 3.200000e+01 : f32
    %185 = vector.broadcast %cst_148 : f32 to vector<8x1xf32>
    %186 = arith.divf %184, %185 : vector<8x1xf32>
    %187 = vector.broadcast %186 : vector<8x1xf32> to vector<8x32xf32>
    %188 = arith.subf %178, %187 : vector<8x32xf32>
    %189 = arith.mulf %188, %188 : vector<8x32xf32>
    %cst_149 = arith.constant dense<0.000000e+00> : vector<8xf32>
    %190 = vector.multi_reduction <add>, %189, %cst_149 [1] : vector<8x32xf32> to vector<8xf32>
    %191 = vector.shape_cast %190 : vector<8xf32> to vector<8x1xf32>
    %cst_150 = arith.constant 3.200000e+01 : f32
    %192 = vector.broadcast %cst_150 : f32 to vector<8x1xf32>
    %193 = arith.divf %191, %192 : vector<8x1xf32>
    %cst_151 = arith.constant 9.99999996E-13 : f32
    %194 = vector.broadcast %cst_151 : f32 to vector<8x1xf32>
    %195 = arith.addf %193, %194 : vector<8x1xf32>
    %196 = math.rsqrt %195 : vector<8x1xf32>
    %197 = vector.broadcast %196 : vector<8x1xf32> to vector<8x32xf32>
    %198 = arith.mulf %188, %197 : vector<8x32xf32>
    %199 = vector.broadcast %180 : vector<1x32xf32> to vector<8x32xf32>
    %200 = arith.mulf %198, %199 : vector<8x32xf32>
    %201 = vector.broadcast %182 : vector<1x32xf32> to vector<8x32xf32>
    %202 = arith.addf %200, %201 : vector<8x32xf32>
    %203 = arith.truncf %202 : vector<8x32xf32> to vector<8x32xbf16>
    %c0_152 = arith.constant 0 : index
    %c0_153 = arith.constant 0 : index
    %c0_154 = arith.constant 0 : index
    %204 = vector.load %arg12[%c0_152, %c0_153, %c0_154] : memref<1x32x64xbf16, #tpu.memory_space<vmem>>, vector<1x32x64xbf16>
    %205 = vector.shape_cast %204 : vector<1x32x64xbf16> to vector<32x64xbf16>
    %cst_155 = arith.constant dense<0.000000e+00> : vector<8x64xf32>
    %206 = tpu.matmul %203, %205, %cst_155 {dimension_numbers = #tpu.dot_dimension_numbers<[1], [0], [0], [1], [0, 0, 1, 1], [], []>} : vector<8x32xbf16>, vector<32x64xbf16>, vector<8x64xf32> -> vector<8x64xf32>
    %c0_156 = arith.constant 0 : index
    %c0_157 = arith.constant 0 : index
    %c0_158 = arith.constant 0 : index
    %207 = vector.load %arg13[%c0_156, %c0_157, %c0_158] : memref<1x1x64xf32, #tpu.memory_space<vmem>>, vector<1x1x64xf32>
    %208 = vector.shape_cast %207 : vector<1x1x64xf32> to vector<1x64xf32>
    %209 = vector.broadcast %208 : vector<1x64xf32> to vector<8x64xf32>
    %210 = arith.addf %206, %209 : vector<8x64xf32>
    %cst_159 = arith.constant 5.000000e-01 : f32
    %211 = vector.broadcast %cst_159 : f32 to vector<8x64xf32>
    %212 = arith.mulf %211, %210 : vector<8x64xf32>
    %cst_160 = arith.constant 0.707106769 : f32
    %213 = vector.broadcast %cst_160 : f32 to vector<8x64xf32>
    %214 = arith.mulf %210, %213 : vector<8x64xf32>
    %215 = math.absf %214 : vector<8x64xf32>
    %cst_161 = arith.constant 0.327591091 : f32
    %216 = vector.broadcast %cst_161 : f32 to vector<8x64xf32>
    %217 = arith.mulf %216, %215 : vector<8x64xf32>
    %cst_162 = arith.constant 1.000000e+00 : f32
    %218 = vector.broadcast %cst_162 : f32 to vector<8x64xf32>
    %219 = arith.addf %218, %217 : vector<8x64xf32>
    %cst_163 = arith.constant 1.000000e+00 : f32
    %220 = vector.broadcast %cst_163 : f32 to vector<8x64xf32>
    %221 = arith.divf %220, %219 : vector<8x64xf32>
    %cst_164 = arith.constant 1.06140542 : f32
    %222 = vector.broadcast %cst_164 : f32 to vector<8x64xf32>
    %223 = arith.mulf %222, %221 : vector<8x64xf32>
    %cst_165 = arith.constant -1.45315206 : f32
    %224 = vector.broadcast %cst_165 : f32 to vector<8x64xf32>
    %225 = arith.addf %223, %224 : vector<8x64xf32>
    %226 = arith.mulf %225, %221 : vector<8x64xf32>
    %cst_166 = arith.constant 1.42141378 : f32
    %227 = vector.broadcast %cst_166 : f32 to vector<8x64xf32>
    %228 = arith.addf %226, %227 : vector<8x64xf32>
    %229 = arith.mulf %228, %221 : vector<8x64xf32>
    %cst_167 = arith.constant -0.284496725 : f32
    %230 = vector.broadcast %cst_167 : f32 to vector<8x64xf32>
    %231 = arith.addf %229, %230 : vector<8x64xf32>
    %232 = arith.mulf %231, %221 : vector<8x64xf32>
    %cst_168 = arith.constant 0.254829586 : f32
    %233 = vector.broadcast %cst_168 : f32 to vector<8x64xf32>
    %234 = arith.addf %232, %233 : vector<8x64xf32>
    %235 = arith.mulf %234, %221 : vector<8x64xf32>
    %cst_169 = arith.constant 0.000000e+00 : f32
    %236 = vector.broadcast %cst_169 : f32 to vector<8x64xf32>
    %237 = arith.subf %236, %215 : vector<8x64xf32>
    %238 = arith.mulf %237, %215 : vector<8x64xf32>
    %239 = math.exp %238 : vector<8x64xf32>
    %240 = arith.mulf %235, %239 : vector<8x64xf32>
    %cst_170 = arith.constant 1.000000e+00 : f32
    %241 = vector.broadcast %cst_170 : f32 to vector<8x64xf32>
    %242 = arith.subf %241, %240 : vector<8x64xf32>
    %cst_171 = arith.constant 0.000000e+00 : f32
    %243 = vector.broadcast %cst_171 : f32 to vector<8x64xf32>
    %244 = arith.cmpf oge, %214, %243 : vector<8x64xf32>
    %cst_172 = arith.constant 0.000000e+00 : f32
    %245 = vector.broadcast %cst_172 : f32 to vector<8x64xf32>
    %246 = arith.subf %245, %242 : vector<8x64xf32>
    %247 = arith.select %244, %242, %246 : vector<8x64xi1>, vector<8x64xf32>
    %cst_173 = arith.constant 1.000000e+00 : f32
    %248 = vector.broadcast %cst_173 : f32 to vector<8x64xf32>
    %249 = arith.addf %248, %247 : vector<8x64xf32>
    %250 = arith.mulf %212, %249 : vector<8x64xf32>
    %251 = arith.truncf %250 : vector<8x64xf32> to vector<8x64xbf16>
    %c0_174 = arith.constant 0 : index
    %c0_175 = arith.constant 0 : index
    %c0_176 = arith.constant 0 : index
    %252 = vector.load %arg14[%c0_174, %c0_175, %c0_176] : memref<1x64x32xbf16, #tpu.memory_space<vmem>>, vector<1x64x32xbf16>
    %253 = vector.shape_cast %252 : vector<1x64x32xbf16> to vector<64x32xbf16>
    %cst_177 = arith.constant dense<0.000000e+00> : vector<8x32xf32>
    %254 = tpu.matmul %251, %253, %cst_177 {dimension_numbers = #tpu.dot_dimension_numbers<[1], [0], [0], [1], [0, 0, 1, 1], [], []>} : vector<8x64xbf16>, vector<64x32xbf16>, vector<8x32xf32> -> vector<8x32xf32>
    %c0_178 = arith.constant 0 : index
    %c0_179 = arith.constant 0 : index
    %c0_180 = arith.constant 0 : index
    %255 = vector.load %arg15[%c0_178, %c0_179, %c0_180] : memref<1x1x32xf32, #tpu.memory_space<vmem>>, vector<1x1x32xf32>
    %256 = vector.shape_cast %255 : vector<1x1x32xf32> to vector<1x32xf32>
    %257 = vector.broadcast %256 : vector<1x32xf32> to vector<8x32xf32>
    %258 = arith.addf %254, %257 : vector<8x32xf32>
    %259 = arith.addf %202, %258 : vector<8x32xf32>
    %c0_181 = arith.constant 0 : index
    %c0_182 = arith.constant 0 : index
    %c0_183 = arith.constant 0 : index
    %260 = vector.load %arg16[%c0_181, %c0_182, %c0_183] : memref<1x1x32xf32, #tpu.memory_space<vmem>>, vector<1x1x32xf32>
    %261 = vector.shape_cast %260 : vector<1x1x32xf32> to vector<1x32xf32>
    %c0_184 = arith.constant 0 : index
    %c0_185 = arith.constant 0 : index
    %c0_186 = arith.constant 0 : index
    %262 = vector.load %arg17[%c0_184, %c0_185, %c0_186] : memref<1x1x32xf32, #tpu.memory_space<vmem>>, vector<1x1x32xf32>
    %263 = vector.shape_cast %262 : vector<1x1x32xf32> to vector<1x32xf32>
    %cst_187 = arith.constant dense<0.000000e+00> : vector<8xf32>
    %264 = vector.multi_reduction <add>, %259, %cst_187 [1] : vector<8x32xf32> to vector<8xf32>
    %265 = vector.shape_cast %264 : vector<8xf32> to vector<8x1xf32>
    %cst_188 = arith.constant 3.200000e+01 : f32
    %266 = vector.broadcast %cst_188 : f32 to vector<8x1xf32>
    %267 = arith.divf %265, %266 : vector<8x1xf32>
    %268 = vector.broadcast %267 : vector<8x1xf32> to vector<8x32xf32>
    %269 = arith.subf %259, %268 : vector<8x32xf32>
    %270 = arith.mulf %269, %269 : vector<8x32xf32>
    %cst_189 = arith.constant dense<0.000000e+00> : vector<8xf32>
    %271 = vector.multi_reduction <add>, %270, %cst_189 [1] : vector<8x32xf32> to vector<8xf32>
    %272 = vector.shape_cast %271 : vector<8xf32> to vector<8x1xf32>
    %cst_190 = arith.constant 3.200000e+01 : f32
    %273 = vector.broadcast %cst_190 : f32 to vector<8x1xf32>
    %274 = arith.divf %272, %273 : vector<8x1xf32>
    %cst_191 = arith.constant 9.99999996E-13 : f32
    %275 = vector.broadcast %cst_191 : f32 to vector<8x1xf32>
    %276 = arith.addf %274, %275 : vector<8x1xf32>
    %277 = math.rsqrt %276 : vector<8x1xf32>
    %278 = vector.broadcast %277 : vector<8x1xf32> to vector<8x32xf32>
    %279 = arith.mulf %269, %278 : vector<8x32xf32>
    %280 = vector.broadcast %261 : vector<1x32xf32> to vector<8x32xf32>
    %281 = arith.mulf %279, %280 : vector<8x32xf32>
    %282 = vector.broadcast %263 : vector<1x32xf32> to vector<8x32xf32>
    %283 = arith.addf %281, %282 : vector<8x32xf32>
    %c0_192 = arith.constant 0 : index
    %c0_193 = arith.constant 0 : index
    %284 = vector.load %arg23[%c0_192, %c0_193] : memref<8x32xf32, #tpu.memory_space<vmem>>, vector<8x32xf32>
    tpu.vector_store %arg23[%c0_192, %c0_193], %283 {strides = array<i32>} : memref<8x32xf32, #tpu.memory_space<vmem>>, vector<8x32xf32>,
    %c1_i32 = arith.constant 1 : i32
    %285 = arith.cmpi eq, %arg1, %c1_i32 : i32
    %286 = arith.extui %285 : i1 to i32
    %c0_i32_194 = arith.constant 0 : i32
    %287 = arith.cmpi ne, %286, %c0_i32_194 : i32
    scf.if %287 {
      %288 = vector.extract_strided_slice %283 {offsets = [0, 0], sizes = [1, 32], strides = [1, 1]} : vector<8x32xf32> to vector<1x32xf32>
      %289 = arith.truncf %288 : vector<1x32xf32> to vector<1x32xbf16>
      %c0_195 = arith.constant 0 : index
      %c0_196 = arith.constant 0 : index
      %290 = vector.load %arg18[%c0_195, %c0_196] : memref<32x32xbf16, #tpu.memory_space<vmem>>, vector<32x32xbf16>
      %cst_197 = arith.constant dense<0.000000e+00> : vector<1x32xf32>
      %291 = tpu.matmul %289, %290, %cst_197 {dimension_numbers = #tpu.dot_dimension_numbers<[1], [0], [0], [1], [0, 0, 1, 1], [], []>} : vector<1x32xbf16>, vector<32x32xbf16>, vector<1x32xf32> -> vector<1x32xf32>
      %c0_198 = arith.constant 0 : index
      %c0_199 = arith.constant 0 : index
      %292 = vector.load %arg19[%c0_198, %c0_199] : memref<1x32xf32, #tpu.memory_space<vmem>>, vector<1x32xf32>
      %293 = arith.addf %291, %292 : vector<1x32xf32>
      %294 = math.tanh %293 : vector<1x32xf32>
      %295 = arith.truncf %294 : vector<1x32xf32> to vector<1x32xbf16>
      %c0_200 = arith.constant 0 : index
      %c0_201 = arith.constant 0 : index
      %296 = vector.load %arg20[%c0_200, %c0_201] : memref<32x2xbf16, #tpu.memory_space<vmem>>, vector<32x2xbf16>
      %cst_202 = arith.constant dense<0.000000e+00> : vector<1x2xf32>
      %297 = tpu.matmul %295, %296, %cst_202 {dimension_numbers = #tpu.dot_dimension_numbers<[1], [0], [0], [1], [0, 0, 1, 1], [], []>} : vector<1x32xbf16>, vector<32x2xbf16>, vector<1x2xf32> -> vector<1x2xf32>
      %c0_203 = arith.constant 0 : index
      %c0_204 = arith.constant 0 : index
      %298 = vector.load %arg21[%c0_203, %c0_204] : memref<1x2xf32, #tpu.memory_space<vmem>>, vector<1x2xf32>
      %299 = arith.addf %297, %298 : vector<1x2xf32>
      %c0_205 = arith.constant 0 : index
      %c0_206 = arith.constant 0 : index
      %c0_207 = arith.constant 0 : index
      %300 = vector.load %arg22[%c0_205, %c0_206, %c0_207] : memref<1x1x2xf32, #tpu.memory_space<vmem>>, vector<1x1x2xf32>
      %301 = vector.shape_cast %300 : vector<1x1x2xf32> to vector<1x2xf32>
      %302 = vector.shape_cast %299 : vector<1x2xf32> to vector<1x1x2xf32>
      tpu.vector_store %arg22[%c0_205, %c0_206, %c0_207], %302 {strides = array<i32>} : memref<1x1x2xf32, #tpu.memory_space<vmem>>, vector<1x1x2xf32>,
    } else {
    }
    return
  }
  func.func @transform_0(%arg0: i32, %arg1: i32) -> (i32, i32, i32) {
    %c0_i32 = arith.constant 0 : i32
    %c0_i32_0 = arith.constant 0 : i32
    %c0_i32_1 = arith.constant 0 : i32
    return %arg0, %c0_i32, %c0_i32_0 : i32, i32, i32
  }
  func.func @transform_1(%arg0: i32, %arg1: i32) -> (i32, i32, i32) {
    %c0_i32 = arith.constant 0 : i32
    %c0_i32_0 = arith.constant 0 : i32
    %c0_i32_1 = arith.constant 0 : i32
    return %arg0, %c0_i32, %c0_i32_0 : i32, i32, i32
  }
  func.func @transform_2(%arg0: i32, %arg1: i32) -> (i32, i32) {
    %c0_i32 = arith.constant 0 : i32
    %c0_i32_0 = arith.constant 0 : i32
    %c0_i32_1 = arith.constant 0 : i32
    return %c0_i32, %c0_i32_0 : i32, i32
  }
  func.func @transform_3(%arg0: i32, %arg1: i32) -> (i32, i32) {
    %c0_i32 = arith.constant 0 : i32
    %c0_i32_0 = arith.constant 0 : i32
    %c0_i32_1 = arith.constant 0 : i32
    return %c0_i32, %c0_i32_0 : i32, i32
  }
  func.func @transform_4(%arg0: i32, %arg1: i32) -> (i32, i32, i32, i32) {
    %c0_i32 = arith.constant 0 : i32
    %c0_i32_0 = arith.constant 0 : i32
    %c0_i32_1 = arith.constant 0 : i32
    %c0_i32_2 = arith.constant 0 : i32
    return %arg1, %c0_i32, %c0_i32_0, %c0_i32_1 : i32, i32, i32, i32
  }
  func.func @transform_5(%arg0: i32, %arg1: i32) -> (i32, i32, i32, i32) {
    %c0_i32 = arith.constant 0 : i32
    %c0_i32_0 = arith.constant 0 : i32
    %c0_i32_1 = arith.constant 0 : i32
    %c0_i32_2 = arith.constant 0 : i32
    return %arg1, %c0_i32, %c0_i32_0, %c0_i32_1 : i32, i32, i32, i32
  }
  func.func @transform_6(%arg0: i32, %arg1: i32) -> (i32, i32, i32, i32) {
    %c0_i32 = arith.constant 0 : i32
    %c0_i32_0 = arith.constant 0 : i32
    %c0_i32_1 = arith.constant 0 : i32
    %c0_i32_2 = arith.constant 0 : i32
    return %arg1, %c0_i32, %c0_i32_0, %c0_i32_1 : i32, i32, i32, i32
  }
  func.func @transform_7(%arg0: i32, %arg1: i32) -> (i32, i32, i32) {
    %c0_i32 = arith.constant 0 : i32
    %c0_i32_0 = arith.constant 0 : i32
    %c0_i32_1 = arith.constant 0 : i32
    return %arg1, %c0_i32, %c0_i32_0 : i32, i32, i32
  }
  func.func @transform_8(%arg0: i32, %arg1: i32) -> (i32, i32, i32) {
    %c0_i32 = arith.constant 0 : i32
    %c0_i32_0 = arith.constant 0 : i32
    %c0_i32_1 = arith.constant 0 : i32
    return %arg1, %c0_i32, %c0_i32_0 : i32, i32, i32
  }
  func.func @transform_9(%arg0: i32, %arg1: i32) -> (i32, i32, i32) {
    %c0_i32 = arith.constant 0 : i32
    %c0_i32_0 = arith.constant 0 : i32
    %c0_i32_1 = arith.constant 0 : i32
    return %arg1, %c0_i32, %c0_i32_0 : i32, i32, i32
  }
  func.func @transform_10(%arg0: i32, %arg1: i32) -> (i32, i32, i32) {
    %c0_i32 = arith.constant 0 : i32
    %c0_i32_0 = arith.constant 0 : i32
    %c0_i32_1 = arith.constant 0 : i32
    return %arg1, %c0_i32, %c0_i32_0 : i32, i32, i32
  }
  func.func @transform_11(%arg0: i32, %arg1: i32) -> (i32, i32, i32) {
    %c0_i32 = arith.constant 0 : i32
    %c0_i32_0 = arith.constant 0 : i32
    %c0_i32_1 = arith.constant 0 : i32
    return %arg1, %c0_i32, %c0_i32_0 : i32, i32, i32
  }
  func.func @transform_12(%arg0: i32, %arg1: i32) -> (i32, i32, i32) {
    %c0_i32 = arith.constant 0 : i32
    %c0_i32_0 = arith.constant 0 : i32
    %c0_i32_1 = arith.constant 0 : i32
    return %arg1, %c0_i32, %c0_i32_0 : i32, i32, i32
  }
  func.func @transform_13(%arg0: i32, %arg1: i32) -> (i32, i32, i32) {
    %c0_i32 = arith.constant 0 : i32
    %c0_i32_0 = arith.constant 0 : i32
    %c0_i32_1 = arith.constant 0 : i32
    return %arg1, %c0_i32, %c0_i32_0 : i32, i32, i32
  }
  func.func @transform_14(%arg0: i32, %arg1: i32) -> (i32, i32, i32) {
    %c0_i32 = arith.constant 0 : i32
    %c0_i32_0 = arith.constant 0 : i32
    %c0_i32_1 = arith.constant 0 : i32
    return %arg1, %c0_i32, %c0_i32_0 : i32, i32, i32
  }
  func.func @transform_15(%arg0: i32, %arg1: i32) -> (i32, i32, i32) {
    %c0_i32 = arith.constant 0 : i32
    %c0_i32_0 = arith.constant 0 : i32
    %c0_i32_1 = arith.constant 0 : i32
    return %arg1, %c0_i32, %c0_i32_0 : i32, i32, i32
  }
  func.func @transform_16(%arg0: i32, %arg1: i32) -> (i32, i32) {
    %c0_i32 = arith.constant 0 : i32
    %c0_i32_0 = arith.constant 0 : i32
    %c0_i32_1 = arith.constant 0 : i32
    return %c0_i32, %c0_i32_0 : i32, i32
  }
  func.func @transform_17(%arg0: i32, %arg1: i32) -> (i32, i32) {
    %c0_i32 = arith.constant 0 : i32
    %c0_i32_0 = arith.constant 0 : i32
    %c0_i32_1 = arith.constant 0 : i32
    return %c0_i32, %c0_i32_0 : i32, i32
  }
  func.func @transform_18(%arg0: i32, %arg1: i32) -> (i32, i32) {
    %c0_i32 = arith.constant 0 : i32
    %c0_i32_0 = arith.constant 0 : i32
    %c0_i32_1 = arith.constant 0 : i32
    return %c0_i32, %c0_i32_0 : i32, i32
  }
  func.func @transform_19(%arg0: i32, %arg1: i32) -> (i32, i32) {
    %c0_i32 = arith.constant 0 : i32
    %c0_i32_0 = arith.constant 0 : i32
    %c0_i32_1 = arith.constant 0 : i32
    return %c0_i32, %c0_i32_0 : i32, i32
  }
  func.func @transform_20(%arg0: i32, %arg1: i32) -> (i32, i32, i32) {
    %c0_i32 = arith.constant 0 : i32
    %c0_i32_0 = arith.constant 0 : i32
    %c0_i32_1 = arith.constant 0 : i32
    return %arg0, %c0_i32, %c0_i32_0 : i32, i32, i32
  }
}

</mosaic_0001>

<llo_original>
// kernel: model_forward.1
$region0: #{model_forward.1}
  #allocation0 [shape = 'u32[]', space=smem, size = 0x4, offset = 0x4, fixed_abs, tag = 'smem constant byte address 0x4 - core index']
  #allocation1 [shape = 'u32[144,128]{1,0:T(1,128)}', space=vmem, size = 0x12000, scoped, tag = 'internal scratch']
  #allocation2 [shape = 'f32[8,32]{1,0:T(8,128)}', space=vmem, size = 0x1000, scoped, tag = 'scratch operand']
  %s0 = inlined_call_operand.vmem [shape: f32[2,8,32], index: 0, kind: input, shape index: {}]
  %s1 = inlined_call_operand.vmem [shape: f32[2,1,8], index: 1, kind: input, shape index: {}]
  %s2 = inlined_call_operand.vmem [shape: f32[1,32], index: 2, kind: input, shape index: {}]
  %s3 = inlined_call_operand.vmem [shape: f32[1,32], index: 3, kind: input, shape index: {}]
  %s4 = inlined_call_operand.vmem [shape: bf16[2,12,32,8], index: 4, kind: input, shape index: {}]
  %s5 = inlined_call_operand.vmem [shape: f32[2,12,1,8], index: 5, kind: input, shape index: {}]
  %s6 = inlined_call_operand.vmem [shape: bf16[2,4,8,32], index: 6, kind: input, shape index: {}]
  %s7 = inlined_call_operand.vmem [shape: f32[2,1,32], index: 7, kind: input, shape index: {}]
  %s8 = inlined_call_operand.vmem [shape: f32[2,1,32], index: 8, kind: input, shape index: {}]
  %s9 = inlined_call_operand.vmem [shape: f32[2,1,32], index: 9, kind: input, shape index: {}]
  %s10 = inlined_call_operand.vmem [shape: bf16[2,32,64], index: 10, kind: input, shape index: {}]
  %s11 = inlined_call_operand.vmem [shape: f32[2,1,64], index: 11, kind: input, shape index: {}]
  %s12 = inlined_call_operand.vmem [shape: bf16[2,64,32], index: 12, kind: input, shape index: {}]
  %s13 = inlined_call_operand.vmem [shape: f32[2,1,32], index: 13, kind: input, shape index: {}]
  %s14 = inlined_call_operand.vmem [shape: f32[2,1,32], index: 14, kind: input, shape index: {}]
  %s15 = inlined_call_operand.vmem [shape: f32[2,1,32], index: 15, kind: input, shape index: {}]
  %s16 = inlined_call_operand.vmem [shape: bf16[32,32], index: 16, kind: input, shape index: {}]
  %s17 = inlined_call_operand.vmem [shape: f32[1,32], index: 17, kind: input, shape index: {}]
  %s18 = inlined_call_operand.vmem [shape: bf16[32,2], index: 18, kind: input, shape index: {}]
  %s19 = inlined_call_operand.vmem [shape: f32[1,2], index: 19, kind: input, shape index: {}]
  %s20 = inlined_call_operand.hbm [shape: f32[2,1,2], index: 20, kind: output, shape index: {}]
  %s21 = sld [smem:[#allocation0]]
  $region121: #{model_forward.1} parent=0
    _
  %s23 = ssub.s32 1, %s21
  %s24 = scalar_select 0, %s23, %s21
  $region1: #{model_forward.1} parent=0
    #allocation3 [shape = 'u8[1024]{0}', space=vmem, size = 0x400, scoped, tag = 'output window, operand 0']
    #allocation4 [shape = 's32[2]{0}', space=sflag, size = 0x8, scoped, tag = 'scoped memory for model_forward.1']
    %25 = vsyncpa [#allocation4], 0
    %s26 = scalar_lea.sflag [#allocation4], 1
    %27 = vsyncpa %s26, 0
    loop: start=0, step=1, limit=6
    $region2: #{model_forward.1} parent=1 // loop_pre_header
      _
    $region3: #{model_forward.1} parent=1 // loop_header
      %s29 = sphi 0, %s33
      %p30 = scmp.ge.s32.totalorder %s29, 6
      %s36 = sphi 0, %s48
      %s37 = sphi 0, %s44
      %s38 = sphi 0, %s36
      %s39 = sphi 0, %s37
      %s40 = sphi 0, %s38
      %s41 = sphi 0, %s39
      %s51 = sphi 0, %s53
      %s54 = sphi 0, %s51
      %s55 = sphi 0, %s54
      %s71 = sphi 0, %s55
      %s77 = sphi 0, %s79
      %s80 = sphi 0, %s77
      %s81 = sphi 0, %s80
      %s97 = sphi 0, %s81
      %s101 = sphi 0, %s101
      %s103 = sphi 0, %s101
      %s104 = sphi 0, %s103
      %s118 = sphi 0, %s104
      %s122 = sphi 0, %s122
      %s124 = sphi 0, %s122
      %s125 = sphi 0, %s124
      %s139 = sphi 0, %s125
      %s145 = sphi 0, %s147
      %s148 = sphi 0, %s145
      %s149 = sphi 0, %s148
      %s165 = sphi 0, %s149
      %s171 = sphi 0, %s173
      %s174 = sphi 0, %s171
      %s175 = sphi 0, %s174
      %s191 = sphi 0, %s175
      %s197 = sphi 0, %s199
      %s200 = sphi 0, %s197
      %s201 = sphi 0, %s200
      %s217 = sphi 0, %s201
      %s223 = sphi 0, %s225
      %s226 = sphi 0, %s223
      %s227 = sphi 0, %s226
      %s243 = sphi 0, %s227
      %s249 = sphi 0, %s251
      %s252 = sphi 0, %s249
      %s253 = sphi 0, %s252
      %s269 = sphi 0, %s253
      %s275 = sphi 0, %s277
      %s278 = sphi 0, %s275
      %s279 = sphi 0, %s278
      %s295 = sphi 0, %s279
      %s301 = sphi 0, %s303
      %s304 = sphi 0, %s301
      %s305 = sphi 0, %s304
      %s321 = sphi 0, %s305
      %s327 = sphi 0, %s329
      %s330 = sphi 0, %s327
      %s331 = sphi 0, %s330
      %s347 = sphi 0, %s331
      %s353 = sphi 0, %s355
      %s356 = sphi 0, %s353
      %s357 = sphi 0, %s356
      %s373 = sphi 0, %s357
      %s379 = sphi 0, %s381
      %s382 = sphi 0, %s379
      %s383 = sphi 0, %s382
      %s399 = sphi 0, %s383
      %s405 = sphi 0, %s407
      %s408 = sphi 0, %s405
      %s409 = sphi 0, %s408
      %s425 = sphi 0, %s409
      %s431 = sphi 0, %s433
      %s434 = sphi 0, %s431
      %s435 = sphi 0, %s434
      %s451 = sphi 0, %s435
      %s455 = sphi 0, %s455
      %s457 = sphi 0, %s455
      %s458 = sphi 0, %s457
      %s472 = sphi 0, %s458
      %s476 = sphi 0, %s476
      %s478 = sphi 0, %s476
      %s479 = sphi 0, %s478
      %s493 = sphi 0, %s479
      %s497 = sphi 0, %s497
      %s499 = sphi 0, %s497
      %s500 = sphi 0, %s499
      %s514 = sphi 0, %s500
      %s518 = sphi 0, %s518
      %s520 = sphi 0, %s518
      %s521 = sphi 0, %s520
      %s535 = sphi 0, %s521
      %s541 = sphi 0, %s543
      %s544 = sphi 0, %s541
      %s545 = sphi 0, %s544
      %s561 = sphi 0, %s545
    $region4: #{model_forward.1} parent=1 // loop_header_branch
      %32 = sbr.rel (%p30) target = $region8
    $region5: #{model_forward.1} parent=1 // loop_body
      %s34 = ssub.s32 %s29, 1
      %s35 = ssub.s32 %s29, 2
      %s42 = sadd.s32 1, %s37
      %p43 = scmp.ge.s32.totalorder %s42, 2
      %s44 = scalar_select %p43, 0, %s42
      %s45 = sadd.s32 1, %s36
      %s46 = scalar_select %p43, %s45, %s36
      %p47 = scmp.ge.s32.totalorder %s46, 2
      %s48 = scalar_select %p47, 0, %s46
      %s49 = ssub.s32 %s36, %s48
      %p50 = scmp.eq.s32.totalorder %s49, 0
      %s52 = sadd.s32 %s51, 1
      %s53 = scalar_select %p50, %s51, %s52
      %p56 = pneg %p50
      %p57 = scmp.eq.s32.totalorder %s29, 3
      %p58 = por %p56, %p57
      %p59 = scmp.ne.s32.totalorder %s51, %s54
      %p60 = scmp.eq.s32.totalorder %s29, 0
      %p61 = por %p59, %p60
      %p62 = scmp.ne.s32.totalorder %s51, %s54
      %p63 = scmp.eq.s32.totalorder %s34, 3
      %p64 = por %p62, %p63
      %p65 = scmp.ne.s32.totalorder %s54, %s55
      %p66 = scmp.eq.s32.totalorder %s34, 0
      %p67 = por %p65, %p66
      %p68 = scmp.ne.s32.totalorder %s54, %s55
      %p69 = scmp.eq.s32.totalorder %s35, 3
      %p70 = por %p68, %p69
      %p72 = scmp.ne.s32.totalorder %s55, %s71
      %p73 = scmp.eq.s32.totalorder %s35, 0
      %p74 = por %p72, %p73
      %s75 = ssub.s32 %s36, %s48
      %p76 = scmp.eq.s32.totalorder %s75, 0
      %s78 = sadd.s32 %s77, 1
      %s79 = scalar_select %p76, %s77, %s78
      %p82 = pneg %p76
      %p83 = scmp.eq.s32.totalorder %s29, 3
      %p84 = por %p82, %p83
      %p85 = scmp.ne.s32.totalorder %s77, %s80
      %p86 = scmp.eq.s32.totalorder %s29, 0
      %p87 = por %p85, %p86
      %p88 = scmp.ne.s32.totalorder %s77, %s80
      %p89 = scmp.eq.s32.totalorder %s34, 3
      %p90 = por %p88, %p89
      %p91 = scmp.ne.s32.totalorder %s80, %s81
      %p92 = scmp.eq.s32.totalorder %s34, 0
      %p93 = por %p91, %p92
      %p94 = scmp.ne.s32.totalorder %s80, %s81
      %p95 = scmp.eq.s32.totalorder %s35, 3
      %p96 = por %p94, %p95
      %p98 = scmp.ne.s32.totalorder %s81, %s97
      %p99 = scmp.eq.s32.totalorder %s35, 0
      %p100 = por %p98, %p99
      %s102 = sadd.s32 %s101, 1
      %p105 = scmp.eq.s32.totalorder %s29, 3
      %p106 = scmp.ne.s32.totalorder %s101, %s103
      %p107 = scmp.eq.s32.totalorder %s29, 0
      %p108 = por %p106, %p107
      %p109 = scmp.ne.s32.totalorder %s101, %s103
      %p110 = scmp.eq.s32.totalorder %s34, 3
      %p111 = por %p109, %p110
      %p112 = scmp.ne.s32.totalorder %s103, %s104
      %p113 = scmp.eq.s32.totalorder %s34, 0
      %p114 = por %p112, %p113
      %p115 = scmp.ne.s32.totalorder %s103, %s104
      %p116 = scmp.eq.s32.totalorder %s35, 3
      %p117 = por %p115, %p116
      %p119 = scmp.ne.s32.totalorder %s104, %s118
      %p120 = scmp.eq.s32.totalorder %s35, 0
      %p121 = por %p119, %p120
      %s123 = sadd.s32 %s122, 1
      %p126 = scmp.eq.s32.totalorder %s29, 3
      %p127 = scmp.ne.s32.totalorder %s122, %s124
      %p128 = scmp.eq.s32.totalorder %s29, 0
      %p129 = por %p127, %p128
      %p130 = scmp.ne.s32.totalorder %s122, %s124
      %p131 = scmp.eq.s32.totalorder %s34, 3
      %p132 = por %p130, %p131
      %p133 = scmp.ne.s32.totalorder %s124, %s125
      %p134 = scmp.eq.s32.totalorder %s34, 0
      %p135 = por %p133, %p134
      %p136 = scmp.ne.s32.totalorder %s124, %s125
      %p137 = scmp.eq.s32.totalorder %s35, 3
      %p138 = por %p136, %p137
      %p140 = scmp.ne.s32.totalorder %s125, %s139
      %p141 = scmp.eq.s32.totalorder %s35, 0
      %p142 = por %p140, %p141
      %s143 = ssub.s32 %s37, %s44
      %p144 = scmp.eq.s32.totalorder %s143, 0
      %s146 = sadd.s32 %s145, 1
      %s147 = scalar_select %p144, %s145, %s146
      %p150 = pneg %p144
      %p151 = scmp.eq.s32.totalorder %s29, 3
      %p152 = por %p150, %p151
      %p153 = scmp.ne.s32.totalorder %s145, %s148
      %p154 = scmp.eq.s32.totalorder %s29, 0
      %p155 = por %p153, %p154
      %p156 = scmp.ne.s32.totalorder %s145, %s148
      %p157 = scmp.eq.s32.totalorder %s34, 3
      %p158 = por %p156, %p157
      %p159 = scmp.ne.s32.totalorder %s148, %s149
      %p160 = scmp.eq.s32.totalorder %s34, 0
      %p161 = por %p159, %p160
      %p162 = scmp.ne.s32.totalorder %s148, %s149
      %p163 = scmp.eq.s32.totalorder %s35, 3
      %p164 = por %p162, %p163
      %p166 = scmp.ne.s32.totalorder %s149, %s165
      %p167 = scmp.eq.s32.totalorder %s35, 0
      %p168 = por %p166, %p167
      %s169 = ssub.s32 %s37, %s44
      %p170 = scmp.eq.s32.totalorder %s169, 0
      %s172 = sadd.s32 %s171, 1
      %s173 = scalar_select %p170, %s171, %s172
      %p176 = pneg %p170
      %p177 = scmp.eq.s32.totalorder %s29, 3
      %p178 = por %p176, %p177
      %p179 = scmp.ne.s32.totalorder %s171, %s174
      %p180 = scmp.eq.s32.totalorder %s29, 0
      %p181 = por %p179, %p180
      %p182 = scmp.ne.s32.totalorder %s171, %s174
      %p183 = scmp.eq.s32.totalorder %s34, 3
      %p184 = por %p182, %p183
      %p185 = scmp.ne.s32.totalorder %s174, %s175
      %p186 = scmp.eq.s32.totalorder %s34, 0
      %p187 = por %p185, %p186
      %p188 = scmp.ne.s32.totalorder %s174, %s175
      %p189 = scmp.eq.s32.totalorder %s35, 3
      %p190 = por %p188, %p189
      %p192 = scmp.ne.s32.totalorder %s175, %s191
      %p193 = scmp.eq.s32.totalorder %s35, 0
      %p194 = por %p192, %p193
      %s195 = ssub.s32 %s37, %s44
      %p196 = scmp.eq.s32.totalorder %s195, 0
      %s198 = sadd.s32 %s197, 1
      %s199 = scalar_select %p196, %s197, %s198
      %p202 = pneg %p196
      %p203 = scmp.eq.s32.totalorder %s29, 3
      %p204 = por %p202, %p203
      %p205 = scmp.ne.s32.totalorder %s197, %s200
      %p206 = scmp.eq.s32.totalorder %s29, 0
      %p207 = por %p205, %p206
      %p208 = scmp.ne.s32.totalorder %s197, %s200
      %p209 = scmp.eq.s32.totalorder %s34, 3
      %p210 = por %p208, %p209
      %p211 = scmp.ne.s32.totalorder %s200, %s201
      %p212 = scmp.eq.s32.totalorder %s34, 0
      %p213 = por %p211, %p212
      %p214 = scmp.ne.s32.totalorder %s200, %s201
      %p215 = scmp.eq.s32.totalorder %s35, 3
      %p216 = por %p214, %p215
      %p218 = scmp.ne.s32.totalorder %s201, %s217
      %p219 = scmp.eq.s32.totalorder %s35, 0
      %p220 = por %p218, %p219
      %s221 = ssub.s32 %s37, %s44
      %p222 = scmp.eq.s32.totalorder %s221, 0
      %s224 = sadd.s32 %s223, 1
      %s225 = scalar_select %p222, %s223, %s224
      %p228 = pneg %p222
      %p229 = scmp.eq.s32.totalorder %s29, 3
      %p230 = por %p228, %p229
      %p231 = scmp.ne.s32.totalorder %s223, %s226
      %p232 = scmp.eq.s32.totalorder %s29, 0
      %p233 = por %p231, %p232
      %p234 = scmp.ne.s32.totalorder %s223, %s226
      %p235 = scmp.eq.s32.totalorder %s34, 3
      %p236 = por %p234, %p235
      %p237 = scmp.ne.s32.totalorder %s226, %s227
      %p238 = scmp.eq.s32.totalorder %s34, 0
      %p239 = por %p237, %p238
      %p240 = scmp.ne.s32.totalorder %s226, %s227
      %p241 = scmp.eq.s32.totalorder %s35, 3
      %p242 = por %p240, %p241
      %p244 = scmp.ne.s32.totalorder %s227, %s243
      %p245 = scmp.eq.s32.totalorder %s35, 0
      %p246 = por %p244, %p245
      %s247 = ssub.s32 %s37, %s44
      %p248 = scmp.eq.s32.totalorder %s247, 0
      %s250 = sadd.s32 %s249, 1
      %s251 = scalar_select %p248, %s249, %s250
      %p254 = pneg %p248
      %p255 = scmp.eq.s32.totalorder %s29, 3
      %p256 = por %p254, %p255
      %p257 = scmp.ne.s32.totalorder %s249, %s252
      %p258 = scmp.eq.s32.totalorder %s29, 0
      %p259 = por %p257, %p258
      %p260 = scmp.ne.s32.totalorder %s249, %s252
      %p261 = scmp.eq.s32.totalorder %s34, 3
      %p262 = por %p260, %p261
      %p263 = scmp.ne.s32.totalorder %s252, %s253
      %p264 = scmp.eq.s32.totalorder %s34, 0
      %p265 = por %p263, %p264
      %p266 = scmp.ne.s32.totalorder %s252, %s253
      %p267 = scmp.eq.s32.totalorder %s35, 3
      %p268 = por %p266, %p267
      %p270 = scmp.ne.s32.totalorder %s253, %s269
      %p271 = scmp.eq.s32.totalorder %s35, 0
      %p272 = por %p270, %p271
      %s273 = ssub.s32 %s37, %s44
      %p274 = scmp.eq.s32.totalorder %s273, 0
      %s276 = sadd.s32 %s275, 1
      %s277 = scalar_select %p274, %s275, %s276
      %p280 = pneg %p274
      %p281 = scmp.eq.s32.totalorder %s29, 3
      %p282 = por %p280, %p281
      %p283 = scmp.ne.s32.totalorder %s275, %s278
      %p284 = scmp.eq.s32.totalorder %s29, 0
      %p285 = por %p283, %p284
      %p286 = scmp.ne.s32.totalorder %s275, %s278
      %p287 = scmp.eq.s32.totalorder %s34, 3
      %p288 = por %p286, %p287
      %p289 = scmp.ne.s32.totalorder %s278, %s279
      %p290 = scmp.eq.s32.totalorder %s34, 0
      %p291 = por %p289, %p290
      %p292 = scmp.ne.s32.totalorder %s278, %s279
      %p293 = scmp.eq.s32.totalorder %s35, 3
      %p294 = por %p292, %p293
      %p296 = scmp.ne.s32.totalorder %s279, %s295
      %p297 = scmp.eq.s32.totalorder %s35, 0
      %p298 = por %p296, %p297
      %s299 = ssub.s32 %s37, %s44
      %p300 = scmp.eq.s32.totalorder %s299, 0
      %s302 = sadd.s32 %s301, 1
      %s303 = scalar_select %p300, %s301, %s302
      %p306 = pneg %p300
      %p307 = scmp.eq.s32.totalorder %s29, 3
      %p308 = por %p306, %p307
      %p309 = scmp.ne.s32.totalorder %s301, %s304
      %p310 = scmp.eq.s32.totalorder %s29, 0
      %p311 = por %p309, %p310
      %p312 = scmp.ne.s32.totalorder %s301, %s304
      %p313 = scmp.eq.s32.totalorder %s34, 3
      %p314 = por %p312, %p313
      %p315 = scmp.ne.s32.totalorder %s304, %s305
      %p316 = scmp.eq.s32.totalorder %s34, 0
      %p317 = por %p315, %p316
      %p318 = scmp.ne.s32.totalorder %s304, %s305
      %p319 = scmp.eq.s32.totalorder %s35, 3
      %p320 = por %p318, %p319
      %p322 = scmp.ne.s32.totalorder %s305, %s321
      %p323 = scmp.eq.s32.totalorder %s35, 0
      %p324 = por %p322, %p323
      %s325 = ssub.s32 %s37, %s44
      %p326 = scmp.eq.s32.totalorder %s325, 0
      %s328 = sadd.s32 %s327, 1
      %s329 = scalar_select %p326, %s327, %s328
      %p332 = pneg %p326
      %p333 = scmp.eq.s32.totalorder %s29, 3
      %p334 = por %p332, %p333
      %p335 = scmp.ne.s32.totalorder %s327, %s330
      %p336 = scmp.eq.s32.totalorder %s29, 0
      %p337 = por %p335, %p336
      %p338 = scmp.ne.s32.totalorder %s327, %s330
      %p339 = scmp.eq.s32.totalorder %s34, 3
      %p340 = por %p338, %p339
      %p341 = scmp.ne.s32.totalorder %s330, %s331
      %p342 = scmp.eq.s32.totalorder %s34, 0
      %p343 = por %p341, %p342
      %p344 = scmp.ne.s32.totalorder %s330, %s331
      %p345 = scmp.eq.s32.totalorder %s35, 3
      %p346 = por %p344, %p345
      %p348 = scmp.ne.s32.totalorder %s331, %s347
      %p349 = scmp.eq.s32.totalorder %s35, 0
      %p350 = por %p348, %p349
      %s351 = ssub.s32 %s37, %s44
      %p352 = scmp.eq.s32.totalorder %s351, 0
      %s354 = sadd.s32 %s353, 1
      %s355 = scalar_select %p352, %s353, %s354
      %p358 = pneg %p352
      %p359 = scmp.eq.s32.totalorder %s29, 3
      %p360 = por %p358, %p359
      %p361 = scmp.ne.s32.totalorder %s353, %s356
      %p362 = scmp.eq.s32.totalorder %s29, 0
      %p363 = por %p361, %p362
      %p364 = scmp.ne.s32.totalorder %s353, %s356
      %p365 = scmp.eq.s32.totalorder %s34, 3
      %p366 = por %p364, %p365
      %p367 = scmp.ne.s32.totalorder %s356, %s357
      %p368 = scmp.eq.s32.totalorder %s34, 0
      %p369 = por %p367, %p368
      %p370 = scmp.ne.s32.totalorder %s356, %s357
      %p371 = scmp.eq.s32.totalorder %s35, 3
      %p372 = por %p370, %p371
      %p374 = scmp.ne.s32.totalorder %s357, %s373
      %p375 = scmp.eq.s32.totalorder %s35, 0
      %p376 = por %p374, %p375
      %s377 = ssub.s32 %s37, %s44
      %p378 = scmp.eq.s32.totalorder %s377, 0
      %s380 = sadd.s32 %s379, 1
      %s381 = scalar_select %p378, %s379, %s380
      %p384 = pneg %p378
      %p385 = scmp.eq.s32.totalorder %s29, 3
      %p386 = por %p384, %p385
      %p387 = scmp.ne.s32.totalorder %s379, %s382
      %p388 = scmp.eq.s32.totalorder %s29, 0
      %p389 = por %p387, %p388
      %p390 = scmp.ne.s32.totalorder %s379, %s382
      %p391 = scmp.eq.s32.totalorder %s34, 3
      %p392 = por %p390, %p391
      %p393 = scmp.ne.s32.totalorder %s382, %s383
      %p394 = scmp.eq.s32.totalorder %s34, 0
      %p395 = por %p393, %p394
      %p396 = scmp.ne.s32.totalorder %s382, %s383
      %p397 = scmp.eq.s32.totalorder %s35, 3
      %p398 = por %p396, %p397
      %p400 = scmp.ne.s32.totalorder %s383, %s399
      %p401 = scmp.eq.s32.totalorder %s35, 0
      %p402 = por %p400, %p401
      %s403 = ssub.s32 %s37, %s44
      %p404 = scmp.eq.s32.totalorder %s403, 0
      %s406 = sadd.s32 %s405, 1
      %s407 = scalar_select %p404, %s405, %s406
      %p410 = pneg %p404
      %p411 = scmp.eq.s32.totalorder %s29, 3
      %p412 = por %p410, %p411
      %p413 = scmp.ne.s32.totalorder %s405, %s408
      %p414 = scmp.eq.s32.totalorder %s29, 0
      %p415 = por %p413, %p414
      %p416 = scmp.ne.s32.totalorder %s405, %s408
      %p417 = scmp.eq.s32.totalorder %s34, 3
      %p418 = por %p416, %p417
      %p419 = scmp.ne.s32.totalorder %s408, %s409
      %p420 = scmp.eq.s32.totalorder %s34, 0
      %p421 = por %p419, %p420
      %p422 = scmp.ne.s32.totalorder %s408, %s409
      %p423 = scmp.eq.s32.totalorder %s35, 3
      %p424 = por %p422, %p423
      %p426 = scmp.ne.s32.totalorder %s409, %s425
      %p427 = scmp.eq.s32.totalorder %s35, 0
      %p428 = por %p426, %p427
      %s429 = ssub.s32 %s37, %s44
      %p430 = scmp.eq.s32.totalorder %s429, 0
      %s432 = sadd.s32 %s431, 1
      %s433 = scalar_select %p430, %s431, %s432
      %p436 = pneg %p430
      %p437 = scmp.eq.s32.totalorder %s29, 3
      %p438 = por %p436, %p437
      %p439 = scmp.ne.s32.totalorder %s431, %s434
      %p440 = scmp.eq.s32.totalorder %s29, 0
      %p441 = por %p439, %p440
      %p442 = scmp.ne.s32.totalorder %s431, %s434
      %p443 = scmp.eq.s32.totalorder %s34, 3
      %p444 = por %p442, %p443
      %p445 = scmp.ne.s32.totalorder %s434, %s435
      %p446 = scmp.eq.s32.totalorder %s34, 0
      %p447 = por %p445, %p446
      %p448 = scmp.ne.s32.totalorder %s434, %s435
      %p449 = scmp.eq.s32.totalorder %s35, 3
      %p450 = por %p448, %p449
      %p452 = scmp.ne.s32.totalorder %s435, %s451
      %p453 = scmp.eq.s32.totalorder %s35, 0
      %p454 = por %p452, %p453
      %s456 = sadd.s32 %s455, 1
      %p459 = scmp.eq.s32.totalorder %s29, 3
      %p460 = scmp.ne.s32.totalorder %s455, %s457
      %p461 = scmp.eq.s32.totalorder %s29, 0
      %p462 = por %p460, %p461
      %p463 = scmp.ne.s32.totalorder %s455, %s457
      %p464 = scmp.eq.s32.totalorder %s34, 3
      %p465 = por %p463, %p464
      %p466 = scmp.ne.s32.totalorder %s457, %s458
      %p467 = scmp.eq.s32.totalorder %s34, 0
      %p468 = por %p466, %p467
      %p469 = scmp.ne.s32.totalorder %s457, %s458
      %p470 = scmp.eq.s32.totalorder %s35, 3
      %p471 = por %p469, %p470
      %p473 = scmp.ne.s32.totalorder %s458, %s472
      %p474 = scmp.eq.s32.totalorder %s35, 0
      %p475 = por %p473, %p474
      %s477 = sadd.s32 %s476, 1
      %p480 = scmp.eq.s32.totalorder %s29, 3
      %p481 = scmp.ne.s32.totalorder %s476, %s478
      %p482 = scmp.eq.s32.totalorder %s29, 0
      %p483 = por %p481, %p482
      %p484 = scmp.ne.s32.totalorder %s476, %s478
      %p485 = scmp.eq.s32.totalorder %s34, 3
      %p486 = por %p484, %p485
      %p487 = scmp.ne.s32.totalorder %s478, %s479
      %p488 = scmp.eq.s32.totalorder %s34, 0
      %p489 = por %p487, %p488
      %p490 = scmp.ne.s32.totalorder %s478, %s479
      %p491 = scmp.eq.s32.totalorder %s35, 3
      %p492 = por %p490, %p491
      %p494 = scmp.ne.s32.totalorder %s479, %s493
      %p495 = scmp.eq.s32.totalorder %s35, 0
      %p496 = por %p494, %p495
      %s498 = sadd.s32 %s497, 1
      %p501 = scmp.eq.s32.totalorder %s29, 3
      %p502 = scmp.ne.s32.totalorder %s497, %s499
      %p503 = scmp.eq.s32.totalorder %s29, 0
      %p504 = por %p502, %p503
      %p505 = scmp.ne.s32.totalorder %s497, %s499
      %p506 = scmp.eq.s32.totalorder %s34, 3
      %p507 = por %p505, %p506
      %p508 = scmp.ne.s32.totalorder %s499, %s500
      %p509 = scmp.eq.s32.totalorder %s34, 0
      %p510 = por %p508, %p509
      %p511 = scmp.ne.s32.totalorder %s499, %s500
      %p512 = scmp.eq.s32.totalorder %s35, 3
      %p513 = por %p511, %p512
      %p515 = scmp.ne.s32.totalorder %s500, %s514
      %p516 = scmp.eq.s32.totalorder %s35, 0
      %p517 = por %p515, %p516
      %s519 = sadd.s32 %s518, 1
      %p522 = scmp.eq.s32.totalorder %s29, 3
      %p523 = scmp.ne.s32.totalorder %s518, %s520
      %p524 = scmp.eq.s32.totalorder %s29, 0
      %p525 = por %p523, %p524
      %p526 = scmp.ne.s32.totalorder %s518, %s520
      %p527 = scmp.eq.s32.totalorder %s34, 3
      %p528 = por %p526, %p527
      %p529 = scmp.ne.s32.totalorder %s520, %s521
      %p530 = scmp.eq.s32.totalorder %s34, 0
      %p531 = por %p529, %p530
      %p532 = scmp.ne.s32.totalorder %s520, %s521
      %p533 = scmp.eq.s32.totalorder %s35, 3
      %p534 = por %p532, %p533
      %p536 = scmp.ne.s32.totalorder %s521, %s535
      %p537 = scmp.eq.s32.totalorder %s35, 0
      %p538 = por %p536, %p537
      %s539 = ssub.s32 %s36, %s48
      %p540 = scmp.eq.s32.totalorder %s539, 0
      %s542 = sadd.s32 %s541, 1
      %s543 = scalar_select %p540, %s541, %s542
      %p546 = pneg %p540
      %p547 = scmp.eq.s32.totalorder %s29, 3
      %p548 = por %p546, %p547
      %p549 = scmp.ne.s32.totalorder %s541, %s544
      %p550 = scmp.eq.s32.totalorder %s29, 0
      %p551 = por %p549, %p550
      %p552 = scmp.ne.s32.totalorder %s541, %s544
      %p553 = scmp.eq.s32.totalorder %s34, 3
      %p554 = por %p552, %p553
      %p555 = scmp.ne.s32.totalorder %s544, %s545
      %p556 = scmp.eq.s32.totalorder %s34, 0
      %p557 = por %p555, %p556
      %p558 = scmp.ne.s32.totalorder %s544, %s545
      %p559 = scmp.eq.s32.totalorder %s35, 3
      %p560 = por %p558, %p559
      %p562 = scmp.ne.s32.totalorder %s545, %s561
      %p563 = scmp.eq.s32.totalorder %s35, 0
      %p564 = por %p562, %p563
      %p565 = scmp.le.s32.totalorder 1, %s29
      %p566 = scmp.lt.s32.totalorder %s29, 5
      %p567 = pnand %p565, %p566
      %p568 = pneg %p567
      // Predicated region
      $region9: #{model_forward.1} parent=5 // pred_check
        _
      $region10: #{model_forward.1} parent=5 // pred_check_branch
        %570 = sbr.rel (%p567) target = $region12
      $region11: #{model_forward.1} parent=5 // pred_region
        %s571 = ssub.s32 %s29, 1
        // Predicated region
        $region13: #{model_forward.1} parent=11 // pred_check
          %p572 = pneg %p114
        $region14: #{model_forward.1} parent=11 // pred_check_branch
          %574 = sbr.rel (%p572) target = $region16
        $region15: #{model_forward.1} parent=11 // pred_region
          _
        $region16: #{model_forward.1} parent=11 // pred_fallthru
          _
        // Predicated region
        $region17: #{model_forward.1} parent=11 // pred_check
          %p575 = pneg %p135
        $region18: #{model_forward.1} parent=11 // pred_check_branch
          %577 = sbr.rel (%p575) target = $region20
        $region19: #{model_forward.1} parent=11 // pred_region
          _
        $region20: #{model_forward.1} parent=11 // pred_fallthru
          _
        // Predicated region
        $region21: #{model_forward.1} parent=11 // pred_check
          %p578 = pneg %p468
        $region22: #{model_forward.1} parent=11 // pred_check_branch
          %580 = sbr.rel (%p578) target = $region24
        $region23: #{model_forward.1} parent=11 // pred_region
          _
        $region24: #{model_forward.1} parent=11 // pred_fallthru
          _
        // Predicated region
        $region25: #{model_forward.1} parent=11 // pred_check
          %p581 = pneg %p489
        $region26: #{model_forward.1} parent=11 // pred_check_branch
          %583 = sbr.rel (%p581) target = $region28
        $region27: #{model_forward.1} parent=11 // pred_region
          _
        $region28: #{model_forward.1} parent=11 // pred_fallthru
          _
        // Predicated region
        $region29: #{model_forward.1} parent=11 // pred_check
          %p584 = pneg %p510
        $region30: #{model_forward.1} parent=11 // pred_check_branch
          %586 = sbr.rel (%p584) target = $region32
        $region31: #{model_forward.1} parent=11 // pred_region
          _
        $region32: #{model_forward.1} parent=11 // pred_fallthru
          _
        // Predicated region
        $region33: #{model_forward.1} parent=11 // pred_check
          %p587 = pneg %p531
        $region34: #{model_forward.1} parent=11 // pred_check_branch
          %589 = sbr.rel (%p587) target = $region36
        $region35: #{model_forward.1} parent=11 // pred_region
          _
        $region36: #{model_forward.1} parent=11 // pred_fallthru
          _
      $region12: #{model_forward.1} parent=5 // pred_fallthru
        _
      %p590 = scmp.lt.s32.totalorder %s29, 4
      // Predicated region
      $region37: #{model_forward.1} parent=5 // pred_check
        %p591 = pneg %p590
      $region38: #{model_forward.1} parent=5 // pred_check_branch
        %593 = sbr.rel (%p591) target = $region40
      $region39: #{model_forward.1} parent=5 // pred_region
        // Predicated region
        $region41: #{model_forward.1} parent=39 // pred_check
          %p594 = pneg %p61
        $region42: #{model_forward.1} parent=39 // pred_check_branch
          %596 = sbr.rel (%p594) target = $region44
        $region43: #{model_forward.1} parent=39 // pred_region
          %p597 = scmp.lt.s32.totalorder %s36, 1
          %s598 = scalar_select %p597, %s36, 1
          %s599 = smul.addr %s598, 8
          %s600 = scalar_lea.vmem %s0, %s599
        $region44: #{model_forward.1} parent=39 // pred_fallthru
          _
        // Predicated region
        $region45: #{model_forward.1} parent=39 // pred_check
          %p601 = pneg %p87
        $region46: #{model_forward.1} parent=39 // pred_check_branch
          %603 = sbr.rel (%p601) target = $region48
        $region47: #{model_forward.1} parent=39 // pred_region
          %p604 = scmp.lt.s32.totalorder %s36, 1
          %s605 = scalar_select %p604, %s36, 1
          %s606 = scalar_lea.vmem %s1, %s605
        $region48: #{model_forward.1} parent=39 // pred_fallthru
          _
        // Predicated region
        $region49: #{model_forward.1} parent=39 // pred_check
          %p607 = pneg %p155
        $region50: #{model_forward.1} parent=39 // pred_check_branch
          %609 = sbr.rel (%p607) target = $region52
        $region51: #{model_forward.1} parent=39 // pred_region
          %p610 = scmp.lt.s32.totalorder %s37, 1
          %s611 = scalar_select %p610, %s37, 1
          %s612 = smul.addr %s611, 48
          %s613 = smul.addr %s612, 4
          %s614 = scalar_lea.vmem %s4, %s613
        $region52: #{model_forward.1} parent=39 // pred_fallthru
          _
        // Predicated region
        $region53: #{model_forward.1} parent=39 // pred_check
          %p615 = pneg %p181
        $region54: #{model_forward.1} parent=39 // pred_check_branch
          %617 = sbr.rel (%p615) target = $region56
        $region55: #{model_forward.1} parent=39 // pred_region
          %p618 = scmp.lt.s32.totalorder %s37, 1
          %s619 = scalar_select %p618, %s37, 1
          %s620 = smul.addr %s619, 12
          %s621 = scalar_lea.vmem %s5, %s620
        $region56: #{model_forward.1} parent=39 // pred_fallthru
          _
        // Predicated region
        $region57: #{model_forward.1} parent=39 // pred_check
          %p622 = pneg %p207
        $region58: #{model_forward.1} parent=39 // pred_check_branch
          %624 = sbr.rel (%p622) target = $region60
        $region59: #{model_forward.1} parent=39 // pred_region
          %p625 = scmp.lt.s32.totalorder %s37, 1
          %s626 = scalar_select %p625, %s37, 1
          %s627 = smul.addr %s626, 4
          %s628 = smul.addr %s627, 4
          %s629 = scalar_lea.vmem %s6, %s628
        $region60: #{model_forward.1} parent=39 // pred_fallthru
          _
        // Predicated region
        $region61: #{model_forward.1} parent=39 // pred_check
          %p630 = pneg %p233
        $region62: #{model_forward.1} parent=39 // pred_check_branch
          %632 = sbr.rel (%p630) target = $region64
        $region63: #{model_forward.1} parent=39 // pred_region
          %p633 = scmp.lt.s32.totalorder %s37, 1
          %s634 = scalar_select %p633, %s37, 1
          %s635 = scalar_lea.vmem %s7, %s634
        $region64: #{model_forward.1} parent=39 // pred_fallthru
          _
        // Predicated region
        $region65: #{model_forward.1} parent=39 // pred_check
          %p636 = pneg %p259
        $region66: #{model_forward.1} parent=39 // pred_check_branch
          %638 = sbr.rel (%p636) target = $region68
        $region67: #{model_forward.1} parent=39 // pred_region
          %p639 = scmp.lt.s32.totalorder %s37, 1
          %s640 = scalar_select %p639, %s37, 1
          %s641 = scalar_lea.vmem %s8, %s640
        $region68: #{model_forward.1} parent=39 // pred_fallthru
          _
        // Predicated region
        $region69: #{model_forward.1} parent=39 // pred_check
          %p642 = pneg %p285
        $region70: #{model_forward.1} parent=39 // pred_check_branch
          %644 = sbr.rel (%p642) target = $region72
        $region71: #{model_forward.1} parent=39 // pred_region
          %p645 = scmp.lt.s32.totalorder %s37, 1
          %s646 = scalar_select %p645, %s37, 1
          %s647 = scalar_lea.vmem %s9, %s646
        $region72: #{model_forward.1} parent=39 // pred_fallthru
          _
        // Predicated region
        $region73: #{model_forward.1} parent=39 // pred_check
          %p648 = pneg %p311
        $region74: #{model_forward.1} parent=39 // pred_check_branch
          %650 = sbr.rel (%p648) target = $region76
        $region75: #{model_forward.1} parent=39 // pred_region
          %p651 = scmp.lt.s32.totalorder %s37, 1
          %s652 = scalar_select %p651, %s37, 1
          %s653 = smul.addr %s652, 4
          %s654 = smul.addr %s653, 4
          %s655 = scalar_lea.vmem %s10, %s654
        $region76: #{model_forward.1} parent=39 // pred_fallthru
          _
        // Predicated region
        $region77: #{model_forward.1} parent=39 // pred_check
          %p656 = pneg %p337
        $region78: #{model_forward.1} parent=39 // pred_check_branch
          %658 = sbr.rel (%p656) target = $region80
        $region79: #{model_forward.1} parent=39 // pred_region
          %p659 = scmp.lt.s32.totalorder %s37, 1
          %s660 = scalar_select %p659, %s37, 1
          %s661 = scalar_lea.vmem %s11, %s660
        $region80: #{model_forward.1} parent=39 // pred_fallthru
          _
        // Predicated region
        $region81: #{model_forward.1} parent=39 // pred_check
          %p662 = pneg %p363
        $region82: #{model_forward.1} parent=39 // pred_check_branch
          %664 = sbr.rel (%p662) target = $region84
        $region83: #{model_forward.1} parent=39 // pred_region
          %p665 = scmp.lt.s32.totalorder %s37, 1
          %s666 = scalar_select %p665, %s37, 1
          %s667 = smul.addr %s666, 8
          %s668 = smul.addr %s667, 4
          %s669 = scalar_lea.vmem %s12, %s668
        $region84: #{model_forward.1} parent=39 // pred_fallthru
          _
        // Predicated region
        $region85: #{model_forward.1} parent=39 // pred_check
          %p670 = pneg %p389
        $region86: #{model_forward.1} parent=39 // pred_check_branch
          %672 = sbr.rel (%p670) target = $region88
        $region87: #{model_forward.1} parent=39 // pred_region
          %p673 = scmp.lt.s32.totalorder %s37, 1
          %s674 = scalar_select %p673, %s37, 1
          %s675 = scalar_lea.vmem %s13, %s674
        $region88: #{model_forward.1} parent=39 // pred_fallthru
          _
        // Predicated region
        $region89: #{model_forward.1} parent=39 // pred_check
          %p676 = pneg %p415
        $region90: #{model_forward.1} parent=39 // pred_check_branch
          %678 = sbr.rel (%p676) target = $region92
        $region91: #{model_forward.1} parent=39 // pred_region
          %p679 = scmp.lt.s32.totalorder %s37, 1
          %s680 = scalar_select %p679, %s37, 1
          %s681 = scalar_lea.vmem %s14, %s680
        $region92: #{model_forward.1} parent=39 // pred_fallthru
          _
        // Predicated region
        $region93: #{model_forward.1} parent=39 // pred_check
          %p682 = pneg %p441
        $region94: #{model_forward.1} parent=39 // pred_check_branch
          %684 = sbr.rel (%p682) target = $region96
        $region95: #{model_forward.1} parent=39 // pred_region
          %p685 = scmp.lt.s32.totalorder %s37, 1
          %s686 = scalar_select %p685, %s37, 1
          %s687 = scalar_lea.vmem %s15, %s686
        $region96: #{model_forward.1} parent=39 // pred_fallthru
          _
      $region40: #{model_forward.1} parent=5 // pred_fallthru
        _
      %p688 = scmp.le.s32.totalorder 1, %s29
      %p689 = scmp.lt.s32.totalorder %s29, 5
      %p690 = pnand %p688, %p689
      %p691 = pneg %p690
      // Predicated region
      $region97: #{model_forward.1} parent=5 // pred_check
        _
      $region98: #{model_forward.1} parent=5 // pred_check_branch
        %693 = sbr.rel (%p690) target = $region100
      $region99: #{model_forward.1} parent=5 // pred_region
        %s694 = ssub.s32 %s29, 1
        %p695 = scmp.lt.s32.totalorder %s38, 1
        %s696 = scalar_select %p695, %s38, 1
        %s697 = smul.addr %s696, 8
        %s698 = scalar_lea.vmem %s0, %s697
        %p699 = pneg %p67
        %p700 = pneg %p64
        %p701 = scmp.lt.s32.totalorder %s38, 1
        %s702 = scalar_select %p701, %s38, 1
        %s703 = scalar_lea.vmem %s1, %s702
        %p704 = pneg %p93
        %p705 = pneg %p90
        %p706 = pneg %p114
        %p707 = pneg %p111
        %p708 = pneg %p135
        %p709 = pneg %p132
        %p710 = scmp.lt.s32.totalorder %s39, 1
        %s711 = scalar_select %p710, %s39, 1
        %s712 = smul.addr %s711, 48
        %s713 = smul.addr %s712, 4
        %s714 = scalar_lea.vmem %s4, %s713
        %p715 = pneg %p161
        %p716 = pneg %p158
        %p717 = scmp.lt.s32.totalorder %s39, 1
        %s718 = scalar_select %p717, %s39, 1
        %s719 = smul.addr %s718, 12
        %s720 = scalar_lea.vmem %s5, %s719
        %p721 = pneg %p187
        %p722 = pneg %p184
        %p723 = scmp.lt.s32.totalorder %s39, 1
        %s724 = scalar_select %p723, %s39, 1
        %s725 = smul.addr %s724, 4
        %s726 = smul.addr %s725, 4
        %s727 = scalar_lea.vmem %s6, %s726
        %p728 = pneg %p213
        %p729 = pneg %p210
        %p730 = scmp.lt.s32.totalorder %s39, 1
        %s731 = scalar_select %p730, %s39, 1
        %s732 = scalar_lea.vmem %s7, %s731
        %p733 = pneg %p239
        %p734 = pneg %p236
        %p735 = scmp.lt.s32.totalorder %s39, 1
        %s736 = scalar_select %p735, %s39, 1
        %s737 = scalar_lea.vmem %s8, %s736
        %p738 = pneg %p265
        %p739 = pneg %p262
        %p740 = scmp.lt.s32.totalorder %s39, 1
        %s741 = scalar_select %p740, %s39, 1
        %s742 = scalar_lea.vmem %s9, %s741
        %p743 = pneg %p291
        %p744 = pneg %p288
        %p745 = scmp.lt.s32.totalorder %s39, 1
        %s746 = scalar_select %p745, %s39, 1
        %s747 = smul.addr %s746, 4
        %s748 = smul.addr %s747, 4
        %s749 = scalar_lea.vmem %s10, %s748
        %p750 = pneg %p317
        %p751 = pneg %p314
        %p752 = scmp.lt.s32.totalorder %s39, 1
        %s753 = scalar_select %p752, %s39, 1
        %s754 = scalar_lea.vmem %s11, %s753
        %p755 = pneg %p343
        %p756 = pneg %p340
        %p757 = scmp.lt.s32.totalorder %s39, 1
        %s758 = scalar_select %p757, %s39, 1
        %s759 = smul.addr %s758, 8
        %s760 = smul.addr %s759, 4
        %s761 = scalar_lea.vmem %s12, %s760
        %p762 = pneg %p369
        %p763 = pneg %p366
        %p764 = scmp.lt.s32.totalorder %s39, 1
        %s765 = scalar_select %p764, %s39, 1
        %s766 = scalar_lea.vmem %s13, %s765
        %p767 = pneg %p395
        %p768 = pneg %p392
        %p769 = scmp.lt.s32.totalorder %s39, 1
        %s770 = scalar_select %p769, %s39, 1
        %s771 = scalar_lea.vmem %s14, %s770
        %p772 = pneg %p421
        %p773 = pneg %p418
        %p774 = scmp.lt.s32.totalorder %s39, 1
        %s775 = scalar_select %p774, %s39, 1
        %s776 = scalar_lea.vmem %s15, %s775
        %p777 = pneg %p447
        %p778 = pneg %p444
        %p779 = pneg %p468
        %p780 = pneg %p465
        %p781 = pneg %p489
        %p782 = pneg %p486
        %p783 = pneg %p510
        %p784 = pneg %p507
        %p785 = pneg %p531
        %p786 = pneg %p528
        %p787 = pneg %p557
        %p788 = pneg %p554
        %s789 = sand.u32 %s544, 1
        %s790 = scalar_lea.sflag [#allocation4], %s789
        %s791 = sand.u32 %s544, 1
        %s792 = scalar_lea.vmem [#allocation3], %s791
        %p793 = scmp.lt.s32.totalorder %s38, 1
        %s794 = scalar_select %p793, %s38, 1
        %s795 = smul.addr %s794, 8
        %s796 = scalar_lea.vmem %s0, %s795
        %p797 = scmp.lt.s32.totalorder %s38, 1
        %s798 = scalar_select %p797, %s38, 1
        %s799 = scalar_lea.vmem %s1, %s798
        %p800 = scmp.lt.s32.totalorder %s39, 1
        %s801 = scalar_select %p800, %s39, 1
        %s802 = smul.addr %s801, 48
        %s803 = smul.addr %s802, 4
        %s804 = scalar_lea.vmem %s4, %s803
        %p805 = scmp.lt.s32.totalorder %s39, 1
        %s806 = scalar_select %p805, %s39, 1
        %s807 = smul.addr %s806, 12
        %s808 = scalar_lea.vmem %s5, %s807
        %p809 = scmp.lt.s32.totalorder %s39, 1
        %s810 = scalar_select %p809, %s39, 1
        %s811 = smul.addr %s810, 4
        %s812 = smul.addr %s811, 4
        %s813 = scalar_lea.vmem %s6, %s812
        %p814 = scmp.lt.s32.totalorder %s39, 1
        %s815 = scalar_select %p814, %s39, 1
        %s816 = scalar_lea.vmem %s7, %s815
        %p817 = scmp.lt.s32.totalorder %s39, 1
        %s818 = scalar_select %p817, %s39, 1
        %s819 = scalar_lea.vmem %s8, %s818
        %p820 = scmp.lt.s32.totalorder %s39, 1
        %s821 = scalar_select %p820, %s39, 1
        %s822 = scalar_lea.vmem %s9, %s821
        %p823 = scmp.lt.s32.totalorder %s39, 1
        %s824 = scalar_select %p823, %s39, 1
        %s825 = smul.addr %s824, 4
        %s826 = smul.addr %s825, 4
        %s827 = scalar_lea.vmem %s10, %s826
        %p828 = scmp.lt.s32.totalorder %s39, 1
        %s829 = scalar_select %p828, %s39, 1
        %s830 = scalar_lea.vmem %s11, %s829
        %p831 = scmp.lt.s32.totalorder %s39, 1
        %s832 = scalar_select %p831, %s39, 1
        %s833 = smul.addr %s832, 8
        %s834 = smul.addr %s833, 4
        %s835 = scalar_lea.vmem %s12, %s834
        %p836 = scmp.lt.s32.totalorder %s39, 1
        %s837 = scalar_select %p836, %s39, 1
        %s838 = scalar_lea.vmem %s13, %s837
        %p839 = scmp.lt.s32.totalorder %s39, 1
        %s840 = scalar_select %p839, %s39, 1
        %s841 = scalar_lea.vmem %s14, %s840
        %p842 = scmp.lt.s32.totalorder %s39, 1
        %s843 = scalar_select %p842, %s39, 1
        %s844 = scalar_lea.vmem %s15, %s843
        %p846 = scmp.eq.s32.totalorder %s39, 0
        // Predicated region
        $region101: #{model_forward.1} parent=99 // pred_check
          %p847 = pneg %p846
        $region102: #{model_forward.1} parent=99 // pred_check_branch
          %849 = sbr.rel (%p847) target = $region104
        $region103: #{model_forward.1} parent=99 // pred_region
          %v850 = vld [vmem:[%s796] sm:$0xff]
          %v851 = vld [vmem:[%s2] sm:$0x1]
          %v852 = vld [vmem:[%s3] sm:$0x1]
          %vm853 = vcmask 261120
          %v854 = vsel %vm853, %v850, 0.0
          %855 = vadd.xlane.f32.xlu0 %v854
          %v856 = vpop.xlane.xlu0 %855
          %v857 = vrcp.pop 32.0
          %v858 = vmul.f32 %v856, %v857
          %v859 = vsub.f32 %v850, %v858
          %v860 = vmul.f32 %v859, %v859
          %v861 = vsel %vm853, %v860, 0.0
          %862 = vadd.xlane.f32.xlu0 %v861
          %v863 = vpop.xlane.xlu0 %862
          %v864 = vmul.f32 %v863, %v857
          %v865 = vadd.f32 %v864, 1e-12
          %v866 = vrsqrt.pop %v865
          %v867 = vmul.f32 %v859, %v866
          %v869 = vlaneseq
          %v870 = vshrl.u32 %v869, 7
          %v871 = vsub.s32 0, %v870
          %v872 = vrot.slane %v851, %v871
          %v874 = vmul.f32 %v867, %v872
          %v876 = vlaneseq
          %v877 = vshrl.u32 %v876, 7
          %v878 = vsub.s32 0, %v877
          %v879 = vrot.slane %v852, %v878
          %v881 = vadd.f32 %v874, %v879
          %882 = vst.msk [vmem:[#allocation2] sm:$0xff] %vm853, %v881
        $region104: #{model_forward.1} parent=99 // pred_fallthru
          _
        %v883 = vld [vmem:[#allocation2] sm:$0xff]
        %v884 = vpack.c.bf16 %v883, %v883
        %v885 = vld [vmem:[%s799] sm:$0x1]
        %v887 = vlaneseq
        %v888 = vshrl.u32 %v887, 7
        %v889 = vsub.s32 0, %v888
        %v890 = vrot.slane %v885, %v889
        %v892 = vld [vmem:[%s804] sm:$0xf]
        %v893 = vld [vmem:[%s804 + $0x4] sm:$0xf]
        %v894 = vld [vmem:[%s804 + $0x8] sm:$0xf]
        %v895 = vld [vmem:[%s804 + $0xc] sm:$0xf]
        %v896 = vld [vmem:[%s808] sm:$0x1]
        %v898 = vlaneseq
        %v899 = vshrl.u32 %v898, 7
        %v900 = vsub.s32 0, %v899
        %v901 = vrot.slane %v896, %v900
        %v907 = vunpack.c.l.b16 %v892
        %v908 = vunpack.c.l.b16 %v893
        %v909 = vunpack.c.l.b16 %v894
        %v910 = vunpack.c.l.b16 %v895
        %v911 = vpack.c.b16 %v908, %v907
        %v912 = vpack.c.b16 %v910, %v909
        %vm915 = vcmask 261120
        %v917 = vsel %vm915, %v884, 0
        %919 = vmatprep.subr.bf16.mxu0 0
        %920 = vmatpush1.bf16.msra.mxu0 %v911
        %921 = vmatprep.subr.bf16.mxu0 0
        %922 = vmatpush1.bf16.msra.mxu0 %v912
        %923 = vmatprep.subr.bf16.mxu0 0
        %924 = vmatpush1.bf16.msra.mxu0 0
        %925 = vmatprep.subr.bf16.mxu0 0
        %926 = vmatpush1.bf16.msra.mxu0 0
        %927 = vmatprep.subr.bf16.mxu0 0
        %928 = vmatpush1.bf16.msra.mxu0 0
        %929 = vmatprep.subr.bf16.mxu0 0
        %930 = vmatpush1.bf16.msra.mxu0 0
        %931 = vmatprep.subr.bf16.mxu0 0
        %932 = vmatpush1.bf16.msra.mxu0 0
        %933 = vmatprep.subr.bf16.mxu0 0
        %934 = vmatpush1.bf16.msra.mxu0 0
        %935 = vmatprep.subr.bf16.mxu0 0
        %936 = vmatpush1.bf16.msra.mxu0 0
        %937 = vmatprep.subr.bf16.mxu0 0
        %938 = vmatpush1.bf16.msra.mxu0 0
        %939 = vmatprep.subr.bf16.mxu0 0
        %940 = vmatpush1.bf16.msra.mxu0 0
        %941 = vmatprep.subr.bf16.mxu0 0
        %942 = vmatpush1.bf16.msra.mxu0 0
        %943 = vmatprep.subr.bf16.mxu0 0
        %944 = vmatpush1.bf16.msra.mxu0 0
        %945 = vmatprep.subr.bf16.mxu0 0
        %946 = vmatpush1.bf16.msra.mxu0 0
        %947 = vmatprep.subr.bf16.mxu0 0
        %948 = vmatpush1.bf16.msra.mxu0 0
        %949 = vmatprep.subr.bf16.mxu0 0
        %950 = vmatpush1.bf16.msra.mxu0 0
        %951 = vmatprep.mubr.bf16.mxu0 0
        %952 = vmatmul.mubr.bf16.gmra.mrb[0].mxu0 %v917
        %v953 = vpop.f32.mrb[0].mxu0
        %v954 = vadd.f32 %v901, %v953
        %v955 = vpop.f32.mrb[0].mxu0
        %v956 = vpop.f32.mrb[0].mxu0
        %v957 = vpop.f32.mrb[0].mxu0
        %958 = vdwg.mxu0
        %s959 = scalar_lea.vmem %s804, 64
        %v960 = vld [vmem:[%s959] sm:$0xf]
        %v961 = vld [vmem:[%s959 + $0x4] sm:$0xf]
        %v962 = vld [vmem:[%s959 + $0x8] sm:$0xf]
        %v963 = vld [vmem:[%s959 + $0xc] sm:$0xf]
        %s964 = scalar_lea.vmem %s808, 4
        %v965 = vld [vmem:[%s964] sm:$0x1]
        %v967 = vlaneseq
        %v968 = vshrl.u32 %v967, 7
        %v969 = vsub.s32 0, %v968
        %v970 = vrot.slane %v965, %v969
        %v976 = vunpack.c.l.b16 %v960
        %v977 = vunpack.c.l.b16 %v961
        %v978 = vunpack.c.l.b16 %v962
        %v979 = vunpack.c.l.b16 %v963
        %v980 = vpack.c.b16 %v977, %v976
        %v981 = vpack.c.b16 %v979, %v978
        %984 = vmatprep.subr.bf16.mxu0 0
        %985 = vmatpush1.bf16.msra.mxu0 %v980
        %986 = vmatprep.subr.bf16.mxu0 0
        %987 = vmatpush1.bf16.msra.mxu0 %v981
        %988 = vmatprep.subr.bf16.mxu0 0
        %989 = vmatpush1.bf16.msra.mxu0 0
        %990 = vmatprep.subr.bf16.mxu0 0
        %991 = vmatpush1.bf16.msra.mxu0 0
        %992 = vmatprep.subr.bf16.mxu0 0
        %993 = vmatpush1.bf16.msra.mxu0 0
        %994 = vmatprep.subr.bf16.mxu0 0
        %995 = vmatpush1.bf16.msra.mxu0 0
        %996 = vmatprep.subr.bf16.mxu0 0
        %997 = vmatpush1.bf16.msra.mxu0 0
        %998 = vmatprep.subr.bf16.mxu0 0
        %999 = vmatpush1.bf16.msra.mxu0 0
        %1000 = vmatprep.subr.bf16.mxu0 0
        %1001 = vmatpush1.bf16.msra.mxu0 0
        %1002 = vmatprep.subr.bf16.mxu0 0
        %1003 = vmatpush1.bf16.msra.mxu0 0
        %1004 = vmatprep.subr.bf16.mxu0 0
        %1005 = vmatpush1.bf16.msra.mxu0 0
        %1006 = vmatprep.subr.bf16.mxu0 0
        %1007 = vmatpush1.bf16.msra.mxu0 0
        %1008 = vmatprep.subr.bf16.mxu0 0
        %1009 = vmatpush1.bf16.msra.mxu0 0
        %1010 = vmatprep.subr.bf16.mxu0 0
        %1011 = vmatpush1.bf16.msra.mxu0 0
        %1012 = vmatprep.subr.bf16.mxu0 0
        %1013 = vmatpush1.bf16.msra.mxu0 0
        %1014 = vmatprep.subr.bf16.mxu0 0
        %1015 = vmatpush1.bf16.msra.mxu0 0
        %1016 = vmatprep.mubr.bf16.mxu0 0
        %1017 = vmatmul.mubr.bf16.gmra.mrb[0].mxu0 %v917
        %v1018 = vpop.f32.mrb[0].mxu0
        %v1019 = vadd.f32 %v970, %v1018
        %v1020 = vpop.f32.mrb[0].mxu0
        %v1021 = vpop.f32.mrb[0].mxu0
        %v1022 = vpop.f32.mrb[0].mxu0
        %1023 = vdwg.mxu0
        %s1024 = scalar_lea.vmem %s804, 128
        %v1025 = vld [vmem:[%s1024] sm:$0xf]
        %v1026 = vld [vmem:[%s1024 + $0x4] sm:$0xf]
        %v1027 = vld [vmem:[%s1024 + $0x8] sm:$0xf]
        %v1028 = vld [vmem:[%s1024 + $0xc] sm:$0xf]
        %s1029 = scalar_lea.vmem %s808, 8
        %v1030 = vld [vmem:[%s1029] sm:$0x1]
        %v1032 = vlaneseq
        %v1033 = vshrl.u32 %v1032, 7
        %v1034 = vsub.s32 0, %v1033
        %v1035 = vrot.slane %v1030, %v1034
        %v1041 = vunpack.c.l.b16 %v1025
        %v1042 = vunpack.c.l.b16 %v1026
        %v1043 = vunpack.c.l.b16 %v1027
        %v1044 = vunpack.c.l.b16 %v1028
        %v1045 = vpack.c.b16 %v1042, %v1041
        %v1046 = vpack.c.b16 %v1044, %v1043
        %1049 = vmatprep.subr.bf16.mxu0 0
        %1050 = vmatpush1.bf16.msra.mxu0 %v1045
        %1051 = vmatprep.subr.bf16.mxu0 0
        %1052 = vmatpush1.bf16.msra.mxu0 %v1046
        %1053 = vmatprep.subr.bf16.mxu0 0
        %1054 = vmatpush1.bf16.msra.mxu0 0
        %1055 = vmatprep.subr.bf16.mxu0 0
        %1056 = vmatpush1.bf16.msra.mxu0 0
        %1057 = vmatprep.subr.bf16.mxu0 0
        %1058 = vmatpush1.bf16.msra.mxu0 0
        %1059 = vmatprep.subr.bf16.mxu0 0
        %1060 = vmatpush1.bf16.msra.mxu0 0
        %1061 = vmatprep.subr.bf16.mxu0 0
        %1062 = vmatpush1.bf16.msra.mxu0 0
        %1063 = vmatprep.subr.bf16.mxu0 0
        %1064 = vmatpush1.bf16.msra.mxu0 0
        %1065 = vmatprep.subr.bf16.mxu0 0
        %1066 = vmatpush1.bf16.msra.mxu0 0
        %1067 = vmatprep.subr.bf16.mxu0 0
        %1068 = vmatpush1.bf16.msra.mxu0 0
        %1069 = vmatprep.subr.bf16.mxu0 0
        %1070 = vmatpush1.bf16.msra.mxu0 0
        %1071 = vmatprep.subr.bf16.mxu0 0
        %1072 = vmatpush1.bf16.msra.mxu0 0
        %1073 = vmatprep.subr.bf16.mxu0 0
        %1074 = vmatpush1.bf16.msra.mxu0 0
        %1075 = vmatprep.subr.bf16.mxu0 0
        %1076 = vmatpush1.bf16.msra.mxu0 0
        %1077 = vmatprep.subr.bf16.mxu0 0
        %1078 = vmatpush1.bf16.msra.mxu0 0
        %1079 = vmatprep.subr.bf16.mxu0 0
        %1080 = vmatpush1.bf16.msra.mxu0 0
        %1081 = vmatprep.mubr.bf16.mxu0 0
        %1082 = vmatmul.mubr.bf16.gmra.mrb[0].mxu0 %v917
        %v1083 = vpop.f32.mrb[0].mxu0
        %v1084 = vadd.f32 %v1035, %v1083
        %v1085 = vpop.f32.mrb[0].mxu0
        %v1086 = vpop.f32.mrb[0].mxu0
        %v1087 = vpop.f32.mrb[0].mxu0
        %1088 = vdwg.mxu0
        %vm1089 = vcmask 64512
        %v1091 = vsel %vm1089, %v954, 0
        %v1094 = vsel %vm1089, %v1019, 0
        %1096 = vmatprep.subr.mxu0 0.0
        %1097 = vmatpush1.xpose.msra.mxu0 %v1094
        %1098 = vmatprep.subr.mxu0 0.0
        %1099 = vmatpush1.xpose.msra.mxu0 0.0
        %1100 = vmatprep.subr.mxu0 0.0
        %1101 = vmatpush1.xpose.msra.mxu0 0.0
        %1102 = vmatprep.subr.mxu0 0.0
        %1103 = vmatpush1.xpose.msra.mxu0 0.0
        %1104 = vmatprep.subr.mxu0 0.0
        %1105 = vmatpush1.xpose.msra.mxu0 0.0
        %1106 = vmatprep.subr.mxu0 0.0
        %1107 = vmatpush1.xpose.msra.mxu0 0.0
        %1108 = vmatprep.subr.mxu0 0.0
        %1109 = vmatpush1.xpose.msra.mxu0 0.0
        %1110 = vmatprep.subr.mxu0 0.0
        %1111 = vmatpush1.xpose.msra.mxu0 0.0
        %1112 = vmatprep.subr.mxu0 0.0
        %1113 = vmatpush1.xpose.msra.mxu0 0.0
        %1114 = vmatprep.subr.mxu0 0.0
        %1115 = vmatpush1.xpose.msra.mxu0 0.0
        %1116 = vmatprep.subr.mxu0 0.0
        %1117 = vmatpush1.xpose.msra.mxu0 0.0
        %1118 = vmatprep.subr.mxu0 0.0
        %1119 = vmatpush1.xpose.msra.mxu0 0.0
        %1120 = vmatprep.subr.mxu0 0.0
        %1121 = vmatpush1.xpose.msra.mxu0 0.0
        %1122 = vmatprep.subr.mxu0 0.0
        %1123 = vmatpush1.xpose.msra.mxu0 0.0
        %1124 = vmatprep.subr.mxu0 0.0
        %1125 = vmatpush1.xpose.msra.mxu0 0.0
        %1126 = vmatprep.subr.mxu0 0.0
        %1127 = vmatpush1.xpose.msra.mxu0 0.0
        %1128 = vmatprep.subr.mxu0 0.0
        %1129 = vmatpush1.xpose.msra.mxu0 0.0
        %1130 = vmatprep.subr.mxu0 0.0
        %1131 = vmatpush1.xpose.msra.mxu0 0.0
        %1132 = vmatprep.subr.mxu0 0.0
        %1133 = vmatpush1.xpose.msra.mxu0 0.0
        %1134 = vmatprep.subr.mxu0 0.0
        %1135 = vmatpush1.xpose.msra.mxu0 0.0
        %1136 = vmatprep.subr.mxu0 0.0
        %1137 = vmatpush1.xpose.msra.mxu0 0.0
        %1138 = vmatprep.subr.mxu0 0.0
        %1139 = vmatpush1.xpose.msra.mxu0 0.0
        %1140 = vmatprep.subr.mxu0 0.0
        %1141 = vmatpush1.xpose.msra.mxu0 0.0
        %1142 = vmatprep.subr.mxu0 0.0
        %1143 = vmatpush1.xpose.msra.mxu0 0.0
        %1144 = vmatprep.subr.mxu0 0.0
        %1145 = vmatpush1.xpose.msra.mxu0 0.0
        %1146 = vmatprep.subr.mxu0 0.0
        %1147 = vmatpush1.xpose.msra.mxu0 0.0
        %1148 = vmatprep.subr.mxu0 0.0
        %1149 = vmatpush1.xpose.msra.mxu0 0.0
        %1150 = vmatprep.subr.mxu0 0.0
        %1151 = vmatpush1.xpose.msra.mxu0 0.0
        %1152 = vmatprep.subr.mxu0 0.0
        %1153 = vmatpush1.xpose.msra.mxu0 0.0
        %1154 = vmatprep.subr.mxu0 0.0
        %1155 = vmatpush1.xpose.msra.mxu0 0.0
        %1156 = vmatprep.subr.mxu0 0.0
        %1157 = vmatpush1.xpose.msra.mxu0 0.0
        %1158 = vmatprep.subr.mxu0 0.0
        %1159 = vmatpush1.xpose.msra.mxu0 0.0
        %1160 = vmatprep.mubr.f32.mxu0 0.0
        %1161 = vmatmul.mubr.f32.gmra.mrb[0].mxu0 %v1091
        %v1162 = vpop.f32.mrb[0].mxu0
        %v1163 = vadd.f32 %v890, %v1162
        %v1164 = vpop.f32.mrb[0].mxu0
        %1165 = vdwg.mxu0
        %v1166 = vsel %vm1089, %v1163, -inf
        %1167 = vmax.xlane.f32.xlu0 %v1166
        %v1168 = vpop.xlane.xlu0 %1167
        %v1169 = vsub.f32 %v1163, %v1168
        %v1170 = vmul.f32 %v1169, 1.442695
        %v1171 = vpow.pop %v1170
        %v1172 = vsel %vm1089, %v1171, 0.0
        %1173 = vadd.xlane.f32.xlu0 %v1172
        %v1174 = vpop.xlane.xlu0 %1173
        %v1175 = vrcp.pop %v1174
        %v1176 = vmul.f32 %v1171, %v1175
        %v1177 = vpack.c.bf16 %v1176, %v1176
        %v1178 = vpack.c.bf16 %v1084, %v1084
        %v1180 = vsel %vm1089, %v1177, 0
        %vm1182 = vcmask 1043456
        %v1184 = vsel %vm1182, %v1178, 0
        %1186 = vmatprep.subr.bf16.mxu0 0
        %1187 = vmatpush1.bf16.msra.mxu0 %v1184
        %1188 = vmatprep.subr.bf16.mxu0 0
        %1189 = vmatpush1.bf16.msra.mxu0 0
        %1190 = vmatprep.subr.bf16.mxu0 0
        %1191 = vmatpush1.bf16.msra.mxu0 0
        %1192 = vmatprep.subr.bf16.mxu0 0
        %1193 = vmatpush1.bf16.msra.mxu0 0
        %1194 = vmatprep.subr.bf16.mxu0 0
        %1195 = vmatpush1.bf16.msra.mxu0 0
        %1196 = vmatprep.subr.bf16.mxu0 0
        %1197 = vmatpush1.bf16.msra.mxu0 0
        %1198 = vmatprep.subr.bf16.mxu0 0
        %1199 = vmatpush1.bf16.msra.mxu0 0
        %1200 = vmatprep.subr.bf16.mxu0 0
        %1201 = vmatpush1.bf16.msra.mxu0 0
        %1202 = vmatprep.subr.bf16.mxu0 0
        %1203 = vmatpush1.bf16.msra.mxu0 0
        %1204 = vmatprep.subr.bf16.mxu0 0
        %1205 = vmatpush1.bf16.msra.mxu0 0
        %1206 = vmatprep.subr.bf16.mxu0 0
        %1207 = vmatpush1.bf16.msra.mxu0 0
        %1208 = vmatprep.subr.bf16.mxu0 0
        %1209 = vmatpush1.bf16.msra.mxu0 0
        %1210 = vmatprep.subr.bf16.mxu0 0
        %1211 = vmatpush1.bf16.msra.mxu0 0
        %1212 = vmatprep.subr.bf16.mxu0 0
        %1213 = vmatpush1.bf16.msra.mxu0 0
        %1214 = vmatprep.subr.bf16.mxu0 0
        %1215 = vmatpush1.bf16.msra.mxu0 0
        %1216 = vmatprep.subr.bf16.mxu0 0
        %1217 = vmatpush1.bf16.msra.mxu0 0
        %1218 = vmatprep.mubr.bf16.mxu0 0
        %1219 = vmatmul.mubr.bf16.gmra.mrb[0].mxu0 %v1180
        %v1220 = vpop.f32.mrb[0].mxu0
        %v1221 = vadd.f32 0.0, %v1220
        %v1222 = vpop.f32.mrb[0].mxu0
        %v1223 = vpop.f32.mrb[0].mxu0
        %v1224 = vpop.f32.mrb[0].mxu0
        %1225 = vdwg.mxu0
        %v1226 = vpack.c.bf16 %v1221, %v1221
        %v1227 = vld [vmem:[%s813] sm:$0xf]
        %s1228 = scalar_lea.vmem %s804, 16
        %v1229 = vld [vmem:[%s1228] sm:$0xf]
        %v1230 = vld [vmem:[%s1228 + $0x4] sm:$0xf]
        %v1231 = vld [vmem:[%s1228 + $0x8] sm:$0xf]
        %v1232 = vld [vmem:[%s1228 + $0xc] sm:$0xf]
        %s1233 = scalar_lea.vmem %s808, 1
        %v1234 = vld [vmem:[%s1233] sm:$0x1]
        %v1236 = vlaneseq
        %v1237 = vshrl.u32 %v1236, 7
        %v1238 = vsub.s32 0, %v1237
        %v1239 = vrot.slane %v1234, %v1238
        %v1245 = vunpack.c.l.b16 %v1229
        %v1246 = vunpack.c.l.b16 %v1230
        %v1247 = vunpack.c.l.b16 %v1231
        %v1248 = vunpack.c.l.b16 %v1232
        %v1249 = vpack.c.b16 %v1246, %v1245
        %v1250 = vpack.c.b16 %v1248, %v1247
        %1253 = vmatprep.subr.bf16.mxu0 0
        %1254 = vmatpush1.bf16.msra.mxu0 %v1249
        %1255 = vmatprep.subr.bf16.mxu0 0
        %1256 = vmatpush1.bf16.msra.mxu0 %v1250
        %1257 = vmatprep.subr.bf16.mxu0 0
        %1258 = vmatpush1.bf16.msra.mxu0 0
        %1259 = vmatprep.subr.bf16.mxu0 0
        %1260 = vmatpush1.bf16.msra.mxu0 0
        %1261 = vmatprep.subr.bf16.mxu0 0
        %1262 = vmatpush1.bf16.msra.mxu0 0
        %1263 = vmatprep.subr.bf16.mxu0 0
        %1264 = vmatpush1.bf16.msra.mxu0 0
        %1265 = vmatprep.subr.bf16.mxu0 0
        %1266 = vmatpush1.bf16.msra.mxu0 0
        %1267 = vmatprep.subr.bf16.mxu0 0
        %1268 = vmatpush1.bf16.msra.mxu0 0
        %1269 = vmatprep.subr.bf16.mxu0 0
        %1270 = vmatpush1.bf16.msra.mxu0 0
        %1271 = vmatprep.subr.bf16.mxu0 0
        %1272 = vmatpush1.bf16.msra.mxu0 0
        %1273 = vmatprep.subr.bf16.mxu0 0
        %1274 = vmatpush1.bf16.msra.mxu0 0
        %1275 = vmatprep.subr.bf16.mxu0 0
        %1276 = vmatpush1.bf16.msra.mxu0 0
        %1277 = vmatprep.subr.bf16.mxu0 0
        %1278 = vmatpush1.bf16.msra.mxu0 0
        %1279 = vmatprep.subr.bf16.mxu0 0
        %1280 = vmatpush1.bf16.msra.mxu0 0
        %1281 = vmatprep.subr.bf16.mxu0 0
        %1282 = vmatpush1.bf16.msra.mxu0 0
        %1283 = vmatprep.subr.bf16.mxu0 0
        %1284 = vmatpush1.bf16.msra.mxu0 0
        %1285 = vmatprep.mubr.bf16.mxu0 0
        %1286 = vmatmul.mubr.bf16.gmra.mrb[0].mxu0 %v917
        %v1287 = vpop.f32.mrb[0].mxu0
        %v1288 = vadd.f32 %v1239, %v1287
        %v1289 = vpop.f32.mrb[0].mxu0
        %v1290 = vpop.f32.mrb[0].mxu0
        %v1291 = vpop.f32.mrb[0].mxu0
        %1292 = vdwg.mxu0
        %s1293 = scalar_lea.vmem %s804, 80
        %v1294 = vld [vmem:[%s1293] sm:$0xf]
        %v1295 = vld [vmem:[%s1293 + $0x4] sm:$0xf]
        %v1296 = vld [vmem:[%s1293 + $0x8] sm:$0xf]
        %v1297 = vld [vmem:[%s1293 + $0xc] sm:$0xf]
        %s1298 = scalar_lea.vmem %s808, 5
        %v1299 = vld [vmem:[%s1298] sm:$0x1]
        %v1301 = vlaneseq
        %v1302 = vshrl.u32 %v1301, 7
        %v1303 = vsub.s32 0, %v1302
        %v1304 = vrot.slane %v1299, %v1303
        %v1310 = vunpack.c.l.b16 %v1294
        %v1311 = vunpack.c.l.b16 %v1295
        %v1312 = vunpack.c.l.b16 %v1296
        %v1313 = vunpack.c.l.b16 %v1297
        %v1314 = vpack.c.b16 %v1311, %v1310
        %v1315 = vpack.c.b16 %v1313, %v1312
        %1318 = vmatprep.subr.bf16.mxu0 0
        %1319 = vmatpush1.bf16.msra.mxu0 %v1314
        %1320 = vmatprep.subr.bf16.mxu0 0
        %1321 = vmatpush1.bf16.msra.mxu0 %v1315
        %1322 = vmatprep.subr.bf16.mxu0 0
        %1323 = vmatpush1.bf16.msra.mxu0 0
        %1324 = vmatprep.subr.bf16.mxu0 0
        %1325 = vmatpush1.bf16.msra.mxu0 0
        %1326 = vmatprep.subr.bf16.mxu0 0
        %1327 = vmatpush1.bf16.msra.mxu0 0
        %1328 = vmatprep.subr.bf16.mxu0 0
        %1329 = vmatpush1.bf16.msra.mxu0 0
        %1330 = vmatprep.subr.bf16.mxu0 0
        %1331 = vmatpush1.bf16.msra.mxu0 0
        %1332 = vmatprep.subr.bf16.mxu0 0
        %1333 = vmatpush1.bf16.msra.mxu0 0
        %1334 = vmatprep.subr.bf16.mxu0 0
        %1335 = vmatpush1.bf16.msra.mxu0 0
        %1336 = vmatprep.subr.bf16.mxu0 0
        %1337 = vmatpush1.bf16.msra.mxu0 0
        %1338 = vmatprep.subr.bf16.mxu0 0
        %1339 = vmatpush1.bf16.msra.mxu0 0
        %1340 = vmatprep.subr.bf16.mxu0 0
        %1341 = vmatpush1.bf16.msra.mxu0 0
        %1342 = vmatprep.subr.bf16.mxu0 0
        %1343 = vmatpush1.bf16.msra.mxu0 0
        %1344 = vmatprep.subr.bf16.mxu0 0
        %1345 = vmatpush1.bf16.msra.mxu0 0
        %1346 = vmatprep.subr.bf16.mxu0 0
        %1347 = vmatpush1.bf16.msra.mxu0 0
        %1348 = vmatprep.subr.bf16.mxu0 0
        %1349 = vmatpush1.bf16.msra.mxu0 0
        %1350 = vmatprep.mubr.bf16.mxu0 0
        %1351 = vmatmul.mubr.bf16.gmra.mrb[0].mxu0 %v917
        %v1352 = vpop.f32.mrb[0].mxu0
        %v1353 = vadd.f32 %v1304, %v1352
        %v1354 = vpop.f32.mrb[0].mxu0
        %v1355 = vpop.f32.mrb[0].mxu0
        %v1356 = vpop.f32.mrb[0].mxu0
        %1357 = vdwg.mxu0
        %s1358 = scalar_lea.vmem %s804, 144
        %v1359 = vld [vmem:[%s1358] sm:$0xf]
        %v1360 = vld [vmem:[%s1358 + $0x4] sm:$0xf]
        %v1361 = vld [vmem:[%s1358 + $0x8] sm:$0xf]
        %v1362 = vld [vmem:[%s1358 + $0xc] sm:$0xf]
        %s1363 = scalar_lea.vmem %s808, 9
        %v1364 = vld [vmem:[%s1363] sm:$0x1]
        %v1366 = vlaneseq
        %v1367 = vshrl.u32 %v1366, 7
        %v1368 = vsub.s32 0, %v1367
        %v1369 = vrot.slane %v1364, %v1368
        %v1375 = vunpack.c.l.b16 %v1359
        %v1376 = vunpack.c.l.b16 %v1360
        %v1377 = vunpack.c.l.b16 %v1361
        %v1378 = vunpack.c.l.b16 %v1362
        %v1379 = vpack.c.b16 %v1376, %v1375
        %v1380 = vpack.c.b16 %v1378, %v1377
        %1383 = vmatprep.subr.bf16.mxu0 0
        %1384 = vmatpush1.bf16.msra.mxu0 %v1379
        %1385 = vmatprep.subr.bf16.mxu0 0
        %1386 = vmatpush1.bf16.msra.mxu0 %v1380
        %1387 = vmatprep.subr.bf16.mxu0 0
        %1388 = vmatpush1.bf16.msra.mxu0 0
        %1389 = vmatprep.subr.bf16.mxu0 0
        %1390 = vmatpush1.bf16.msra.mxu0 0
        %1391 = vmatprep.subr.bf16.mxu0 0
        %1392 = vmatpush1.bf16.msra.mxu0 0
        %1393 = vmatprep.subr.bf16.mxu0 0
        %1394 = vmatpush1.bf16.msra.mxu0 0
        %1395 = vmatprep.subr.bf16.mxu0 0
        %1396 = vmatpush1.bf16.msra.mxu0 0
        %1397 = vmatprep.subr.bf16.mxu0 0
        %1398 = vmatpush1.bf16.msra.mxu0 0
        %1399 = vmatprep.subr.bf16.mxu0 0
        %1400 = vmatpush1.bf16.msra.mxu0 0
        %1401 = vmatprep.subr.bf16.mxu0 0
        %1402 = vmatpush1.bf16.msra.mxu0 0
        %1403 = vmatprep.subr.bf16.mxu0 0
        %1404 = vmatpush1.bf16.msra.mxu0 0
        %1405 = vmatprep.subr.bf16.mxu0 0
        %1406 = vmatpush1.bf16.msra.mxu0 0
        %1407 = vmatprep.subr.bf16.mxu0 0
        %1408 = vmatpush1.bf16.msra.mxu0 0
        %1409 = vmatprep.subr.bf16.mxu0 0
        %1410 = vmatpush1.bf16.msra.mxu0 0
        %1411 = vmatprep.subr.bf16.mxu0 0
        %1412 = vmatpush1.bf16.msra.mxu0 0
        %1413 = vmatprep.subr.bf16.mxu0 0
        %1414 = vmatpush1.bf16.msra.mxu0 0
        %1415 = vmatprep.mubr.bf16.mxu0 0
        %1416 = vmatmul.mubr.bf16.gmra.mrb[0].mxu0 %v917
        %v1417 = vpop.f32.mrb[0].mxu0
        %v1418 = vadd.f32 %v1369, %v1417
        %v1419 = vpop.f32.mrb[0].mxu0
        %v1420 = vpop.f32.mrb[0].mxu0
        %v1421 = vpop.f32.mrb[0].mxu0
        %1422 = vdwg.mxu0
        %v1424 = vsel %vm1089, %v1288, 0
        %v1427 = vsel %vm1089, %v1353, 0
        %1429 = vmatprep.subr.mxu0 0.0
        %1430 = vmatpush1.xpose.msra.mxu0 %v1427
        %1431 = vmatprep.subr.mxu0 0.0
        %1432 = vmatpush1.xpose.msra.mxu0 0.0
        %1433 = vmatprep.subr.mxu0 0.0
        %1434 = vmatpush1.xpose.msra.mxu0 0.0
        %1435 = vmatprep.subr.mxu0 0.0
        %1436 = vmatpush1.xpose.msra.mxu0 0.0
        %1437 = vmatprep.subr.mxu0 0.0
        %1438 = vmatpush1.xpose.msra.mxu0 0.0
        %1439 = vmatprep.subr.mxu0 0.0
        %1440 = vmatpush1.xpose.msra.mxu0 0.0
        %1441 = vmatprep.subr.mxu0 0.0
        %1442 = vmatpush1.xpose.msra.mxu0 0.0
        %1443 = vmatprep.subr.mxu0 0.0
        %1444 = vmatpush1.xpose.msra.mxu0 0.0
        %1445 = vmatprep.subr.mxu0 0.0
        %1446 = vmatpush1.xpose.msra.mxu0 0.0
        %1447 = vmatprep.subr.mxu0 0.0
        %1448 = vmatpush1.xpose.msra.mxu0 0.0
        %1449 = vmatprep.subr.mxu0 0.0
        %1450 = vmatpush1.xpose.msra.mxu0 0.0
        %1451 = vmatprep.subr.mxu0 0.0
        %1452 = vmatpush1.xpose.msra.mxu0 0.0
        %1453 = vmatprep.subr.mxu0 0.0
        %1454 = vmatpush1.xpose.msra.mxu0 0.0
        %1455 = vmatprep.subr.mxu0 0.0
        %1456 = vmatpush1.xpose.msra.mxu0 0.0
        %1457 = vmatprep.subr.mxu0 0.0
        %1458 = vmatpush1.xpose.msra.mxu0 0.0
        %1459 = vmatprep.subr.mxu0 0.0
        %1460 = vmatpush1.xpose.msra.mxu0 0.0
        %1461 = vmatprep.subr.mxu0 0.0
        %1462 = vmatpush1.xpose.msra.mxu0 0.0
        %1463 = vmatprep.subr.mxu0 0.0
        %1464 = vmatpush1.xpose.msra.mxu0 0.0
        %1465 = vmatprep.subr.mxu0 0.0
        %1466 = vmatpush1.xpose.msra.mxu0 0.0
        %1467 = vmatprep.subr.mxu0 0.0
        %1468 = vmatpush1.xpose.msra.mxu0 0.0
        %1469 = vmatprep.subr.mxu0 0.0
        %1470 = vmatpush1.xpose.msra.mxu0 0.0
        %1471 = vmatprep.subr.mxu0 0.0
        %1472 = vmatpush1.xpose.msra.mxu0 0.0
        %1473 = vmatprep.subr.mxu0 0.0
        %1474 = vmatpush1.xpose.msra.mxu0 0.0
        %1475 = vmatprep.subr.mxu0 0.0
        %1476 = vmatpush1.xpose.msra.mxu0 0.0
        %1477 = vmatprep.subr.mxu0 0.0
        %1478 = vmatpush1.xpose.msra.mxu0 0.0
        %1479 = vmatprep.subr.mxu0 0.0
        %1480 = vmatpush1.xpose.msra.mxu0 0.0
        %1481 = vmatprep.subr.mxu0 0.0
        %1482 = vmatpush1.xpose.msra.mxu0 0.0
        %1483 = vmatprep.subr.mxu0 0.0
        %1484 = vmatpush1.xpose.msra.mxu0 0.0
        %1485 = vmatprep.subr.mxu0 0.0
        %1486 = vmatpush1.xpose.msra.mxu0 0.0
        %1487 = vmatprep.subr.mxu0 0.0
        %1488 = vmatpush1.xpose.msra.mxu0 0.0
        %1489 = vmatprep.subr.mxu0 0.0
        %1490 = vmatpush1.xpose.msra.mxu0 0.0
        %1491 = vmatprep.subr.mxu0 0.0
        %1492 = vmatpush1.xpose.msra.mxu0 0.0
        %1493 = vmatprep.mubr.f32.mxu0 0.0
        %1494 = vmatmul.mubr.f32.gmra.mrb[0].mxu0 %v1424
        %v1495 = vpop.f32.mrb[0].mxu0
        %v1496 = vadd.f32 %v890, %v1495
        %v1497 = vpop.f32.mrb[0].mxu0
        %1498 = vdwg.mxu0
        %v1499 = vsel %vm1089, %v1496, -inf
        %1500 = vmax.xlane.f32.xlu0 %v1499
        %v1501 = vpop.xlane.xlu0 %1500
        %v1502 = vsub.f32 %v1496, %v1501
        %v1503 = vmul.f32 %v1502, 1.442695
        %v1504 = vpow.pop %v1503
        %v1505 = vsel %vm1089, %v1504, 0.0
        %1506 = vadd.xlane.f32.xlu0 %v1505
        %v1507 = vpop.xlane.xlu0 %1506
        %v1508 = vrcp.pop %v1507
        %v1509 = vmul.f32 %v1504, %v1508
        %v1510 = vpack.c.bf16 %v1509, %v1509
        %v1511 = vpack.c.bf16 %v1418, %v1418
        %v1513 = vsel %vm1089, %v1510, 0
        %v1516 = vsel %vm1182, %v1511, 0
        %1518 = vmatprep.subr.bf16.mxu0 0
        %1519 = vmatpush1.bf16.msra.mxu0 %v1516
        %1520 = vmatprep.subr.bf16.mxu0 0
        %1521 = vmatpush1.bf16.msra.mxu0 0
        %1522 = vmatprep.subr.bf16.mxu0 0
        %1523 = vmatpush1.bf16.msra.mxu0 0
        %1524 = vmatprep.subr.bf16.mxu0 0
        %1525 = vmatpush1.bf16.msra.mxu0 0
        %1526 = vmatprep.subr.bf16.mxu0 0
        %1527 = vmatpush1.bf16.msra.mxu0 0
        %1528 = vmatprep.subr.bf16.mxu0 0
        %1529 = vmatpush1.bf16.msra.mxu0 0
        %1530 = vmatprep.subr.bf16.mxu0 0
        %1531 = vmatpush1.bf16.msra.mxu0 0
        %1532 = vmatprep.subr.bf16.mxu0 0
        %1533 = vmatpush1.bf16.msra.mxu0 0
        %1534 = vmatprep.subr.bf16.mxu0 0
        %1535 = vmatpush1.bf16.msra.mxu0 0
        %1536 = vmatprep.subr.bf16.mxu0 0
        %1537 = vmatpush1.bf16.msra.mxu0 0
        %1538 = vmatprep.subr.bf16.mxu0 0
        %1539 = vmatpush1.bf16.msra.mxu0 0
        %1540 = vmatprep.subr.bf16.mxu0 0
        %1541 = vmatpush1.bf16.msra.mxu0 0
        %1542 = vmatprep.subr.bf16.mxu0 0
        %1543 = vmatpush1.bf16.msra.mxu0 0
        %1544 = vmatprep.subr.bf16.mxu0 0
        %1545 = vmatpush1.bf16.msra.mxu0 0
        %1546 = vmatprep.subr.bf16.mxu0 0
        %1547 = vmatpush1.bf16.msra.mxu0 0
        %1548 = vmatprep.subr.bf16.mxu0 0
        %1549 = vmatpush1.bf16.msra.mxu0 0
        %1550 = vmatprep.mubr.bf16.mxu0 0
        %1551 = vmatmul.mubr.bf16.gmra.mrb[0].mxu0 %v1513
        %v1552 = vpop.f32.mrb[0].mxu0
        %v1553 = vadd.f32 0.0, %v1552
        %v1554 = vpop.f32.mrb[0].mxu0
        %v1555 = vpop.f32.mrb[0].mxu0
        %v1556 = vpop.f32.mrb[0].mxu0
        %1557 = vdwg.mxu0
        %v1558 = vpack.c.bf16 %v1553, %v1553
        %s1559 = scalar_lea.vmem %s813, 4
        %v1560 = vld [vmem:[%s1559] sm:$0xf]
        %v1562 = vsel %vm1089, %v1558, 0
        %v1565 = vsel %vm1182, %v1560, 0
        %1567 = vmatprep.subr.bf16.mxu0 0
        %1568 = vmatpush1.bf16.msra.mxu0 %v1565
        %1569 = vmatprep.subr.bf16.mxu0 0
        %1570 = vmatpush1.bf16.msra.mxu0 0
        %1571 = vmatprep.subr.bf16.mxu0 0
        %1572 = vmatpush1.bf16.msra.mxu0 0
        %1573 = vmatprep.subr.bf16.mxu0 0
        %1574 = vmatpush1.bf16.msra.mxu0 0
        %1575 = vmatprep.subr.bf16.mxu0 0
        %1576 = vmatpush1.bf16.msra.mxu0 0
        %1577 = vmatprep.subr.bf16.mxu0 0
        %1578 = vmatpush1.bf16.msra.mxu0 0
        %1579 = vmatprep.subr.bf16.mxu0 0
        %1580 = vmatpush1.bf16.msra.mxu0 0
        %1581 = vmatprep.subr.bf16.mxu0 0
        %1582 = vmatpush1.bf16.msra.mxu0 0
        %1583 = vmatprep.subr.bf16.mxu0 0
        %1584 = vmatpush1.bf16.msra.mxu0 0
        %1585 = vmatprep.subr.bf16.mxu0 0
        %1586 = vmatpush1.bf16.msra.mxu0 0
        %1587 = vmatprep.subr.bf16.mxu0 0
        %1588 = vmatpush1.bf16.msra.mxu0 0
        %1589 = vmatprep.subr.bf16.mxu0 0
        %1590 = vmatpush1.bf16.msra.mxu0 0
        %1591 = vmatprep.subr.bf16.mxu0 0
        %1592 = vmatpush1.bf16.msra.mxu0 0
        %1593 = vmatprep.subr.bf16.mxu0 0
        %1594 = vmatpush1.bf16.msra.mxu0 0
        %1595 = vmatprep.subr.bf16.mxu0 0
        %1596 = vmatpush1.bf16.msra.mxu0 0
        %1597 = vmatprep.subr.bf16.mxu0 0
        %1598 = vmatpush1.bf16.msra.mxu0 0
        %1599 = vmatprep.mubr.bf16.mxu0 0
        %1600 = vmatmul.mubr.bf16.gmra.mrb[0].mxu0 %v1562
        %v1601 = vpop.f32.mrb[0].mxu0
        %v1602 = vadd.f32 0.0, %v1601
        %v1603 = vpop.f32.mrb[0].mxu0
        %v1604 = vpop.f32.mrb[0].mxu0
        %v1605 = vpop.f32.mrb[0].mxu0
        %1606 = vdwg.mxu0
        %v1608 = vsel %vm1089, %v1226, 0
        %v1611 = vsel %vm1182, %v1227, 0
        %1613 = vmatprep.subr.bf16.mxu0 0
        %1614 = vmatpush1.bf16.msra.mxu0 %v1611
        %1615 = vmatprep.subr.bf16.mxu0 0
        %1616 = vmatpush1.bf16.msra.mxu0 0
        %1617 = vmatprep.subr.bf16.mxu0 0
        %1618 = vmatpush1.bf16.msra.mxu0 0
        %1619 = vmatprep.subr.bf16.mxu0 0
        %1620 = vmatpush1.bf16.msra.mxu0 0
        %1621 = vmatprep.subr.bf16.mxu0 0
        %1622 = vmatpush1.bf16.msra.mxu0 0
        %1623 = vmatprep.subr.bf16.mxu0 0
        %1624 = vmatpush1.bf16.msra.mxu0 0
        %1625 = vmatprep.subr.bf16.mxu0 0
        %1626 = vmatpush1.bf16.msra.mxu0 0
        %1627 = vmatprep.subr.bf16.mxu0 0
        %1628 = vmatpush1.bf16.msra.mxu0 0
        %1629 = vmatprep.subr.bf16.mxu0 0
        %1630 = vmatpush1.bf16.msra.mxu0 0
        %1631 = vmatprep.subr.bf16.mxu0 0
        %1632 = vmatpush1.bf16.msra.mxu0 0
        %1633 = vmatprep.subr.bf16.mxu0 0
        %1634 = vmatpush1.bf16.msra.mxu0 0
        %1635 = vmatprep.subr.bf16.mxu0 0
        %1636 = vmatpush1.bf16.msra.mxu0 0
        %1637 = vmatprep.subr.bf16.mxu0 0
        %1638 = vmatpush1.bf16.msra.mxu0 0
        %1639 = vmatprep.subr.bf16.mxu0 0
        %1640 = vmatpush1.bf16.msra.mxu0 0
        %1641 = vmatprep.subr.bf16.mxu0 0
        %1642 = vmatpush1.bf16.msra.mxu0 0
        %1643 = vmatprep.subr.bf16.mxu0 0
        %1644 = vmatpush1.bf16.msra.mxu0 0
        %1645 = vmatprep.mubr.bf16.mxu0 0
        %1646 = vmatmul.mubr.bf16.gmra.mrb[0].mxu0 %v1608
        %v1647 = vpop.f32.mrb[0].mxu0
        %v1648 = vadd.f32 %v1602, %v1647
        %v1649 = vpop.f32.mrb[0].mxu0
        %v1650 = vpop.f32.mrb[0].mxu0
        %v1651 = vpop.f32.mrb[0].mxu0
        %1652 = vdwg.mxu0
        %s1653 = scalar_lea.vmem %s804, 32
        %v1654 = vld [vmem:[%s1653] sm:$0xf]
        %v1655 = vld [vmem:[%s1653 + $0x4] sm:$0xf]
        %v1656 = vld [vmem:[%s1653 + $0x8] sm:$0xf]
        %v1657 = vld [vmem:[%s1653 + $0xc] sm:$0xf]
        %s1658 = scalar_lea.vmem %s808, 2
        %v1659 = vld [vmem:[%s1658] sm:$0x1]
        %v1661 = vlaneseq
        %v1662 = vshrl.u32 %v1661, 7
        %v1663 = vsub.s32 0, %v1662
        %v1664 = vrot.slane %v1659, %v1663
        %v1670 = vunpack.c.l.b16 %v1654
        %v1671 = vunpack.c.l.b16 %v1655
        %v1672 = vunpack.c.l.b16 %v1656
        %v1673 = vunpack.c.l.b16 %v1657
        %v1674 = vpack.c.b16 %v1671, %v1670
        %v1675 = vpack.c.b16 %v1673, %v1672
        %1678 = vmatprep.subr.bf16.mxu0 0
        %1679 = vmatpush1.bf16.msra.mxu0 %v1674
        %1680 = vmatprep.subr.bf16.mxu0 0
        %1681 = vmatpush1.bf16.msra.mxu0 %v1675
        %1682 = vmatprep.subr.bf16.mxu0 0
        %1683 = vmatpush1.bf16.msra.mxu0 0
        %1684 = vmatprep.subr.bf16.mxu0 0
        %1685 = vmatpush1.bf16.msra.mxu0 0
        %1686 = vmatprep.subr.bf16.mxu0 0
        %1687 = vmatpush1.bf16.msra.mxu0 0
        %1688 = vmatprep.subr.bf16.mxu0 0
        %1689 = vmatpush1.bf16.msra.mxu0 0
        %1690 = vmatprep.subr.bf16.mxu0 0
        %1691 = vmatpush1.bf16.msra.mxu0 0
        %1692 = vmatprep.subr.bf16.mxu0 0
        %1693 = vmatpush1.bf16.msra.mxu0 0
        %1694 = vmatprep.subr.bf16.mxu0 0
        %1695 = vmatpush1.bf16.msra.mxu0 0
        %1696 = vmatprep.subr.bf16.mxu0 0
        %1697 = vmatpush1.bf16.msra.mxu0 0
        %1698 = vmatprep.subr.bf16.mxu0 0
        %1699 = vmatpush1.bf16.msra.mxu0 0
        %1700 = vmatprep.subr.bf16.mxu0 0
        %1701 = vmatpush1.bf16.msra.mxu0 0
        %1702 = vmatprep.subr.bf16.mxu0 0
        %1703 = vmatpush1.bf16.msra.mxu0 0
        %1704 = vmatprep.subr.bf16.mxu0 0
        %1705 = vmatpush1.bf16.msra.mxu0 0
        %1706 = vmatprep.subr.bf16.mxu0 0
        %1707 = vmatpush1.bf16.msra.mxu0 0
        %1708 = vmatprep.subr.bf16.mxu0 0
        %1709 = vmatpush1.bf16.msra.mxu0 0
        %1710 = vmatprep.mubr.bf16.mxu0 0
        %1711 = vmatmul.mubr.bf16.gmra.mrb[0].mxu0 %v917
        %v1712 = vpop.f32.mrb[0].mxu0
        %v1713 = vadd.f32 %v1664, %v1712
        %v1714 = vpop.f32.mrb[0].mxu0
        %v1715 = vpop.f32.mrb[0].mxu0
        %v1716 = vpop.f32.mrb[0].mxu0
        %1717 = vdwg.mxu0
        %s1718 = scalar_lea.vmem %s804, 96
        %v1719 = vld [vmem:[%s1718] sm:$0xf]
        %v1720 = vld [vmem:[%s1718 + $0x4] sm:$0xf]
        %v1721 = vld [vmem:[%s1718 + $0x8] sm:$0xf]
        %v1722 = vld [vmem:[%s1718 + $0xc] sm:$0xf]
        %s1723 = scalar_lea.vmem %s808, 6
        %v1724 = vld [vmem:[%s1723] sm:$0x1]
        %v1726 = vlaneseq
        %v1727 = vshrl.u32 %v1726, 7
        %v1728 = vsub.s32 0, %v1727
        %v1729 = vrot.slane %v1724, %v1728
        %v1735 = vunpack.c.l.b16 %v1719
        %v1736 = vunpack.c.l.b16 %v1720
        %v1737 = vunpack.c.l.b16 %v1721
        %v1738 = vunpack.c.l.b16 %v1722
        %v1739 = vpack.c.b16 %v1736, %v1735
        %v1740 = vpack.c.b16 %v1738, %v1737
        %1743 = vmatprep.subr.bf16.mxu0 0
        %1744 = vmatpush1.bf16.msra.mxu0 %v1739
        %1745 = vmatprep.subr.bf16.mxu0 0
        %1746 = vmatpush1.bf16.msra.mxu0 %v1740
        %1747 = vmatprep.subr.bf16.mxu0 0
        %1748 = vmatpush1.bf16.msra.mxu0 0
        %1749 = vmatprep.subr.bf16.mxu0 0
        %1750 = vmatpush1.bf16.msra.mxu0 0
        %1751 = vmatprep.subr.bf16.mxu0 0
        %1752 = vmatpush1.bf16.msra.mxu0 0
        %1753 = vmatprep.subr.bf16.mxu0 0
        %1754 = vmatpush1.bf16.msra.mxu0 0
        %1755 = vmatprep.subr.bf16.mxu0 0
        %1756 = vmatpush1.bf16.msra.mxu0 0
        %1757 = vmatprep.subr.bf16.mxu0 0
        %1758 = vmatpush1.bf16.msra.mxu0 0
        %1759 = vmatprep.subr.bf16.mxu0 0
        %1760 = vmatpush1.bf16.msra.mxu0 0
        %1761 = vmatprep.subr.bf16.mxu0 0
        %1762 = vmatpush1.bf16.msra.mxu0 0
        %1763 = vmatprep.subr.bf16.mxu0 0
        %1764 = vmatpush1.bf16.msra.mxu0 0
        %1765 = vmatprep.subr.bf16.mxu0 0
        %1766 = vmatpush1.bf16.msra.mxu0 0
        %1767 = vmatprep.subr.bf16.mxu0 0
        %1768 = vmatpush1.bf16.msra.mxu0 0
        %1769 = vmatprep.subr.bf16.mxu0 0
        %1770 = vmatpush1.bf16.msra.mxu0 0
        %1771 = vmatprep.subr.bf16.mxu0 0
        %1772 = vmatpush1.bf16.msra.mxu0 0
        %1773 = vmatprep.subr.bf16.mxu0 0
        %1774 = vmatpush1.bf16.msra.mxu0 0
        %1775 = vmatprep.mubr.bf16.mxu0 0
        %1776 = vmatmul.mubr.bf16.gmra.mrb[0].mxu0 %v917
        %v1777 = vpop.f32.mrb[0].mxu0
        %v1778 = vadd.f32 %v1729, %v1777
        %v1779 = vpop.f32.mrb[0].mxu0
        %v1780 = vpop.f32.mrb[0].mxu0
        %v1781 = vpop.f32.mrb[0].mxu0
        %1782 = vdwg.mxu0
        %s1783 = scalar_lea.vmem %s804, 160
        %v1784 = vld [vmem:[%s1783] sm:$0xf]
        %v1785 = vld [vmem:[%s1783 + $0x4] sm:$0xf]
        %v1786 = vld [vmem:[%s1783 + $0x8] sm:$0xf]
        %v1787 = vld [vmem:[%s1783 + $0xc] sm:$0xf]
        %s1788 = scalar_lea.vmem %s808, 10
        %v1789 = vld [vmem:[%s1788] sm:$0x1]
        %v1791 = vlaneseq
        %v1792 = vshrl.u32 %v1791, 7
        %v1793 = vsub.s32 0, %v1792
        %v1794 = vrot.slane %v1789, %v1793
        %v1800 = vunpack.c.l.b16 %v1784
        %v1801 = vunpack.c.l.b16 %v1785
        %v1802 = vunpack.c.l.b16 %v1786
        %v1803 = vunpack.c.l.b16 %v1787
        %v1804 = vpack.c.b16 %v1801, %v1800
        %v1805 = vpack.c.b16 %v1803, %v1802
        %1808 = vmatprep.subr.bf16.mxu0 0
        %1809 = vmatpush1.bf16.msra.mxu0 %v1804
        %1810 = vmatprep.subr.bf16.mxu0 0
        %1811 = vmatpush1.bf16.msra.mxu0 %v1805
        %1812 = vmatprep.subr.bf16.mxu0 0
        %1813 = vmatpush1.bf16.msra.mxu0 0
        %1814 = vmatprep.subr.bf16.mxu0 0
        %1815 = vmatpush1.bf16.msra.mxu0 0
        %1816 = vmatprep.subr.bf16.mxu0 0
        %1817 = vmatpush1.bf16.msra.mxu0 0
        %1818 = vmatprep.subr.bf16.mxu0 0
        %1819 = vmatpush1.bf16.msra.mxu0 0
        %1820 = vmatprep.subr.bf16.mxu0 0
        %1821 = vmatpush1.bf16.msra.mxu0 0
        %1822 = vmatprep.subr.bf16.mxu0 0
        %1823 = vmatpush1.bf16.msra.mxu0 0
        %1824 = vmatprep.subr.bf16.mxu0 0
        %1825 = vmatpush1.bf16.msra.mxu0 0
        %1826 = vmatprep.subr.bf16.mxu0 0
        %1827 = vmatpush1.bf16.msra.mxu0 0
        %1828 = vmatprep.subr.bf16.mxu0 0
        %1829 = vmatpush1.bf16.msra.mxu0 0
        %1830 = vmatprep.subr.bf16.mxu0 0
        %1831 = vmatpush1.bf16.msra.mxu0 0
        %1832 = vmatprep.subr.bf16.mxu0 0
        %1833 = vmatpush1.bf16.msra.mxu0 0
        %1834 = vmatprep.subr.bf16.mxu0 0
        %1835 = vmatpush1.bf16.msra.mxu0 0
        %1836 = vmatprep.subr.bf16.mxu0 0
        %1837 = vmatpush1.bf16.msra.mxu0 0
        %1838 = vmatprep.subr.bf16.mxu0 0
        %1839 = vmatpush1.bf16.msra.mxu0 0
        %1840 = vmatprep.mubr.bf16.mxu0 0
        %1841 = vmatmul.mubr.bf16.gmra.mrb[0].mxu0 %v917
        %v1842 = vpop.f32.mrb[0].mxu0
        %v1843 = vadd.f32 %v1794, %v1842
        %v1844 = vpop.f32.mrb[0].mxu0
        %v1845 = vpop.f32.mrb[0].mxu0
        %v1846 = vpop.f32.mrb[0].mxu0
        %1847 = vdwg.mxu0
        %v1849 = vsel %vm1089, %v1713, 0
        %v1852 = vsel %vm1089, %v1778, 0
        %1854 = vmatprep.subr.mxu0 0.0
        %1855 = vmatpush1.xpose.msra.mxu0 %v1852
        %1856 = vmatprep.subr.mxu0 0.0
        %1857 = vmatpush1.xpose.msra.mxu0 0.0
        %1858 = vmatprep.subr.mxu0 0.0
        %1859 = vmatpush1.xpose.msra.mxu0 0.0
        %1860 = vmatprep.subr.mxu0 0.0
        %1861 = vmatpush1.xpose.msra.mxu0 0.0
        %1862 = vmatprep.subr.mxu0 0.0
        %1863 = vmatpush1.xpose.msra.mxu0 0.0
        %1864 = vmatprep.subr.mxu0 0.0
        %1865 = vmatpush1.xpose.msra.mxu0 0.0
        %1866 = vmatprep.subr.mxu0 0.0
        %1867 = vmatpush1.xpose.msra.mxu0 0.0
        %1868 = vmatprep.subr.mxu0 0.0
        %1869 = vmatpush1.xpose.msra.mxu0 0.0
        %1870 = vmatprep.subr.mxu0 0.0
        %1871 = vmatpush1.xpose.msra.mxu0 0.0
        %1872 = vmatprep.subr.mxu0 0.0
        %1873 = vmatpush1.xpose.msra.mxu0 0.0
        %1874 = vmatprep.subr.mxu0 0.0
        %1875 = vmatpush1.xpose.msra.mxu0 0.0
        %1876 = vmatprep.subr.mxu0 0.0
        %1877 = vmatpush1.xpose.msra.mxu0 0.0
        %1878 = vmatprep.subr.mxu0 0.0
        %1879 = vmatpush1.xpose.msra.mxu0 0.0
        %1880 = vmatprep.subr.mxu0 0.0
        %1881 = vmatpush1.xpose.msra.mxu0 0.0
        %1882 = vmatprep.subr.mxu0 0.0
        %1883 = vmatpush1.xpose.msra.mxu0 0.0
        %1884 = vmatprep.subr.mxu0 0.0
        %1885 = vmatpush1.xpose.msra.mxu0 0.0
        %1886 = vmatprep.subr.mxu0 0.0
        %1887 = vmatpush1.xpose.msra.mxu0 0.0
        %1888 = vmatprep.subr.mxu0 0.0
        %1889 = vmatpush1.xpose.msra.mxu0 0.0
        %1890 = vmatprep.subr.mxu0 0.0
        %1891 = vmatpush1.xpose.msra.mxu0 0.0
        %1892 = vmatprep.subr.mxu0 0.0
        %1893 = vmatpush1.xpose.msra.mxu0 0.0
        %1894 = vmatprep.subr.mxu0 0.0
        %1895 = vmatpush1.xpose.msra.mxu0 0.0
        %1896 = vmatprep.subr.mxu0 0.0
        %1897 = vmatpush1.xpose.msra.mxu0 0.0
        %1898 = vmatprep.subr.mxu0 0.0
        %1899 = vmatpush1.xpose.msra.mxu0 0.0
        %1900 = vmatprep.subr.mxu0 0.0
        %1901 = vmatpush1.xpose.msra.mxu0 0.0
        %1902 = vmatprep.subr.mxu0 0.0
        %1903 = vmatpush1.xpose.msra.mxu0 0.0
        %1904 = vmatprep.subr.mxu0 0.0
        %1905 = vmatpush1.xpose.msra.mxu0 0.0
        %1906 = vmatprep.subr.mxu0 0.0
        %1907 = vmatpush1.xpose.msra.mxu0 0.0
        %1908 = vmatprep.subr.mxu0 0.0
        %1909 = vmatpush1.xpose.msra.mxu0 0.0
        %1910 = vmatprep.subr.mxu0 0.0
        %1911 = vmatpush1.xpose.msra.mxu0 0.0
        %1912 = vmatprep.subr.mxu0 0.0
        %1913 = vmatpush1.xpose.msra.mxu0 0.0
        %1914 = vmatprep.subr.mxu0 0.0
        %1915 = vmatpush1.xpose.msra.mxu0 0.0
        %1916 = vmatprep.subr.mxu0 0.0
        %1917 = vmatpush1.xpose.msra.mxu0 0.0
        %1918 = vmatprep.mubr.f32.mxu0 0.0
        %1919 = vmatmul.mubr.f32.gmra.mrb[0].mxu0 %v1849
        %v1920 = vpop.f32.mrb[0].mxu0
        %v1921 = vadd.f32 %v890, %v1920
        %v1922 = vpop.f32.mrb[0].mxu0
        %1923 = vdwg.mxu0
        %v1924 = vsel %vm1089, %v1921, -inf
        %1925 = vmax.xlane.f32.xlu0 %v1924
        %v1926 = vpop.xlane.xlu0 %1925
        %v1927 = vsub.f32 %v1921, %v1926
        %v1928 = vmul.f32 %v1927, 1.442695
        %v1929 = vpow.pop %v1928
        %v1930 = vsel %vm1089, %v1929, 0.0
        %1931 = vadd.xlane.f32.xlu0 %v1930
        %v1932 = vpop.xlane.xlu0 %1931
        %v1933 = vrcp.pop %v1932
        %v1934 = vmul.f32 %v1929, %v1933
        %v1935 = vpack.c.bf16 %v1934, %v1934
        %v1936 = vpack.c.bf16 %v1843, %v1843
        %v1938 = vsel %vm1089, %v1935, 0
        %v1941 = vsel %vm1182, %v1936, 0
        %1943 = vmatprep.subr.bf16.mxu0 0
        %1944 = vmatpush1.bf16.msra.mxu0 %v1941
        %1945 = vmatprep.subr.bf16.mxu0 0
        %1946 = vmatpush1.bf16.msra.mxu0 0
        %1947 = vmatprep.subr.bf16.mxu0 0
        %1948 = vmatpush1.bf16.msra.mxu0 0
        %1949 = vmatprep.subr.bf16.mxu0 0
        %1950 = vmatpush1.bf16.msra.mxu0 0
        %1951 = vmatprep.subr.bf16.mxu0 0
        %1952 = vmatpush1.bf16.msra.mxu0 0
        %1953 = vmatprep.subr.bf16.mxu0 0
        %1954 = vmatpush1.bf16.msra.mxu0 0
        %1955 = vmatprep.subr.bf16.mxu0 0
        %1956 = vmatpush1.bf16.msra.mxu0 0
        %1957 = vmatprep.subr.bf16.mxu0 0
        %1958 = vmatpush1.bf16.msra.mxu0 0
        %1959 = vmatprep.subr.bf16.mxu0 0
        %1960 = vmatpush1.bf16.msra.mxu0 0
        %1961 = vmatprep.subr.bf16.mxu0 0
        %1962 = vmatpush1.bf16.msra.mxu0 0
        %1963 = vmatprep.subr.bf16.mxu0 0
        %1964 = vmatpush1.bf16.msra.mxu0 0
        %1965 = vmatprep.subr.bf16.mxu0 0
        %1966 = vmatpush1.bf16.msra.mxu0 0
        %1967 = vmatprep.subr.bf16.mxu0 0
        %1968 = vmatpush1.bf16.msra.mxu0 0
        %1969 = vmatprep.subr.bf16.mxu0 0
        %1970 = vmatpush1.bf16.msra.mxu0 0
        %1971 = vmatprep.subr.bf16.mxu0 0
        %1972 = vmatpush1.bf16.msra.mxu0 0
        %1973 = vmatprep.subr.bf16.mxu0 0
        %1974 = vmatpush1.bf16.msra.mxu0 0
        %1975 = vmatprep.mubr.bf16.mxu0 0
        %1976 = vmatmul.mubr.bf16.gmra.mrb[0].mxu0 %v1938
        %v1977 = vpop.f32.mrb[0].mxu0
        %v1978 = vadd.f32 0.0, %v1977
        %v1979 = vpop.f32.mrb[0].mxu0
        %v1980 = vpop.f32.mrb[0].mxu0
        %v1981 = vpop.f32.mrb[0].mxu0
        %1982 = vdwg.mxu0
        %v1983 = vpack.c.bf16 %v1978, %v1978
        %s1984 = scalar_lea.vmem %s813, 8
        %v1985 = vld [vmem:[%s1984] sm:$0xf]
        %v1987 = vsel %vm1089, %v1983, 0
        %v1990 = vsel %vm1182, %v1985, 0
        %1992 = vmatprep.subr.bf16.mxu0 0
        %1993 = vmatpush1.bf16.msra.mxu0 %v1990
        %1994 = vmatprep.subr.bf16.mxu0 0
        %1995 = vmatpush1.bf16.msra.mxu0 0
        %1996 = vmatprep.subr.bf16.mxu0 0
        %1997 = vmatpush1.bf16.msra.mxu0 0
        %1998 = vmatprep.subr.bf16.mxu0 0
        %1999 = vmatpush1.bf16.msra.mxu0 0
        %2000 = vmatprep.subr.bf16.mxu0 0
        %2001 = vmatpush1.bf16.msra.mxu0 0
        %2002 = vmatprep.subr.bf16.mxu0 0
        %2003 = vmatpush1.bf16.msra.mxu0 0
        %2004 = vmatprep.subr.bf16.mxu0 0
        %2005 = vmatpush1.bf16.msra.mxu0 0
        %2006 = vmatprep.subr.bf16.mxu0 0
        %2007 = vmatpush1.bf16.msra.mxu0 0
        %2008 = vmatprep.subr.bf16.mxu0 0
        %2009 = vmatpush1.bf16.msra.mxu0 0
        %2010 = vmatprep.subr.bf16.mxu0 0
        %2011 = vmatpush1.bf16.msra.mxu0 0
        %2012 = vmatprep.subr.bf16.mxu0 0
        %2013 = vmatpush1.bf16.msra.mxu0 0
        %2014 = vmatprep.subr.bf16.mxu0 0
        %2015 = vmatpush1.bf16.msra.mxu0 0
        %2016 = vmatprep.subr.bf16.mxu0 0
        %2017 = vmatpush1.bf16.msra.mxu0 0
        %2018 = vmatprep.subr.bf16.mxu0 0
        %2019 = vmatpush1.bf16.msra.mxu0 0
        %2020 = vmatprep.subr.bf16.mxu0 0
        %2021 = vmatpush1.bf16.msra.mxu0 0
        %2022 = vmatprep.subr.bf16.mxu0 0
        %2023 = vmatpush1.bf16.msra.mxu0 0
        %2024 = vmatprep.mubr.bf16.mxu0 0
        %2025 = vmatmul.mubr.bf16.gmra.mrb[0].mxu0 %v1987
        %v2026 = vpop.f32.mrb[0].mxu0
        %v2027 = vadd.f32 0.0, %v2026
        %v2028 = vpop.f32.mrb[0].mxu0
        %v2029 = vpop.f32.mrb[0].mxu0
        %v2030 = vpop.f32.mrb[0].mxu0
        %2031 = vdwg.mxu0
        %v2032 = vadd.f32 %v1648, %v2027
        %s2033 = scalar_lea.vmem %s804, 48
        %v2034 = vld [vmem:[%s2033] sm:$0xf]
        %v2035 = vld [vmem:[%s2033 + $0x4] sm:$0xf]
        %v2036 = vld [vmem:[%s2033 + $0x8] sm:$0xf]
        %v2037 = vld [vmem:[%s2033 + $0xc] sm:$0xf]
        %s2038 = scalar_lea.vmem %s808, 3
        %v2039 = vld [vmem:[%s2038] sm:$0x1]
        %v2041 = vlaneseq
        %v2042 = vshrl.u32 %v2041, 7
        %v2043 = vsub.s32 0, %v2042
        %v2044 = vrot.slane %v2039, %v2043
        %v2050 = vunpack.c.l.b16 %v2034
        %v2051 = vunpack.c.l.b16 %v2035
        %v2052 = vunpack.c.l.b16 %v2036
        %v2053 = vunpack.c.l.b16 %v2037
        %v2054 = vpack.c.b16 %v2051, %v2050
        %v2055 = vpack.c.b16 %v2053, %v2052
        %2058 = vmatprep.subr.bf16.mxu0 0
        %2059 = vmatpush1.bf16.msra.mxu0 %v2054
        %2060 = vmatprep.subr.bf16.mxu0 0
        %2061 = vmatpush1.bf16.msra.mxu0 %v2055
        %2062 = vmatprep.subr.bf16.mxu0 0
        %2063 = vmatpush1.bf16.msra.mxu0 0
        %2064 = vmatprep.subr.bf16.mxu0 0
        %2065 = vmatpush1.bf16.msra.mxu0 0
        %2066 = vmatprep.subr.bf16.mxu0 0
        %2067 = vmatpush1.bf16.msra.mxu0 0
        %2068 = vmatprep.subr.bf16.mxu0 0
        %2069 = vmatpush1.bf16.msra.mxu0 0
        %2070 = vmatprep.subr.bf16.mxu0 0
        %2071 = vmatpush1.bf16.msra.mxu0 0
        %2072 = vmatprep.subr.bf16.mxu0 0
        %2073 = vmatpush1.bf16.msra.mxu0 0
        %2074 = vmatprep.subr.bf16.mxu0 0
        %2075 = vmatpush1.bf16.msra.mxu0 0
        %2076 = vmatprep.subr.bf16.mxu0 0
        %2077 = vmatpush1.bf16.msra.mxu0 0
        %2078 = vmatprep.subr.bf16.mxu0 0
        %2079 = vmatpush1.bf16.msra.mxu0 0
        %2080 = vmatprep.subr.bf16.mxu0 0
        %2081 = vmatpush1.bf16.msra.mxu0 0
        %2082 = vmatprep.subr.bf16.mxu0 0
        %2083 = vmatpush1.bf16.msra.mxu0 0
        %2084 = vmatprep.subr.bf16.mxu0 0
        %2085 = vmatpush1.bf16.msra.mxu0 0
        %2086 = vmatprep.subr.bf16.mxu0 0
        %2087 = vmatpush1.bf16.msra.mxu0 0
        %2088 = vmatprep.subr.bf16.mxu0 0
        %2089 = vmatpush1.bf16.msra.mxu0 0
        %2090 = vmatprep.mubr.bf16.mxu0 0
        %2091 = vmatmul.mubr.bf16.gmra.mrb[0].mxu0 %v917
        %v2092 = vpop.f32.mrb[0].mxu0
        %v2093 = vadd.f32 %v2044, %v2092
        %v2094 = vpop.f32.mrb[0].mxu0
        %v2095 = vpop.f32.mrb[0].mxu0
        %v2096 = vpop.f32.mrb[0].mxu0
        %2097 = vdwg.mxu0
        %s2098 = scalar_lea.vmem %s804, 112
        %v2099 = vld [vmem:[%s2098] sm:$0xf]
        %v2100 = vld [vmem:[%s2098 + $0x4] sm:$0xf]
        %v2101 = vld [vmem:[%s2098 + $0x8] sm:$0xf]
        %v2102 = vld [vmem:[%s2098 + $0xc] sm:$0xf]
        %s2103 = scalar_lea.vmem %s808, 7
        %v2104 = vld [vmem:[%s2103] sm:$0x1]
        %v2106 = vlaneseq
        %v2107 = vshrl.u32 %v2106, 7
        %v2108 = vsub.s32 0, %v2107
        %v2109 = vrot.slane %v2104, %v2108
        %v2115 = vunpack.c.l.b16 %v2099
        %v2116 = vunpack.c.l.b16 %v2100
        %v2117 = vunpack.c.l.b16 %v2101
        %v2118 = vunpack.c.l.b16 %v2102
        %v2119 = vpack.c.b16 %v2116, %v2115
        %v2120 = vpack.c.b16 %v2118, %v2117
        %2123 = vmatprep.subr.bf16.mxu0 0
        %2124 = vmatpush1.bf16.msra.mxu0 %v2119
        %2125 = vmatprep.subr.bf16.mxu0 0
        %2126 = vmatpush1.bf16.msra.mxu0 %v2120
        %2127 = vmatprep.subr.bf16.mxu0 0
        %2128 = vmatpush1.bf16.msra.mxu0 0
        %2129 = vmatprep.subr.bf16.mxu0 0
        %2130 = vmatpush1.bf16.msra.mxu0 0
        %2131 = vmatprep.subr.bf16.mxu0 0
        %2132 = vmatpush1.bf16.msra.mxu0 0
        %2133 = vmatprep.subr.bf16.mxu0 0
        %2134 = vmatpush1.bf16.msra.mxu0 0
        %2135 = vmatprep.subr.bf16.mxu0 0
        %2136 = vmatpush1.bf16.msra.mxu0 0
        %2137 = vmatprep.subr.bf16.mxu0 0
        %2138 = vmatpush1.bf16.msra.mxu0 0
        %2139 = vmatprep.subr.bf16.mxu0 0
        %2140 = vmatpush1.bf16.msra.mxu0 0
        %2141 = vmatprep.subr.bf16.mxu0 0
        %2142 = vmatpush1.bf16.msra.mxu0 0
        %2143 = vmatprep.subr.bf16.mxu0 0
        %2144 = vmatpush1.bf16.msra.mxu0 0
        %2145 = vmatprep.subr.bf16.mxu0 0
        %2146 = vmatpush1.bf16.msra.mxu0 0
        %2147 = vmatprep.subr.bf16.mxu0 0
        %2148 = vmatpush1.bf16.msra.mxu0 0
        %2149 = vmatprep.subr.bf16.mxu0 0
        %2150 = vmatpush1.bf16.msra.mxu0 0
        %2151 = vmatprep.subr.bf16.mxu0 0
        %2152 = vmatpush1.bf16.msra.mxu0 0
        %2153 = vmatprep.subr.bf16.mxu0 0
        %2154 = vmatpush1.bf16.msra.mxu0 0
        %2155 = vmatprep.mubr.bf16.mxu0 0
        %2156 = vmatmul.mubr.bf16.gmra.mrb[0].mxu0 %v917
        %v2157 = vpop.f32.mrb[0].mxu0
        %v2158 = vadd.f32 %v2109, %v2157
        %v2159 = vpop.f32.mrb[0].mxu0
        %v2160 = vpop.f32.mrb[0].mxu0
        %v2161 = vpop.f32.mrb[0].mxu0
        %2162 = vdwg.mxu0
        %s2163 = scalar_lea.vmem %s804, 176
        %v2164 = vld [vmem:[%s2163] sm:$0xf]
        %v2165 = vld [vmem:[%s2163 + $0x4] sm:$0xf]
        %v2166 = vld [vmem:[%s2163 + $0x8] sm:$0xf]
        %v2167 = vld [vmem:[%s2163 + $0xc] sm:$0xf]
        %s2168 = scalar_lea.vmem %s808, 11
        %v2169 = vld [vmem:[%s2168] sm:$0x1]
        %v2171 = vlaneseq
        %v2172 = vshrl.u32 %v2171, 7
        %v2173 = vsub.s32 0, %v2172
        %v2174 = vrot.slane %v2169, %v2173
        %v2180 = vunpack.c.l.b16 %v2164
        %v2181 = vunpack.c.l.b16 %v2165
        %v2182 = vunpack.c.l.b16 %v2166
        %v2183 = vunpack.c.l.b16 %v2167
        %v2184 = vpack.c.b16 %v2181, %v2180
        %v2185 = vpack.c.b16 %v2183, %v2182
        %2188 = vmatprep.subr.bf16.mxu0 0
        %2189 = vmatpush1.bf16.msra.mxu0 %v2184
        %2190 = vmatprep.subr.bf16.mxu0 0
        %2191 = vmatpush1.bf16.msra.mxu0 %v2185
        %2192 = vmatprep.subr.bf16.mxu0 0
        %2193 = vmatpush1.bf16.msra.mxu0 0
        %2194 = vmatprep.subr.bf16.mxu0 0
        %2195 = vmatpush1.bf16.msra.mxu0 0
        %2196 = vmatprep.subr.bf16.mxu0 0
        %2197 = vmatpush1.bf16.msra.mxu0 0
        %2198 = vmatprep.subr.bf16.mxu0 0
        %2199 = vmatpush1.bf16.msra.mxu0 0
        %2200 = vmatprep.subr.bf16.mxu0 0
        %2201 = vmatpush1.bf16.msra.mxu0 0
        %2202 = vmatprep.subr.bf16.mxu0 0
        %2203 = vmatpush1.bf16.msra.mxu0 0
        %2204 = vmatprep.subr.bf16.mxu0 0
        %2205 = vmatpush1.bf16.msra.mxu0 0
        %2206 = vmatprep.subr.bf16.mxu0 0
        %2207 = vmatpush1.bf16.msra.mxu0 0
        %2208 = vmatprep.subr.bf16.mxu0 0
        %2209 = vmatpush1.bf16.msra.mxu0 0
        %2210 = vmatprep.subr.bf16.mxu0 0
        %2211 = vmatpush1.bf16.msra.mxu0 0
        %2212 = vmatprep.subr.bf16.mxu0 0
        %2213 = vmatpush1.bf16.msra.mxu0 0
        %2214 = vmatprep.subr.bf16.mxu0 0
        %2215 = vmatpush1.bf16.msra.mxu0 0
        %2216 = vmatprep.subr.bf16.mxu0 0
        %2217 = vmatpush1.bf16.msra.mxu0 0
        %2218 = vmatprep.subr.bf16.mxu0 0
        %2219 = vmatpush1.bf16.msra.mxu0 0
        %2220 = vmatprep.mubr.bf16.mxu0 0
        %2221 = vmatmul.mubr.bf16.gmra.mrb[0].mxu0 %v917
        %v2222 = vpop.f32.mrb[0].mxu0
        %v2223 = vadd.f32 %v2174, %v2222
        %v2224 = vpop.f32.mrb[0].mxu0
        %v2225 = vpop.f32.mrb[0].mxu0
        %v2226 = vpop.f32.mrb[0].mxu0
        %2227 = vdwg.mxu0
        %v2229 = vsel %vm1089, %v2093, 0
        %v2232 = vsel %vm1089, %v2158, 0
        %2234 = vmatprep.subr.mxu0 0.0
        %2235 = vmatpush1.xpose.msra.mxu0 %v2232
        %2236 = vmatprep.subr.mxu0 0.0
        %2237 = vmatpush1.xpose.msra.mxu0 0.0
        %2238 = vmatprep.subr.mxu0 0.0
        %2239 = vmatpush1.xpose.msra.mxu0 0.0
        %2240 = vmatprep.subr.mxu0 0.0
        %2241 = vmatpush1.xpose.msra.mxu0 0.0
        %2242 = vmatprep.subr.mxu0 0.0
        %2243 = vmatpush1.xpose.msra.mxu0 0.0
        %2244 = vmatprep.subr.mxu0 0.0
        %2245 = vmatpush1.xpose.msra.mxu0 0.0
        %2246 = vmatprep.subr.mxu0 0.0
        %2247 = vmatpush1.xpose.msra.mxu0 0.0
        %2248 = vmatprep.subr.mxu0 0.0
        %2249 = vmatpush1.xpose.msra.mxu0 0.0
        %2250 = vmatprep.subr.mxu0 0.0
        %2251 = vmatpush1.xpose.msra.mxu0 0.0
        %2252 = vmatprep.subr.mxu0 0.0
        %2253 = vmatpush1.xpose.msra.mxu0 0.0
        %2254 = vmatprep.subr.mxu0 0.0
        %2255 = vmatpush1.xpose.msra.mxu0 0.0
        %2256 = vmatprep.subr.mxu0 0.0
        %2257 = vmatpush1.xpose.msra.mxu0 0.0
        %2258 = vmatprep.subr.mxu0 0.0
        %2259 = vmatpush1.xpose.msra.mxu0 0.0
        %2260 = vmatprep.subr.mxu0 0.0
        %2261 = vmatpush1.xpose.msra.mxu0 0.0
        %2262 = vmatprep.subr.mxu0 0.0
        %2263 = vmatpush1.xpose.msra.mxu0 0.0
        %2264 = vmatprep.subr.mxu0 0.0
        %2265 = vmatpush1.xpose.msra.mxu0 0.0
        %2266 = vmatprep.subr.mxu0 0.0
        %2267 = vmatpush1.xpose.msra.mxu0 0.0
        %2268 = vmatprep.subr.mxu0 0.0
        %2269 = vmatpush1.xpose.msra.mxu0 0.0
        %2270 = vmatprep.subr.mxu0 0.0
        %2271 = vmatpush1.xpose.msra.mxu0 0.0
        %2272 = vmatprep.subr.mxu0 0.0
        %2273 = vmatpush1.xpose.msra.mxu0 0.0
        %2274 = vmatprep.subr.mxu0 0.0
        %2275 = vmatpush1.xpose.msra.mxu0 0.0
        %2276 = vmatprep.subr.mxu0 0.0
        %2277 = vmatpush1.xpose.msra.mxu0 0.0
        %2278 = vmatprep.subr.mxu0 0.0
        %2279 = vmatpush1.xpose.msra.mxu0 0.0
        %2280 = vmatprep.subr.mxu0 0.0
        %2281 = vmatpush1.xpose.msra.mxu0 0.0
        %2282 = vmatprep.subr.mxu0 0.0
        %2283 = vmatpush1.xpose.msra.mxu0 0.0
        %2284 = vmatprep.subr.mxu0 0.0
        %2285 = vmatpush1.xpose.msra.mxu0 0.0
        %2286 = vmatprep.subr.mxu0 0.0
        %2287 = vmatpush1.xpose.msra.mxu0 0.0
        %2288 = vmatprep.subr.mxu0 0.0
        %2289 = vmatpush1.xpose.msra.mxu0 0.0
        %2290 = vmatprep.subr.mxu0 0.0
        %2291 = vmatpush1.xpose.msra.mxu0 0.0
        %2292 = vmatprep.subr.mxu0 0.0
        %2293 = vmatpush1.xpose.msra.mxu0 0.0
        %2294 = vmatprep.subr.mxu0 0.0
        %2295 = vmatpush1.xpose.msra.mxu0 0.0
        %2296 = vmatprep.subr.mxu0 0.0
        %2297 = vmatpush1.xpose.msra.mxu0 0.0
        %2298 = vmatprep.mubr.f32.mxu0 0.0
        %2299 = vmatmul.mubr.f32.gmra.mrb[0].mxu0 %v2229
        %v2300 = vpop.f32.mrb[0].mxu0
        %v2301 = vadd.f32 %v890, %v2300
        %v2302 = vpop.f32.mrb[0].mxu0
        %2303 = vdwg.mxu0
        %v2304 = vsel %vm1089, %v2301, -inf
        %2305 = vmax.xlane.f32.xlu0 %v2304
        %v2306 = vpop.xlane.xlu0 %2305
        %v2307 = vsub.f32 %v2301, %v2306
        %v2308 = vmul.f32 %v2307, 1.442695
        %v2309 = vpow.pop %v2308
        %v2310 = vsel %vm1089, %v2309, 0.0
        %2311 = vadd.xlane.f32.xlu0 %v2310
        %v2312 = vpop.xlane.xlu0 %2311
        %v2313 = vrcp.pop %v2312
        %v2314 = vmul.f32 %v2309, %v2313
        %v2315 = vpack.c.bf16 %v2314, %v2314
        %v2316 = vpack.c.bf16 %v2223, %v2223
        %v2318 = vsel %vm1089, %v2315, 0
        %v2321 = vsel %vm1182, %v2316, 0
        %2323 = vmatprep.subr.bf16.mxu0 0
        %2324 = vmatpush1.bf16.msra.mxu0 %v2321
        %2325 = vmatprep.subr.bf16.mxu0 0
        %2326 = vmatpush1.bf16.msra.mxu0 0
        %2327 = vmatprep.subr.bf16.mxu0 0
        %2328 = vmatpush1.bf16.msra.mxu0 0
        %2329 = vmatprep.subr.bf16.mxu0 0
        %2330 = vmatpush1.bf16.msra.mxu0 0
        %2331 = vmatprep.subr.bf16.mxu0 0
        %2332 = vmatpush1.bf16.msra.mxu0 0
        %2333 = vmatprep.subr.bf16.mxu0 0
        %2334 = vmatpush1.bf16.msra.mxu0 0
        %2335 = vmatprep.subr.bf16.mxu0 0
        %2336 = vmatpush1.bf16.msra.mxu0 0
        %2337 = vmatprep.subr.bf16.mxu0 0
        %2338 = vmatpush1.bf16.msra.mxu0 0
        %2339 = vmatprep.subr.bf16.mxu0 0
        %2340 = vmatpush1.bf16.msra.mxu0 0
        %2341 = vmatprep.subr.bf16.mxu0 0
        %2342 = vmatpush1.bf16.msra.mxu0 0
        %2343 = vmatprep.subr.bf16.mxu0 0
        %2344 = vmatpush1.bf16.msra.mxu0 0
        %2345 = vmatprep.subr.bf16.mxu0 0
        %2346 = vmatpush1.bf16.msra.mxu0 0
        %2347 = vmatprep.subr.bf16.mxu0 0
        %2348 = vmatpush1.bf16.msra.mxu0 0
        %2349 = vmatprep.subr.bf16.mxu0 0
        %2350 = vmatpush1.bf16.msra.mxu0 0
        %2351 = vmatprep.subr.bf16.mxu0 0
        %2352 = vmatpush1.bf16.msra.mxu0 0
        %2353 = vmatprep.subr.bf16.mxu0 0
        %2354 = vmatpush1.bf16.msra.mxu0 0
        %2355 = vmatprep.mubr.bf16.mxu0 0
        %2356 = vmatmul.mubr.bf16.gmra.mrb[0].mxu0 %v2318
        %v2357 = vpop.f32.mrb[0].mxu0
        %v2358 = vadd.f32 0.0, %v2357
        %v2359 = vpop.f32.mrb[0].mxu0
        %v2360 = vpop.f32.mrb[0].mxu0
        %v2361 = vpop.f32.mrb[0].mxu0
        %2362 = vdwg.mxu0
        %v2363 = vpack.c.bf16 %v2358, %v2358
        %s2364 = scalar_lea.vmem %s813, 12
        %v2365 = vld [vmem:[%s2364] sm:$0xf]
        %v2367 = vsel %vm1089, %v2363, 0
        %v2370 = vsel %vm1182, %v2365, 0
        %2372 = vmatprep.subr.bf16.mxu0 0
        %2373 = vmatpush1.bf16.msra.mxu0 %v2370
        %2374 = vmatprep.subr.bf16.mxu0 0
        %2375 = vmatpush1.bf16.msra.mxu0 0
        %2376 = vmatprep.subr.bf16.mxu0 0
        %2377 = vmatpush1.bf16.msra.mxu0 0
        %2378 = vmatprep.subr.bf16.mxu0 0
        %2379 = vmatpush1.bf16.msra.mxu0 0
        %2380 = vmatprep.subr.bf16.mxu0 0
        %2381 = vmatpush1.bf16.msra.mxu0 0
        %2382 = vmatprep.subr.bf16.mxu0 0
        %2383 = vmatpush1.bf16.msra.mxu0 0
        %2384 = vmatprep.subr.bf16.mxu0 0
        %2385 = vmatpush1.bf16.msra.mxu0 0
        %2386 = vmatprep.subr.bf16.mxu0 0
        %2387 = vmatpush1.bf16.msra.mxu0 0
        %2388 = vmatprep.subr.bf16.mxu0 0
        %2389 = vmatpush1.bf16.msra.mxu0 0
        %2390 = vmatprep.subr.bf16.mxu0 0
        %2391 = vmatpush1.bf16.msra.mxu0 0
        %2392 = vmatprep.subr.bf16.mxu0 0
        %2393 = vmatpush1.bf16.msra.mxu0 0
        %2394 = vmatprep.subr.bf16.mxu0 0
        %2395 = vmatpush1.bf16.msra.mxu0 0
        %2396 = vmatprep.subr.bf16.mxu0 0
        %2397 = vmatpush1.bf16.msra.mxu0 0
        %2398 = vmatprep.subr.bf16.mxu0 0
        %2399 = vmatpush1.bf16.msra.mxu0 0
        %2400 = vmatprep.subr.bf16.mxu0 0
        %2401 = vmatpush1.bf16.msra.mxu0 0
        %2402 = vmatprep.subr.bf16.mxu0 0
        %2403 = vmatpush1.bf16.msra.mxu0 0
        %2404 = vmatprep.mubr.bf16.mxu0 0
        %2405 = vmatmul.mubr.bf16.gmra.mrb[0].mxu0 %v2367
        %v2406 = vpop.f32.mrb[0].mxu0
        %v2407 = vadd.f32 0.0, %v2406
        %v2408 = vpop.f32.mrb[0].mxu0
        %v2409 = vpop.f32.mrb[0].mxu0
        %v2410 = vpop.f32.mrb[0].mxu0
        %2411 = vdwg.mxu0
        %v2412 = vadd.f32 %v2032, %v2407
        %v2413 = vld [vmem:[%s816] sm:$0x1]
        %v2415 = vlaneseq
        %v2416 = vshrl.u32 %v2415, 7
        %v2417 = vsub.s32 0, %v2416
        %v2418 = vrot.slane %v2413, %v2417
        %v2420 = vadd.f32 %v2412, %v2418
        %v2421 = vadd.f32 %v883, %v2420
        %v2422 = vld [vmem:[%s819] sm:$0x1]
        %v2423 = vld [vmem:[%s822] sm:$0x1]
        %v2424 = vsel %vm915, %v2421, 0.0
        %2425 = vadd.xlane.f32.xlu0 %v2424
        %v2426 = vpop.xlane.xlu0 %2425
        %v2427 = vrcp.pop 32.0
        %v2428 = vmul.f32 %v2426, %v2427
        %v2429 = vsub.f32 %v2421, %v2428
        %v2430 = vmul.f32 %v2429, %v2429
        %v2431 = vsel %vm915, %v2430, 0.0
        %2432 = vadd.xlane.f32.xlu0 %v2431
        %v2433 = vpop.xlane.xlu0 %2432
        %v2434 = vmul.f32 %v2433, %v2427
        %v2435 = vadd.f32 %v2434, 1e-12
        %v2436 = vrsqrt.pop %v2435
        %v2437 = vmul.f32 %v2429, %v2436
        %v2439 = vlaneseq
        %v2440 = vshrl.u32 %v2439, 7
        %v2441 = vsub.s32 0, %v2440
        %v2442 = vrot.slane %v2422, %v2441
        %v2444 = vmul.f32 %v2437, %v2442
        %v2446 = vlaneseq
        %v2447 = vshrl.u32 %v2446, 7
        %v2448 = vsub.s32 0, %v2447
        %v2449 = vrot.slane %v2423, %v2448
        %v2451 = vadd.f32 %v2444, %v2449
        %v2452 = vpack.c.bf16 %v2451, %v2451
        %v2453 = vld [vmem:[%s827] sm:$0xf]
        %v2454 = vld [vmem:[%s827 + $0x4] sm:$0xf]
        %v2455 = vld [vmem:[%s827 + $0x8] sm:$0xf]
        %v2456 = vld [vmem:[%s827 + $0xc] sm:$0xf]
        %v2457 = vld [vmem:[%s830] sm:$0x1]
        %v2459 = vlaneseq
        %v2460 = vshrl.u32 %v2459, 7
        %v2461 = vsub.s32 0, %v2460
        %v2462 = vrot.slane %v2457, %v2461
        %v2468 = vunpack.c.l.b16 %v2453
        %v2469 = vunpack.c.l.b16 %v2454
        %v2470 = vunpack.c.l.b16 %v2455
        %v2471 = vunpack.c.l.b16 %v2456
        %v2472 = vpack.c.b16 %v2469, %v2468
        %v2473 = vpack.c.b16 %v2471, %v2470
        %v2477 = vsel %vm915, %v2452, 0
        %2479 = vmatprep.subr.bf16.mxu0 0
        %2480 = vmatpush1.bf16.msra.mxu0 %v2472
        %2481 = vmatprep.subr.bf16.mxu0 0
        %2482 = vmatpush1.bf16.msra.mxu0 %v2473
        %2483 = vmatprep.subr.bf16.mxu0 0
        %2484 = vmatpush1.bf16.msra.mxu0 0
        %2485 = vmatprep.subr.bf16.mxu0 0
        %2486 = vmatpush1.bf16.msra.mxu0 0
        %2487 = vmatprep.subr.bf16.mxu0 0
        %2488 = vmatpush1.bf16.msra.mxu0 0
        %2489 = vmatprep.subr.bf16.mxu0 0
        %2490 = vmatpush1.bf16.msra.mxu0 0
        %2491 = vmatprep.subr.bf16.mxu0 0
        %2492 = vmatpush1.bf16.msra.mxu0 0
        %2493 = vmatprep.subr.bf16.mxu0 0
        %2494 = vmatpush1.bf16.msra.mxu0 0
        %2495 = vmatprep.subr.bf16.mxu0 0
        %2496 = vmatpush1.bf16.msra.mxu0 0
        %2497 = vmatprep.subr.bf16.mxu0 0
        %2498 = vmatpush1.bf16.msra.mxu0 0
        %2499 = vmatprep.subr.bf16.mxu0 0
        %2500 = vmatpush1.bf16.msra.mxu0 0
        %2501 = vmatprep.subr.bf16.mxu0 0
        %2502 = vmatpush1.bf16.msra.mxu0 0
        %2503 = vmatprep.subr.bf16.mxu0 0
        %2504 = vmatpush1.bf16.msra.mxu0 0
        %2505 = vmatprep.subr.bf16.mxu0 0
        %2506 = vmatpush1.bf16.msra.mxu0 0
        %2507 = vmatprep.subr.bf16.mxu0 0
        %2508 = vmatpush1.bf16.msra.mxu0 0
        %2509 = vmatprep.subr.bf16.mxu0 0
        %2510 = vmatpush1.bf16.msra.mxu0 0
        %2511 = vmatprep.mubr.bf16.mxu0 0
        %2512 = vmatmul.mubr.bf16.gmra.mrb[0].mxu0 %v2477
        %v2513 = vpop.f32.mrb[0].mxu0
        %v2514 = vadd.f32 %v2462, %v2513
        %v2515 = vpop.f32.mrb[0].mxu0
        %v2516 = vpop.f32.mrb[0].mxu0
        %v2517 = vpop.f32.mrb[0].mxu0
        %2518 = vdwg.mxu0
        %v2519 = vmul.f32 %v2514, 0.5
        %v2520 = vmul.f32 %v2514, 0.70710677
        %v2521 = vand.u32 2147483647, %v2520
        %v2522 = vmul.f32 %v2521, 0.3275911
        %v2523 = vadd.f32 %v2522, 1.0
        %v2524 = vrcp.pop %v2523
        %v2525 = vmul.f32 1.0, %v2524
        %v2526 = vmul.f32 %v2525, 1.0614054
        %v2527 = vadd.f32 %v2526, -1.4531521
        %v2528 = vmul.f32 %v2527, %v2525
        %v2529 = vadd.f32 %v2528, 1.4214138
        %v2530 = vmul.f32 %v2529, %v2525
        %v2531 = vadd.f32 %v2530, -0.28449672
        %v2532 = vmul.f32 %v2531, %v2525
        %v2533 = vadd.f32 %v2532, 0.2548296
        %v2534 = vmul.f32 %v2533, %v2525
        %v2535 = vsub.f32 0.0, %v2521
        %v2536 = vmul.f32 %v2535, %v2521
        %v2537 = vmul.f32 %v2536, 1.442695
        %v2538 = vpow.pop %v2537
        %v2539 = vmul.f32 %v2534, %v2538
        %v2540 = vsub.f32 1.0, %v2539
        %vm2541 = vcmp.ge.f32.partialorder %v2520, 0.0
        %v2542 = vsub.f32 0.0, %v2540
        %v2543 = vsel %vm2541, %v2540, %v2542
        %v2544 = vadd.f32 %v2543, 1.0
        %v2545 = vmul.f32 %v2519, %v2544
        %v2546 = vpack.c.bf16 %v2545, %v2545
        %v2547 = vld [vmem:[%s835] sm:$0xf]
        %v2548 = vld [vmem:[%s835 + $0x4] sm:$0xf]
        %v2549 = vld [vmem:[%s835 + $0x8] sm:$0xf]
        %v2550 = vld [vmem:[%s835 + $0xc] sm:$0xf]
        %v2551 = vld [vmem:[%s835 + $0x10] sm:$0xf]
        %v2552 = vld [vmem:[%s835 + $0x14] sm:$0xf]
        %v2553 = vld [vmem:[%s835 + $0x18] sm:$0xf]
        %v2554 = vld [vmem:[%s835 + $0x1c] sm:$0xf]
        %v2555 = vld [vmem:[%s838] sm:$0x1]
        %v2557 = vlaneseq
        %v2558 = vshrl.u32 %v2557, 7
        %v2559 = vsub.s32 0, %v2558
        %v2560 = vrot.slane %v2555, %v2559
        %v2570 = vunpack.c.l.b16 %v2547
        %v2571 = vunpack.c.l.b16 %v2548
        %v2572 = vunpack.c.l.b16 %v2549
        %v2573 = vunpack.c.l.b16 %v2550
        %v2574 = vunpack.c.l.b16 %v2551
        %v2575 = vunpack.c.l.b16 %v2552
        %v2576 = vunpack.c.l.b16 %v2553
        %v2577 = vunpack.c.l.b16 %v2554
        %v2578 = vpack.c.b16 %v2571, %v2570
        %v2579 = vpack.c.b16 %v2573, %v2572
        %v2580 = vpack.c.b16 %v2575, %v2574
        %v2581 = vpack.c.b16 %v2577, %v2576
        %vm2586 = vcmask 523264
        %v2588 = vsel %vm2586, %v2546, 0
        %2590 = vmatprep.subr.bf16.mxu0 0
        %2591 = vmatpush1.bf16.msra.mxu0 %v2578
        %2592 = vmatprep.subr.bf16.mxu0 0
        %2593 = vmatpush1.bf16.msra.mxu0 %v2579
        %2594 = vmatprep.subr.bf16.mxu0 0
        %2595 = vmatpush1.bf16.msra.mxu0 %v2580
        %2596 = vmatprep.subr.bf16.mxu0 0
        %2597 = vmatpush1.bf16.msra.mxu0 %v2581
        %2598 = vmatprep.subr.bf16.mxu0 0
        %2599 = vmatpush1.bf16.msra.mxu0 0
        %2600 = vmatprep.subr.bf16.mxu0 0
        %2601 = vmatpush1.bf16.msra.mxu0 0
        %2602 = vmatprep.subr.bf16.mxu0 0
        %2603 = vmatpush1.bf16.msra.mxu0 0
        %2604 = vmatprep.subr.bf16.mxu0 0
        %2605 = vmatpush1.bf16.msra.mxu0 0
        %2606 = vmatprep.subr.bf16.mxu0 0
        %2607 = vmatpush1.bf16.msra.mxu0 0
        %2608 = vmatprep.subr.bf16.mxu0 0
        %2609 = vmatpush1.bf16.msra.mxu0 0
        %2610 = vmatprep.subr.bf16.mxu0 0
        %2611 = vmatpush1.bf16.msra.mxu0 0
        %2612 = vmatprep.subr.bf16.mxu0 0
        %2613 = vmatpush1.bf16.msra.mxu0 0
        %2614 = vmatprep.subr.bf16.mxu0 0
        %2615 = vmatpush1.bf16.msra.mxu0 0
        %2616 = vmatprep.subr.bf16.mxu0 0
        %2617 = vmatpush1.bf16.msra.mxu0 0
        %2618 = vmatprep.subr.bf16.mxu0 0
        %2619 = vmatpush1.bf16.msra.mxu0 0
        %2620 = vmatprep.subr.bf16.mxu0 0
        %2621 = vmatpush1.bf16.msra.mxu0 0
        %2622 = vmatprep.mubr.bf16.mxu0 0
        %2623 = vmatmul.mubr.bf16.gmra.mrb[0].mxu0 %v2588
        %v2624 = vpop.f32.mrb[0].mxu0
        %v2625 = vadd.f32 %v2560, %v2624
        %v2626 = vpop.f32.mrb[0].mxu0
        %v2627 = vpop.f32.mrb[0].mxu0
        %v2628 = vpop.f32.mrb[0].mxu0
        %2629 = vdwg.mxu0
        %v2630 = vadd.f32 %v2451, %v2625
        %v2631 = vld [vmem:[%s841] sm:$0x1]
        %v2632 = vld [vmem:[%s844] sm:$0x1]
        %v2633 = vsel %vm915, %v2630, 0.0
        %2634 = vadd.xlane.f32.xlu0 %v2633
        %v2635 = vpop.xlane.xlu0 %2634
        %v2636 = vmul.f32 %v2635, %v2427
        %v2637 = vsub.f32 %v2630, %v2636
        %v2638 = vmul.f32 %v2637, %v2637
        %v2639 = vsel %vm915, %v2638, 0.0
        %2640 = vadd.xlane.f32.xlu0 %v2639
        %v2641 = vpop.xlane.xlu0 %2640
        %v2642 = vmul.f32 %v2641, %v2427
        %v2643 = vadd.f32 %v2642, 1e-12
        %v2644 = vrsqrt.pop %v2643
        %v2645 = vmul.f32 %v2637, %v2644
        %v2647 = vlaneseq
        %v2648 = vshrl.u32 %v2647, 7
        %v2649 = vsub.s32 0, %v2648
        %v2650 = vrot.slane %v2631, %v2649
        %v2652 = vmul.f32 %v2645, %v2650
        %v2654 = vlaneseq
        %v2655 = vshrl.u32 %v2654, 7
        %v2656 = vsub.s32 0, %v2655
        %v2657 = vrot.slane %v2632, %v2656
        %v2659 = vadd.f32 %v2652, %v2657
        %2660 = vst.msk [vmem:[#allocation2] sm:$0xff] %vm915, %v2659
        %p2661 = scmp.eq.s32.totalorder %s39, 1
        // Predicated region
        $region105: #{model_forward.1} parent=99 // pred_check
          %p2662 = pneg %p2661
        $region106: #{model_forward.1} parent=99 // pred_check_branch
          %2664 = sbr.rel (%p2662) target = $region108
        $region107: #{model_forward.1} parent=99 // pred_region
          %v2665 = vpack.c.bf16 %v2659, %v2659
          %v2666 = vld [vmem:[%s16] sm:$0xf]
          %v2667 = vld [vmem:[%s16 + $0x4] sm:$0xf]
          %v2668 = vld [vmem:[%s16 + $0x8] sm:$0xf]
          %v2669 = vld [vmem:[%s16 + $0xc] sm:$0xf]
          %v2670 = vld [vmem:[%s17] sm:$0x1]
          %v2675 = vunpack.c.l.b16 %v2666
          %v2676 = vunpack.c.l.b16 %v2667
          %v2677 = vunpack.c.l.b16 %v2668
          %v2678 = vunpack.c.l.b16 %v2669
          %v2679 = vpack.c.b16 %v2676, %v2675
          %v2680 = vpack.c.b16 %v2678, %v2677
          %v2684 = vsel %vm915, %v2665, 0
          %2686 = vmatprep.subr.bf16.mxu0 0
          %2687 = vmatpush1.bf16.msra.mxu0 %v2679
          %2688 = vmatprep.subr.bf16.mxu0 0
          %2689 = vmatpush1.bf16.msra.mxu0 %v2680
          %2690 = vmatprep.subr.bf16.mxu0 0
          %2691 = vmatpush1.bf16.msra.mxu0 0
          %2692 = vmatprep.subr.bf16.mxu0 0
          %2693 = vmatpush1.bf16.msra.mxu0 0
          %2694 = vmatprep.subr.bf16.mxu0 0
          %2695 = vmatpush1.bf16.msra.mxu0 0
          %2696 = vmatprep.subr.bf16.mxu0 0
          %2697 = vmatpush1.bf16.msra.mxu0 0
          %2698 = vmatprep.subr.bf16.mxu0 0
          %2699 = vmatpush1.bf16.msra.mxu0 0
          %2700 = vmatprep.subr.bf16.mxu0 0
          %2701 = vmatpush1.bf16.msra.mxu0 0
          %2702 = vmatprep.subr.bf16.mxu0 0
          %2703 = vmatpush1.bf16.msra.mxu0 0
          %2704 = vmatprep.subr.bf16.mxu0 0
          %2705 = vmatpush1.bf16.msra.mxu0 0
          %2706 = vmatprep.subr.bf16.mxu0 0
          %2707 = vmatpush1.bf16.msra.mxu0 0
          %2708 = vmatprep.subr.bf16.mxu0 0
          %2709 = vmatpush1.bf16.msra.mxu0 0
          %2710 = vmatprep.subr.bf16.mxu0 0
          %2711 = vmatpush1.bf16.msra.mxu0 0
          %2712 = vmatprep.subr.bf16.mxu0 0
          %2713 = vmatpush1.bf16.msra.mxu0 0
          %2714 = vmatprep.subr.bf16.mxu0 0
          %2715 = vmatpush1.bf16.msra.mxu0 0
          %2716 = vmatprep.subr.bf16.mxu0 0
          %2717 = vmatpush1.bf16.msra.mxu0 0
          %2718 = vmatprep.mubr.bf16.mxu0 0
          %2719 = vmatmul.mubr.bf16.gmra.mrb[0].mxu0 %v2684
          %v2720 = vpop.f32.mrb[0].mxu0
          %v2721 = vadd.f32 %v2670, %v2720
          %v2722 = vpop.f32.mrb[0].mxu0
          %v2723 = vpop.f32.mrb[0].mxu0
          %v2724 = vpop.f32.mrb[0].mxu0
          %2725 = vdwg.mxu0
          %v2726 = vtanh.pop %v2721
          %v2727 = vpack.c.bf16 %v2726, %v2726
          %v2728 = vld [vmem:[%s18] sm:$0xf]
          %v2729 = vld [vmem:[%s18 + $0x4] sm:$0xf]
          %v2730 = vld [vmem:[%s18 + $0x8] sm:$0xf]
          %v2731 = vld [vmem:[%s18 + $0xc] sm:$0xf]
          %v2732 = vld [vmem:[%s19] sm:$0x1]
          %v2737 = vunpack.c.l.b16 %v2728
          %v2738 = vunpack.c.l.b16 %v2729
          %v2739 = vunpack.c.l.b16 %v2730
          %v2740 = vunpack.c.l.b16 %v2731
          %v2741 = vpack.c.b16 %v2738, %v2737
          %v2742 = vpack.c.b16 %v2740, %v2739
          %v2746 = vsel %vm915, %v2727, 0
          %2748 = vmatprep.subr.bf16.mxu0 0
          %2749 = vmatpush1.bf16.msra.mxu0 %v2741
          %2750 = vmatprep.subr.bf16.mxu0 0
          %2751 = vmatpush1.bf16.msra.mxu0 %v2742
          %2752 = vmatprep.subr.bf16.mxu0 0
          %2753 = vmatpush1.bf16.msra.mxu0 0
          %2754 = vmatprep.subr.bf16.mxu0 0
          %2755 = vmatpush1.bf16.msra.mxu0 0
          %2756 = vmatprep.subr.bf16.mxu0 0
          %2757 = vmatpush1.bf16.msra.mxu0 0
          %2758 = vmatprep.subr.bf16.mxu0 0
          %2759 = vmatpush1.bf16.msra.mxu0 0
          %2760 = vmatprep.subr.bf16.mxu0 0
          %2761 = vmatpush1.bf16.msra.mxu0 0
          %2762 = vmatprep.subr.bf16.mxu0 0
          %2763 = vmatpush1.bf16.msra.mxu0 0
          %2764 = vmatprep.subr.bf16.mxu0 0
          %2765 = vmatpush1.bf16.msra.mxu0 0
          %2766 = vmatprep.subr.bf16.mxu0 0
          %2767 = vmatpush1.bf16.msra.mxu0 0
          %2768 = vmatprep.subr.bf16.mxu0 0
          %2769 = vmatpush1.bf16.msra.mxu0 0
          %2770 = vmatprep.subr.bf16.mxu0 0
          %2771 = vmatpush1.bf16.msra.mxu0 0
          %2772 = vmatprep.subr.bf16.mxu0 0
          %2773 = vmatpush1.bf16.msra.mxu0 0
          %2774 = vmatprep.subr.bf16.mxu0 0
          %2775 = vmatpush1.bf16.msra.mxu0 0
          %2776 = vmatprep.subr.bf16.mxu0 0
          %2777 = vmatpush1.bf16.msra.mxu0 0
          %2778 = vmatprep.subr.bf16.mxu0 0
          %2779 = vmatpush1.bf16.msra.mxu0 0
          %2780 = vmatprep.mubr.bf16.mxu0 0
          %2781 = vmatmul.mubr.bf16.gmra.mrb[0].mxu0 %v2746
          %v2782 = vpop.f32.mrb[0].mxu0
          %v2783 = vadd.f32 %v2732, %v2782
          %v2784 = vpop.f32.mrb[0].mxu0
          %v2785 = vpop.f32.mrb[0].mxu0
          %v2786 = vpop.f32.mrb[0].mxu0
          %2787 = vdwg.mxu0
          %vm2788 = vcmask 8192
          %2789 = vst.msk [vmem:[%s792] sm:$0x1] %vm2788, %v2783
        $region108: #{model_forward.1} parent=99 // pred_fallthru
          _
        %s2790 = sand.u32 %s544, 1
        %s2791 = scalar_lea.sflag [#allocation4], %s2790
        %s2792 = sand.u32 %s544, 1
        %s2793 = scalar_lea.vmem [#allocation3], %s2792
        // Predicated region
        $region109: #{model_forward.1} parent=99 // pred_check
          %p2794 = pneg %p554
        $region110: #{model_forward.1} parent=99 // pred_check_branch
          %2796 = sbr.rel (%p2794) target = $region112
        $region111: #{model_forward.1} parent=99 // pred_region
          %s2798 = ssub.s32 16, 16
          %2799 = vsyncadd %s2791, %s2798
          %s2800 = smul.addr %s38, 16
          %s2801 = scalar_lea.hbm %s20, %s2800
          %s2803 = sshll.u32 %s2793, 4
          %s2804 = int_to_ptr.vmem [resolvable:$true] %s2803
          %2806 = dma.vmem_to_hbm [thread:$0]  %s2804, 16, %s2801, %s2791
        $region112: #{model_forward.1} parent=99 // pred_fallthru
          _
      $region100: #{model_forward.1} parent=5 // pred_fallthru
        _
      %p2807 = scmp.le.s32.totalorder 2, %s29
      // Predicated region
      $region113: #{model_forward.1} parent=5 // pred_check
        %p2808 = pneg %p2807
      $region114: #{model_forward.1} parent=5 // pred_check_branch
        %2810 = sbr.rel (%p2808) target = $region116
      $region115: #{model_forward.1} parent=5 // pred_region
        %s2811 = ssub.s32 %s29, 2
        // Predicated region
        $region117: #{model_forward.1} parent=115 // pred_check
          %p2812 = pneg %p560
        $region118: #{model_forward.1} parent=115 // pred_check_branch
          %2814 = sbr.rel (%p2812) target = $region120
        $region119: #{model_forward.1} parent=115 // pred_region
          %s2815 = sand.u32 %s545, 1
          %s2816 = scalar_lea.sflag [#allocation4], %s2815
          %s2817 = sand.u32 %s545, 1
          %s2818 = scalar_lea.vmem [#allocation3], %s2817
          %2819 = dma.done %s2816, 16
        $region120: #{model_forward.1} parent=115 // pred_fallthru
          _
      $region116: #{model_forward.1} parent=5 // pred_fallthru
        _
    $region6: #{model_forward.1} parent=1 // loop_footer
      %s33 = sadd.s32 1, %s29
    $region7: #{model_forward.1} parent=1 // loop_footer_branch
      %28 = sbr.rel target = $region3
    $region8: #{model_forward.1} parent=1 // loop_exit
      _
    %2820 = vsyncpa [#allocation4], 1
    %s2821 = scalar_lea.sflag [#allocation4], 1
    %2822 = vsyncpa %s2821, 1

</llo_original>
